<compile_context>
chip_gen: v7x
topology: tpu7x:2x2x1
jax: 0.10.0
libtpu: 0.0.40
codegen_flags: <defaults>
</compile_context>

<pallas_src>
import functools
import math

import jax
import jax.numpy as jnp
from jax import lax
from jax.experimental import pallas as pl
from jax.experimental.pallas import tpu as pltpu

D_IN, D_H1, D_H2, D_OUT = 9, 18, 9, 1

_LANES = 128                       # lane width of a vreg
_CHUNK = 8                         # sublane-panels per inner step -> one full (8,128) vreg
_TILE_QUANTUM = _CHUNK * _LANES    # 1024 samples: batch-tile granularity


def _round_up(n, m):
    return ((n + m - 1) // m) * m


def _mlp_kernel(x_ref, w1_ref, b1_ref, w2_ref, b2_ref, w3_ref, b3_ref, o_ref):
    """VPU broadcast-FMA MLP.

    x_ref : (9, TBP, 128) f32 VMEM  -- feature-major; batch folded into
                                       (sublane-panel, lane) so every vector op
                                       runs on a fully occupied 8x128 vreg.
    w*/b* : flat f32 SMEM           -- read as scalars and splatted by the VPU.
    o_ref : (TBP, 128) f32 VMEM     -- lane-dense output tile.
    """
    tbp = x_ref.shape[1]            # panels in this batch tile (multiple of 8)
    n_chunks = tbp // _CHUNK

    # Hoist all scalar parameter reads (SMEM -> sregs) out of the sample loop:
    # 361 scalar loads once per grid step instead of once per 1024-sample chunk.
    w1 = [w1_ref[i] for i in range(D_H1 * D_IN)]
    b1 = [b1_ref[i] for i in range(D_H1)]
    w2 = [w2_ref[i] for i in range(D_H2 * D_H1)]
    b2 = [b2_ref[i] for i in range(D_H2)]
    w3 = [w3_ref[i] for i in range(D_OUT * D_H2)]
    b3 = [b3_ref[i] for i in range(D_OUT)]

    def body(c, carry):
        s0 = pl.multiple_of(c * _CHUNK, _CHUNK)
        # 9 feature rows, each one full (8, 128) vreg of 1024 distinct samples.
        x = [x_ref[k, pl.ds(s0, _CHUNK), :] for k in range(D_IN)]

        # fc1 + ReLU: scalar-weight FMAs over K=9 (VPU only).
        h1 = []
        for m in range(D_H1):
            acc = x[0] * w1[m * D_IN]
            for k in range(1, D_IN):
                acc = acc + x[k] * w1[m * D_IN + k]
            h1.append(jnp.maximum(acc + b1[m], 0.0))

        # fc2 + ReLU: K=18.
        h2 = []
        for m in range(D_H2):
            acc = h1[0] * w2[m * D_H1]
            for k in range(1, D_H1):
                acc = acc + h1[k] * w2[m * D_H1 + k]
            h2.append(jnp.maximum(acc + b2[m], 0.0))

        # fc3 + sigmoid (exp on the EUP slot).
        z = h2[0] * w3[0]
        for k in range(1, D_H2):
            z = z + h2[k] * w3[k]
        o_ref[pl.ds(s0, _CHUNK), :] = jax.nn.sigmoid(z + b3[0])
        return carry

    lax.fori_loop(0, n_chunks, body, 0)


@functools.partial(jax.jit, static_argnames=("tb",))
def neural_net_forward(x, params, *, tb=32768):
    """x: (B, 9) float32 -> (B, 1) float32 (matches PyTorch NeuralNet.forward)."""
    w1, b1, w2, b2, w3, b3 = params
    B = x.shape[0]

    # Batch tile (lane axis of the kernel):
    #   * multiple of 1024 so every inner chunk is an aligned, full vreg,
    #   * capped at `tb` (~1.1 MiB of X per step at the default; ~2.5 MiB
    #     double-buffered working set -> safe on v5e/v6e/v7x without touching
    #     vmem_limit_bytes),
    #   * shrunk so the grid has >= 2 steps when B allows it (v7x has 2 TCs),
    #   * shrunk for small B so we never pad/compute a huge dead tail.
    tb = max(_TILE_QUANTUM, _round_up(tb, _TILE_QUANTUM))
    b_q = _round_up(B, _TILE_QUANTUM)
    half = _round_up(-(-b_q // 2), _TILE_QUANTUM)
    tb_eff = min(tb, half)
    b_pad = _round_up(b_q, tb_eff)
    grid = (b_pad // tb_eff,)

    n_panels = b_pad // _LANES      # total 128-lane panels
    tbp = tb_eff // _LANES          # panels per grid step

    # Layout plumbing kept inside this jit so XLA fuses pad + transpose into a
    # single relayout copy in front of the kernel.  Padded samples are zeros;
    # they flow harmlessly through relu/sigmoid and are sliced off below.
    x3 = (jnp.pad(x.astype(jnp.float32), ((0, b_pad - B), (0, 0)))
          .T.reshape(D_IN, n_panels, _LANES))

    flat = lambda a: a.reshape(-1).astype(jnp.float32)   # 1-D SMEM (tiny padding)
    smem = pl.BlockSpec(memory_space=pltpu.MemorySpace.SMEM)

    cost = pl.CostEstimate(
        flops=2 * (D_IN * D_H1 + D_H1 * D_H2 + D_H2 * D_OUT) * b_pad,
        transcendentals=b_pad,
        bytes_accessed=(D_IN + D_OUT) * 4 * b_pad,
    )

    out = pl.pallas_call(
        _mlp_kernel,
        out_shape=jax.ShapeDtypeStruct((n_panels, _LANES), jnp.float32),
        grid=grid,
        in_specs=[
            pl.BlockSpec((D_IN, tbp, _LANES), lambda i: (0, i, 0)),  # X tile
            smem, smem, smem, smem, smem, smem,                      # params
        ],
        out_specs=pl.BlockSpec((tbp, _LANES), lambda i: (i, 0)),
        compiler_params=pltpu.CompilerParams(
            dimension_semantics=("parallel",)),
        cost_estimate=cost,
    )(x3, flat(w1), flat(b1), flat(w2), flat(b2), flat(w3), flat(b3))

    return out.reshape(b_pad, 1)[:B]                                  # (B, 1)


def init_params(key):
    """Deterministic init mirroring nn.Linear (uniform +-1/sqrt(fan_in)),
    weights in native PyTorch (out, in) layout, biases as (out,) vectors."""
    ks = jax.random.split(key, 6)

    def lin(kw, kb, fan_in, fan_out):
        bound = 1.0 / math.sqrt(fan_in)
        w = jax.random.uniform(kw, (fan_out, fan_in), jnp.float32, -bound, bound)
        b = jax.random.uniform(kb, (fan_out,), jnp.float32, -bound, bound)
        return w, b

    w1, b1 = lin(ks[0], ks[1], D_IN, D_H1)
    w2, b2 = lin(ks[2], ks[3], D_H1, D_H2)
    w3, b3 = lin(ks[4], ks[5], D_H2, D_OUT)
    return (w1, b1, w2, b2, w3, b3)


def reference_forward(x, params):
    w1, b1, w2, b2, w3, b3 = params
    h1 = jnp.maximum(x @ w1.T + b1, 0.0)
    h2 = jnp.maximum(h1 @ w2.T + b2, 0.0)
    return jax.nn.sigmoid(h2 @ w3.T + b3)


if __name__ == "__main__":
    key = jax.random.PRNGKey(0)
    k_x, k_p = jax.random.split(key)
    params = init_params(k_p)

    # Small primary check (single grid step).
    batch = 8
    x = jax.random.normal(k_x, (batch, 9), dtype=jnp.float32)
    out = jax.block_until_ready(neural_net_forward(x, params))
    ref = reference_forward(x, params)
    assert out.shape == (batch, 1)
    assert jnp.allclose(out, ref, atol=1e-5, rtol=1e-5)

    # Secondary check exercising a multi-step grid and ragged-tail slicing.
    batch2 = 2500
    x2 = jax.random.normal(k_x, (batch2, 9), dtype=jnp.float32)
    out2 = jax.block_until_ready(neural_net_forward(x2, params))
    ref2 = reference_forward(x2, params)
    assert out2.shape == (batch2, 1)
    assert jnp.allclose(out2, ref2, atol=1e-5, rtol=1e-5)

    print("KERNEL_OK")
</pallas_src>

<mosaic_0001>
module attributes {stable_mosaic.version = 11 : i64} {
  func.func @_mlp_kernel(%arg0: i32, %arg1: memref<9x8x128xf32, #tpu.memory_space<vmem>>, %arg2: memref<162xf32, #tpu.memory_space<smem>>, %arg3: memref<18xf32, #tpu.memory_space<smem>>, %arg4: memref<162xf32, #tpu.memory_space<smem>>, %arg5: memref<9xf32, #tpu.memory_space<smem>>, %arg6: memref<9xf32, #tpu.memory_space<smem>>, %arg7: memref<1xf32, #tpu.memory_space<smem>>, %arg8: memref<8x128xf32, #tpu.memory_space<vmem>>) attributes {dimension_semantics = [#tpu.dimension_semantics<parallel>], iteration_bounds = array<i64: 1>, scalar_prefetch = 0 : i64, scratch_operands = 0 : i64, tpu.core_type = #tpu.core_type<tc>, window_params = [{transform_indices = @transform_0, window_bounds = array<i64: 9, 8, 128>}, {transform_indices = @transform_1, window_bounds = array<i64: 162>}, {transform_indices = @transform_2, window_bounds = array<i64: 18>}, {transform_indices = @transform_3, window_bounds = array<i64: 162>}, {transform_indices = @transform_4, window_bounds = array<i64: 9>}, {transform_indices = @transform_5, window_bounds = array<i64: 9>}, {transform_indices = @transform_6, window_bounds = array<i64: 1>}, {transform_indices = @transform_7, window_bounds = array<i64: 8, 128>}]} {
    %c0 = arith.constant 0 : index
    %0 = memref.load %arg2[%c0] : memref<162xf32, #tpu.memory_space<smem>>
    %c1 = arith.constant 1 : index
    %1 = memref.load %arg2[%c1] : memref<162xf32, #tpu.memory_space<smem>>
    %c2 = arith.constant 2 : index
    %2 = memref.load %arg2[%c2] : memref<162xf32, #tpu.memory_space<smem>>
    %c3 = arith.constant 3 : index
    %3 = memref.load %arg2[%c3] : memref<162xf32, #tpu.memory_space<smem>>
    %c4 = arith.constant 4 : index
    %4 = memref.load %arg2[%c4] : memref<162xf32, #tpu.memory_space<smem>>
    %c5 = arith.constant 5 : index
    %5 = memref.load %arg2[%c5] : memref<162xf32, #tpu.memory_space<smem>>
    %c6 = arith.constant 6 : index
    %6 = memref.load %arg2[%c6] : memref<162xf32, #tpu.memory_space<smem>>
    %c7 = arith.constant 7 : index
    %7 = memref.load %arg2[%c7] : memref<162xf32, #tpu.memory_space<smem>>
    %c8 = arith.constant 8 : index
    %8 = memref.load %arg2[%c8] : memref<162xf32, #tpu.memory_space<smem>>
    %c9 = arith.constant 9 : index
    %9 = memref.load %arg2[%c9] : memref<162xf32, #tpu.memory_space<smem>>
    %c10 = arith.constant 10 : index
    %10 = memref.load %arg2[%c10] : memref<162xf32, #tpu.memory_space<smem>>
    %c11 = arith.constant 11 : index
    %11 = memref.load %arg2[%c11] : memref<162xf32, #tpu.memory_space<smem>>
    %c12 = arith.constant 12 : index
    %12 = memref.load %arg2[%c12] : memref<162xf32, #tpu.memory_space<smem>>
    %c13 = arith.constant 13 : index
    %13 = memref.load %arg2[%c13] : memref<162xf32, #tpu.memory_space<smem>>
    %c14 = arith.constant 14 : index
    %14 = memref.load %arg2[%c14] : memref<162xf32, #tpu.memory_space<smem>>
    %c15 = arith.constant 15 : index
    %15 = memref.load %arg2[%c15] : memref<162xf32, #tpu.memory_space<smem>>
    %c16 = arith.constant 16 : index
    %16 = memref.load %arg2[%c16] : memref<162xf32, #tpu.memory_space<smem>>
    %c17 = arith.constant 17 : index
    %17 = memref.load %arg2[%c17] : memref<162xf32, #tpu.memory_space<smem>>
    %c18 = arith.constant 18 : index
    %18 = memref.load %arg2[%c18] : memref<162xf32, #tpu.memory_space<smem>>
    %c19 = arith.constant 19 : index
    %19 = memref.load %arg2[%c19] : memref<162xf32, #tpu.memory_space<smem>>
    %c20 = arith.constant 20 : index
    %20 = memref.load %arg2[%c20] : memref<162xf32, #tpu.memory_space<smem>>
    %c21 = arith.constant 21 : index
    %21 = memref.load %arg2[%c21] : memref<162xf32, #tpu.memory_space<smem>>
    %c22 = arith.constant 22 : index
    %22 = memref.load %arg2[%c22] : memref<162xf32, #tpu.memory_space<smem>>
    %c23 = arith.constant 23 : index
    %23 = memref.load %arg2[%c23] : memref<162xf32, #tpu.memory_space<smem>>
    %c24 = arith.constant 24 : index
    %24 = memref.load %arg2[%c24] : memref<162xf32, #tpu.memory_space<smem>>
    %c25 = arith.constant 25 : index
    %25 = memref.load %arg2[%c25] : memref<162xf32, #tpu.memory_space<smem>>
    %c26 = arith.constant 26 : index
    %26 = memref.load %arg2[%c26] : memref<162xf32, #tpu.memory_space<smem>>
    %c27 = arith.constant 27 : index
    %27 = memref.load %arg2[%c27] : memref<162xf32, #tpu.memory_space<smem>>
    %c28 = arith.constant 28 : index
    %28 = memref.load %arg2[%c28] : memref<162xf32, #tpu.memory_space<smem>>
    %c29 = arith.constant 29 : index
    %29 = memref.load %arg2[%c29] : memref<162xf32, #tpu.memory_space<smem>>
    %c30 = arith.constant 30 : index
    %30 = memref.load %arg2[%c30] : memref<162xf32, #tpu.memory_space<smem>>
    %c31 = arith.constant 31 : index
    %31 = memref.load %arg2[%c31] : memref<162xf32, #tpu.memory_space<smem>>
    %c32 = arith.constant 32 : index
    %32 = memref.load %arg2[%c32] : memref<162xf32, #tpu.memory_space<smem>>
    %c33 = arith.constant 33 : index
    %33 = memref.load %arg2[%c33] : memref<162xf32, #tpu.memory_space<smem>>
    %c34 = arith.constant 34 : index
    %34 = memref.load %arg2[%c34] : memref<162xf32, #tpu.memory_space<smem>>
    %c35 = arith.constant 35 : index
    %35 = memref.load %arg2[%c35] : memref<162xf32, #tpu.memory_space<smem>>
    %c36 = arith.constant 36 : index
    %36 = memref.load %arg2[%c36] : memref<162xf32, #tpu.memory_space<smem>>
    %c37 = arith.constant 37 : index
    %37 = memref.load %arg2[%c37] : memref<162xf32, #tpu.memory_space<smem>>
    %c38 = arith.constant 38 : index
    %38 = memref.load %arg2[%c38] : memref<162xf32, #tpu.memory_space<smem>>
    %c39 = arith.constant 39 : index
    %39 = memref.load %arg2[%c39] : memref<162xf32, #tpu.memory_space<smem>>
    %c40 = arith.constant 40 : index
    %40 = memref.load %arg2[%c40] : memref<162xf32, #tpu.memory_space<smem>>
    %c41 = arith.constant 41 : index
    %41 = memref.load %arg2[%c41] : memref<162xf32, #tpu.memory_space<smem>>
    %c42 = arith.constant 42 : index
    %42 = memref.load %arg2[%c42] : memref<162xf32, #tpu.memory_space<smem>>
    %c43 = arith.constant 43 : index
    %43 = memref.load %arg2[%c43] : memref<162xf32, #tpu.memory_space<smem>>
    %c44 = arith.constant 44 : index
    %44 = memref.load %arg2[%c44] : memref<162xf32, #tpu.memory_space<smem>>
    %c45 = arith.constant 45 : index
    %45 = memref.load %arg2[%c45] : memref<162xf32, #tpu.memory_space<smem>>
    %c46 = arith.constant 46 : index
    %46 = memref.load %arg2[%c46] : memref<162xf32, #tpu.memory_space<smem>>
    %c47 = arith.constant 47 : index
    %47 = memref.load %arg2[%c47] : memref<162xf32, #tpu.memory_space<smem>>
    %c48 = arith.constant 48 : index
    %48 = memref.load %arg2[%c48] : memref<162xf32, #tpu.memory_space<smem>>
    %c49 = arith.constant 49 : index
    %49 = memref.load %arg2[%c49] : memref<162xf32, #tpu.memory_space<smem>>
    %c50 = arith.constant 50 : index
    %50 = memref.load %arg2[%c50] : memref<162xf32, #tpu.memory_space<smem>>
    %c51 = arith.constant 51 : index
    %51 = memref.load %arg2[%c51] : memref<162xf32, #tpu.memory_space<smem>>
    %c52 = arith.constant 52 : index
    %52 = memref.load %arg2[%c52] : memref<162xf32, #tpu.memory_space<smem>>
    %c53 = arith.constant 53 : index
    %53 = memref.load %arg2[%c53] : memref<162xf32, #tpu.memory_space<smem>>
    %c54 = arith.constant 54 : index
    %54 = memref.load %arg2[%c54] : memref<162xf32, #tpu.memory_space<smem>>
    %c55 = arith.constant 55 : index
    %55 = memref.load %arg2[%c55] : memref<162xf32, #tpu.memory_space<smem>>
    %c56 = arith.constant 56 : index
    %56 = memref.load %arg2[%c56] : memref<162xf32, #tpu.memory_space<smem>>
    %c57 = arith.constant 57 : index
    %57 = memref.load %arg2[%c57] : memref<162xf32, #tpu.memory_space<smem>>
    %c58 = arith.constant 58 : index
    %58 = memref.load %arg2[%c58] : memref<162xf32, #tpu.memory_space<smem>>
    %c59 = arith.constant 59 : index
    %59 = memref.load %arg2[%c59] : memref<162xf32, #tpu.memory_space<smem>>
    %c60 = arith.constant 60 : index
    %60 = memref.load %arg2[%c60] : memref<162xf32, #tpu.memory_space<smem>>
    %c61 = arith.constant 61 : index
    %61 = memref.load %arg2[%c61] : memref<162xf32, #tpu.memory_space<smem>>
    %c62 = arith.constant 62 : index
    %62 = memref.load %arg2[%c62] : memref<162xf32, #tpu.memory_space<smem>>
    %c63 = arith.constant 63 : index
    %63 = memref.load %arg2[%c63] : memref<162xf32, #tpu.memory_space<smem>>
    %c64 = arith.constant 64 : index
    %64 = memref.load %arg2[%c64] : memref<162xf32, #tpu.memory_space<smem>>
    %c65 = arith.constant 65 : index
    %65 = memref.load %arg2[%c65] : memref<162xf32, #tpu.memory_space<smem>>
    %c66 = arith.constant 66 : index
    %66 = memref.load %arg2[%c66] : memref<162xf32, #tpu.memory_space<smem>>
    %c67 = arith.constant 67 : index
    %67 = memref.load %arg2[%c67] : memref<162xf32, #tpu.memory_space<smem>>
    %c68 = arith.constant 68 : index
    %68 = memref.load %arg2[%c68] : memref<162xf32, #tpu.memory_space<smem>>
    %c69 = arith.constant 69 : index
    %69 = memref.load %arg2[%c69] : memref<162xf32, #tpu.memory_space<smem>>
    %c70 = arith.constant 70 : index
    %70 = memref.load %arg2[%c70] : memref<162xf32, #tpu.memory_space<smem>>
    %c71 = arith.constant 71 : index
    %71 = memref.load %arg2[%c71] : memref<162xf32, #tpu.memory_space<smem>>
    %c72 = arith.constant 72 : index
    %72 = memref.load %arg2[%c72] : memref<162xf32, #tpu.memory_space<smem>>
    %c73 = arith.constant 73 : index
    %73 = memref.load %arg2[%c73] : memref<162xf32, #tpu.memory_space<smem>>
    %c74 = arith.constant 74 : index
    %74 = memref.load %arg2[%c74] : memref<162xf32, #tpu.memory_space<smem>>
    %c75 = arith.constant 75 : index
    %75 = memref.load %arg2[%c75] : memref<162xf32, #tpu.memory_space<smem>>
    %c76 = arith.constant 76 : index
    %76 = memref.load %arg2[%c76] : memref<162xf32, #tpu.memory_space<smem>>
    %c77 = arith.constant 77 : index
    %77 = memref.load %arg2[%c77] : memref<162xf32, #tpu.memory_space<smem>>
    %c78 = arith.constant 78 : index
    %78 = memref.load %arg2[%c78] : memref<162xf32, #tpu.memory_space<smem>>
    %c79 = arith.constant 79 : index
    %79 = memref.load %arg2[%c79] : memref<162xf32, #tpu.memory_space<smem>>
    %c80 = arith.constant 80 : index
    %80 = memref.load %arg2[%c80] : memref<162xf32, #tpu.memory_space<smem>>
    %c81 = arith.constant 81 : index
    %81 = memref.load %arg2[%c81] : memref<162xf32, #tpu.memory_space<smem>>
    %c82 = arith.constant 82 : index
    %82 = memref.load %arg2[%c82] : memref<162xf32, #tpu.memory_space<smem>>
    %c83 = arith.constant 83 : index
    %83 = memref.load %arg2[%c83] : memref<162xf32, #tpu.memory_space<smem>>
    %c84 = arith.constant 84 : index
    %84 = memref.load %arg2[%c84] : memref<162xf32, #tpu.memory_space<smem>>
    %c85 = arith.constant 85 : index
    %85 = memref.load %arg2[%c85] : memref<162xf32, #tpu.memory_space<smem>>
    %c86 = arith.constant 86 : index
    %86 = memref.load %arg2[%c86] : memref<162xf32, #tpu.memory_space<smem>>
    %c87 = arith.constant 87 : index
    %87 = memref.load %arg2[%c87] : memref<162xf32, #tpu.memory_space<smem>>
    %c88 = arith.constant 88 : index
    %88 = memref.load %arg2[%c88] : memref<162xf32, #tpu.memory_space<smem>>
    %c89 = arith.constant 89 : index
    %89 = memref.load %arg2[%c89] : memref<162xf32, #tpu.memory_space<smem>>
    %c90 = arith.constant 90 : index
    %90 = memref.load %arg2[%c90] : memref<162xf32, #tpu.memory_space<smem>>
    %c91 = arith.constant 91 : index
    %91 = memref.load %arg2[%c91] : memref<162xf32, #tpu.memory_space<smem>>
    %c92 = arith.constant 92 : index
    %92 = memref.load %arg2[%c92] : memref<162xf32, #tpu.memory_space<smem>>
    %c93 = arith.constant 93 : index
    %93 = memref.load %arg2[%c93] : memref<162xf32, #tpu.memory_space<smem>>
    %c94 = arith.constant 94 : index
    %94 = memref.load %arg2[%c94] : memref<162xf32, #tpu.memory_space<smem>>
    %c95 = arith.constant 95 : index
    %95 = memref.load %arg2[%c95] : memref<162xf32, #tpu.memory_space<smem>>
    %c96 = arith.constant 96 : index
    %96 = memref.load %arg2[%c96] : memref<162xf32, #tpu.memory_space<smem>>
    %c97 = arith.constant 97 : index
    %97 = memref.load %arg2[%c97] : memref<162xf32, #tpu.memory_space<smem>>
    %c98 = arith.constant 98 : index
    %98 = memref.load %arg2[%c98] : memref<162xf32, #tpu.memory_space<smem>>
    %c99 = arith.constant 99 : index
    %99 = memref.load %arg2[%c99] : memref<162xf32, #tpu.memory_space<smem>>
    %c100 = arith.constant 100 : index
    %100 = memref.load %arg2[%c100] : memref<162xf32, #tpu.memory_space<smem>>
    %c101 = arith.constant 101 : index
    %101 = memref.load %arg2[%c101] : memref<162xf32, #tpu.memory_space<smem>>
    %c102 = arith.constant 102 : index
    %102 = memref.load %arg2[%c102] : memref<162xf32, #tpu.memory_space<smem>>
    %c103 = arith.constant 103 : index
    %103 = memref.load %arg2[%c103] : memref<162xf32, #tpu.memory_space<smem>>
    %c104 = arith.constant 104 : index
    %104 = memref.load %arg2[%c104] : memref<162xf32, #tpu.memory_space<smem>>
    %c105 = arith.constant 105 : index
    %105 = memref.load %arg2[%c105] : memref<162xf32, #tpu.memory_space<smem>>
    %c106 = arith.constant 106 : index
    %106 = memref.load %arg2[%c106] : memref<162xf32, #tpu.memory_space<smem>>
    %c107 = arith.constant 107 : index
    %107 = memref.load %arg2[%c107] : memref<162xf32, #tpu.memory_space<smem>>
    %c108 = arith.constant 108 : index
    %108 = memref.load %arg2[%c108] : memref<162xf32, #tpu.memory_space<smem>>
    %c109 = arith.constant 109 : index
    %109 = memref.load %arg2[%c109] : memref<162xf32, #tpu.memory_space<smem>>
    %c110 = arith.constant 110 : index
    %110 = memref.load %arg2[%c110] : memref<162xf32, #tpu.memory_space<smem>>
    %c111 = arith.constant 111 : index
    %111 = memref.load %arg2[%c111] : memref<162xf32, #tpu.memory_space<smem>>
    %c112 = arith.constant 112 : index
    %112 = memref.load %arg2[%c112] : memref<162xf32, #tpu.memory_space<smem>>
    %c113 = arith.constant 113 : index
    %113 = memref.load %arg2[%c113] : memref<162xf32, #tpu.memory_space<smem>>
    %c114 = arith.constant 114 : index
    %114 = memref.load %arg2[%c114] : memref<162xf32, #tpu.memory_space<smem>>
    %c115 = arith.constant 115 : index
    %115 = memref.load %arg2[%c115] : memref<162xf32, #tpu.memory_space<smem>>
    %c116 = arith.constant 116 : index
    %116 = memref.load %arg2[%c116] : memref<162xf32, #tpu.memory_space<smem>>
    %c117 = arith.constant 117 : index
    %117 = memref.load %arg2[%c117] : memref<162xf32, #tpu.memory_space<smem>>
    %c118 = arith.constant 118 : index
    %118 = memref.load %arg2[%c118] : memref<162xf32, #tpu.memory_space<smem>>
    %c119 = arith.constant 119 : index
    %119 = memref.load %arg2[%c119] : memref<162xf32, #tpu.memory_space<smem>>
    %c120 = arith.constant 120 : index
    %120 = memref.load %arg2[%c120] : memref<162xf32, #tpu.memory_space<smem>>
    %c121 = arith.constant 121 : index
    %121 = memref.load %arg2[%c121] : memref<162xf32, #tpu.memory_space<smem>>
    %c122 = arith.constant 122 : index
    %122 = memref.load %arg2[%c122] : memref<162xf32, #tpu.memory_space<smem>>
    %c123 = arith.constant 123 : index
    %123 = memref.load %arg2[%c123] : memref<162xf32, #tpu.memory_space<smem>>
    %c124 = arith.constant 124 : index
    %124 = memref.load %arg2[%c124] : memref<162xf32, #tpu.memory_space<smem>>
    %c125 = arith.constant 125 : index
    %125 = memref.load %arg2[%c125] : memref<162xf32, #tpu.memory_space<smem>>
    %c126 = arith.constant 126 : index
    %126 = memref.load %arg2[%c126] : memref<162xf32, #tpu.memory_space<smem>>
    %c127 = arith.constant 127 : index
    %127 = memref.load %arg2[%c127] : memref<162xf32, #tpu.memory_space<smem>>
    %c128 = arith.constant 128 : index
    %128 = memref.load %arg2[%c128] : memref<162xf32, #tpu.memory_space<smem>>
    %c129 = arith.constant 129 : index
    %129 = memref.load %arg2[%c129] : memref<162xf32, #tpu.memory_space<smem>>
    %c130 = arith.constant 130 : index
    %130 = memref.load %arg2[%c130] : memref<162xf32, #tpu.memory_space<smem>>
    %c131 = arith.constant 131 : index
    %131 = memref.load %arg2[%c131] : memref<162xf32, #tpu.memory_space<smem>>
    %c132 = arith.constant 132 : index
    %132 = memref.load %arg2[%c132] : memref<162xf32, #tpu.memory_space<smem>>
    %c133 = arith.constant 133 : index
    %133 = memref.load %arg2[%c133] : memref<162xf32, #tpu.memory_space<smem>>
    %c134 = arith.constant 134 : index
    %134 = memref.load %arg2[%c134] : memref<162xf32, #tpu.memory_space<smem>>
    %c135 = arith.constant 135 : index
    %135 = memref.load %arg2[%c135] : memref<162xf32, #tpu.memory_space<smem>>
    %c136 = arith.constant 136 : index
    %136 = memref.load %arg2[%c136] : memref<162xf32, #tpu.memory_space<smem>>
    %c137 = arith.constant 137 : index
    %137 = memref.load %arg2[%c137] : memref<162xf32, #tpu.memory_space<smem>>
    %c138 = arith.constant 138 : index
    %138 = memref.load %arg2[%c138] : memref<162xf32, #tpu.memory_space<smem>>
    %c139 = arith.constant 139 : index
    %139 = memref.load %arg2[%c139] : memref<162xf32, #tpu.memory_space<smem>>
    %c140 = arith.constant 140 : index
    %140 = memref.load %arg2[%c140] : memref<162xf32, #tpu.memory_space<smem>>
    %c141 = arith.constant 141 : index
    %141 = memref.load %arg2[%c141] : memref<162xf32, #tpu.memory_space<smem>>
    %c142 = arith.constant 142 : index
    %142 = memref.load %arg2[%c142] : memref<162xf32, #tpu.memory_space<smem>>
    %c143 = arith.constant 143 : index
    %143 = memref.load %arg2[%c143] : memref<162xf32, #tpu.memory_space<smem>>
    %c144 = arith.constant 144 : index
    %144 = memref.load %arg2[%c144] : memref<162xf32, #tpu.memory_space<smem>>
    %c145 = arith.constant 145 : index
    %145 = memref.load %arg2[%c145] : memref<162xf32, #tpu.memory_space<smem>>
    %c146 = arith.constant 146 : index
    %146 = memref.load %arg2[%c146] : memref<162xf32, #tpu.memory_space<smem>>
    %c147 = arith.constant 147 : index
    %147 = memref.load %arg2[%c147] : memref<162xf32, #tpu.memory_space<smem>>
    %c148 = arith.constant 148 : index
    %148 = memref.load %arg2[%c148] : memref<162xf32, #tpu.memory_space<smem>>
    %c149 = arith.constant 149 : index
    %149 = memref.load %arg2[%c149] : memref<162xf32, #tpu.memory_space<smem>>
    %c150 = arith.constant 150 : index
    %150 = memref.load %arg2[%c150] : memref<162xf32, #tpu.memory_space<smem>>
    %c151 = arith.constant 151 : index
    %151 = memref.load %arg2[%c151] : memref<162xf32, #tpu.memory_space<smem>>
    %c152 = arith.constant 152 : index
    %152 = memref.load %arg2[%c152] : memref<162xf32, #tpu.memory_space<smem>>
    %c153 = arith.constant 153 : index
    %153 = memref.load %arg2[%c153] : memref<162xf32, #tpu.memory_space<smem>>
    %c154 = arith.constant 154 : index
    %154 = memref.load %arg2[%c154] : memref<162xf32, #tpu.memory_space<smem>>
    %c155 = arith.constant 155 : index
    %155 = memref.load %arg2[%c155] : memref<162xf32, #tpu.memory_space<smem>>
    %c156 = arith.constant 156 : index
    %156 = memref.load %arg2[%c156] : memref<162xf32, #tpu.memory_space<smem>>
    %c157 = arith.constant 157 : index
    %157 = memref.load %arg2[%c157] : memref<162xf32, #tpu.memory_space<smem>>
    %c158 = arith.constant 158 : index
    %158 = memref.load %arg2[%c158] : memref<162xf32, #tpu.memory_space<smem>>
    %c159 = arith.constant 159 : index
    %159 = memref.load %arg2[%c159] : memref<162xf32, #tpu.memory_space<smem>>
    %c160 = arith.constant 160 : index
    %160 = memref.load %arg2[%c160] : memref<162xf32, #tpu.memory_space<smem>>
    %c161 = arith.constant 161 : index
    %161 = memref.load %arg2[%c161] : memref<162xf32, #tpu.memory_space<smem>>
    %c0_0 = arith.constant 0 : index
    %162 = memref.load %arg3[%c0_0] : memref<18xf32, #tpu.memory_space<smem>>
    %c1_1 = arith.constant 1 : index
    %163 = memref.load %arg3[%c1_1] : memref<18xf32, #tpu.memory_space<smem>>
    %c2_2 = arith.constant 2 : index
    %164 = memref.load %arg3[%c2_2] : memref<18xf32, #tpu.memory_space<smem>>
    %c3_3 = arith.constant 3 : index
    %165 = memref.load %arg3[%c3_3] : memref<18xf32, #tpu.memory_space<smem>>
    %c4_4 = arith.constant 4 : index
    %166 = memref.load %arg3[%c4_4] : memref<18xf32, #tpu.memory_space<smem>>
    %c5_5 = arith.constant 5 : index
    %167 = memref.load %arg3[%c5_5] : memref<18xf32, #tpu.memory_space<smem>>
    %c6_6 = arith.constant 6 : index
    %168 = memref.load %arg3[%c6_6] : memref<18xf32, #tpu.memory_space<smem>>
    %c7_7 = arith.constant 7 : index
    %169 = memref.load %arg3[%c7_7] : memref<18xf32, #tpu.memory_space<smem>>
    %c8_8 = arith.constant 8 : index
    %170 = memref.load %arg3[%c8_8] : memref<18xf32, #tpu.memory_space<smem>>
    %c9_9 = arith.constant 9 : index
    %171 = memref.load %arg3[%c9_9] : memref<18xf32, #tpu.memory_space<smem>>
    %c10_10 = arith.constant 10 : index
    %172 = memref.load %arg3[%c10_10] : memref<18xf32, #tpu.memory_space<smem>>
    %c11_11 = arith.constant 11 : index
    %173 = memref.load %arg3[%c11_11] : memref<18xf32, #tpu.memory_space<smem>>
    %c12_12 = arith.constant 12 : index
    %174 = memref.load %arg3[%c12_12] : memref<18xf32, #tpu.memory_space<smem>>
    %c13_13 = arith.constant 13 : index
    %175 = memref.load %arg3[%c13_13] : memref<18xf32, #tpu.memory_space<smem>>
    %c14_14 = arith.constant 14 : index
    %176 = memref.load %arg3[%c14_14] : memref<18xf32, #tpu.memory_space<smem>>
    %c15_15 = arith.constant 15 : index
    %177 = memref.load %arg3[%c15_15] : memref<18xf32, #tpu.memory_space<smem>>
    %c16_16 = arith.constant 16 : index
    %178 = memref.load %arg3[%c16_16] : memref<18xf32, #tpu.memory_space<smem>>
    %c17_17 = arith.constant 17 : index
    %179 = memref.load %arg3[%c17_17] : memref<18xf32, #tpu.memory_space<smem>>
    %c0_18 = arith.constant 0 : index
    %180 = memref.load %arg4[%c0_18] : memref<162xf32, #tpu.memory_space<smem>>
    %c1_19 = arith.constant 1 : index
    %181 = memref.load %arg4[%c1_19] : memref<162xf32, #tpu.memory_space<smem>>
    %c2_20 = arith.constant 2 : index
    %182 = memref.load %arg4[%c2_20] : memref<162xf32, #tpu.memory_space<smem>>
    %c3_21 = arith.constant 3 : index
    %183 = memref.load %arg4[%c3_21] : memref<162xf32, #tpu.memory_space<smem>>
    %c4_22 = arith.constant 4 : index
    %184 = memref.load %arg4[%c4_22] : memref<162xf32, #tpu.memory_space<smem>>
    %c5_23 = arith.constant 5 : index
    %185 = memref.load %arg4[%c5_23] : memref<162xf32, #tpu.memory_space<smem>>
    %c6_24 = arith.constant 6 : index
    %186 = memref.load %arg4[%c6_24] : memref<162xf32, #tpu.memory_space<smem>>
    %c7_25 = arith.constant 7 : index
    %187 = memref.load %arg4[%c7_25] : memref<162xf32, #tpu.memory_space<smem>>
    %c8_26 = arith.constant 8 : index
    %188 = memref.load %arg4[%c8_26] : memref<162xf32, #tpu.memory_space<smem>>
    %c9_27 = arith.constant 9 : index
    %189 = memref.load %arg4[%c9_27] : memref<162xf32, #tpu.memory_space<smem>>
    %c10_28 = arith.constant 10 : index
    %190 = memref.load %arg4[%c10_28] : memref<162xf32, #tpu.memory_space<smem>>
    %c11_29 = arith.constant 11 : index
    %191 = memref.load %arg4[%c11_29] : memref<162xf32, #tpu.memory_space<smem>>
    %c12_30 = arith.constant 12 : index
    %192 = memref.load %arg4[%c12_30] : memref<162xf32, #tpu.memory_space<smem>>
    %c13_31 = arith.constant 13 : index
    %193 = memref.load %arg4[%c13_31] : memref<162xf32, #tpu.memory_space<smem>>
    %c14_32 = arith.constant 14 : index
    %194 = memref.load %arg4[%c14_32] : memref<162xf32, #tpu.memory_space<smem>>
    %c15_33 = arith.constant 15 : index
    %195 = memref.load %arg4[%c15_33] : memref<162xf32, #tpu.memory_space<smem>>
    %c16_34 = arith.constant 16 : index
    %196 = memref.load %arg4[%c16_34] : memref<162xf32, #tpu.memory_space<smem>>
    %c17_35 = arith.constant 17 : index
    %197 = memref.load %arg4[%c17_35] : memref<162xf32, #tpu.memory_space<smem>>
    %c18_36 = arith.constant 18 : index
    %198 = memref.load %arg4[%c18_36] : memref<162xf32, #tpu.memory_space<smem>>
    %c19_37 = arith.constant 19 : index
    %199 = memref.load %arg4[%c19_37] : memref<162xf32, #tpu.memory_space<smem>>
    %c20_38 = arith.constant 20 : index
    %200 = memref.load %arg4[%c20_38] : memref<162xf32, #tpu.memory_space<smem>>
    %c21_39 = arith.constant 21 : index
    %201 = memref.load %arg4[%c21_39] : memref<162xf32, #tpu.memory_space<smem>>
    %c22_40 = arith.constant 22 : index
    %202 = memref.load %arg4[%c22_40] : memref<162xf32, #tpu.memory_space<smem>>
    %c23_41 = arith.constant 23 : index
    %203 = memref.load %arg4[%c23_41] : memref<162xf32, #tpu.memory_space<smem>>
    %c24_42 = arith.constant 24 : index
    %204 = memref.load %arg4[%c24_42] : memref<162xf32, #tpu.memory_space<smem>>
    %c25_43 = arith.constant 25 : index
    %205 = memref.load %arg4[%c25_43] : memref<162xf32, #tpu.memory_space<smem>>
    %c26_44 = arith.constant 26 : index
    %206 = memref.load %arg4[%c26_44] : memref<162xf32, #tpu.memory_space<smem>>
    %c27_45 = arith.constant 27 : index
    %207 = memref.load %arg4[%c27_45] : memref<162xf32, #tpu.memory_space<smem>>
    %c28_46 = arith.constant 28 : index
    %208 = memref.load %arg4[%c28_46] : memref<162xf32, #tpu.memory_space<smem>>
    %c29_47 = arith.constant 29 : index
    %209 = memref.load %arg4[%c29_47] : memref<162xf32, #tpu.memory_space<smem>>
    %c30_48 = arith.constant 30 : index
    %210 = memref.load %arg4[%c30_48] : memref<162xf32, #tpu.memory_space<smem>>
    %c31_49 = arith.constant 31 : index
    %211 = memref.load %arg4[%c31_49] : memref<162xf32, #tpu.memory_space<smem>>
    %c32_50 = arith.constant 32 : index
    %212 = memref.load %arg4[%c32_50] : memref<162xf32, #tpu.memory_space<smem>>
    %c33_51 = arith.constant 33 : index
    %213 = memref.load %arg4[%c33_51] : memref<162xf32, #tpu.memory_space<smem>>
    %c34_52 = arith.constant 34 : index
    %214 = memref.load %arg4[%c34_52] : memref<162xf32, #tpu.memory_space<smem>>
    %c35_53 = arith.constant 35 : index
    %215 = memref.load %arg4[%c35_53] : memref<162xf32, #tpu.memory_space<smem>>
    %c36_54 = arith.constant 36 : index
    %216 = memref.load %arg4[%c36_54] : memref<162xf32, #tpu.memory_space<smem>>
    %c37_55 = arith.constant 37 : index
    %217 = memref.load %arg4[%c37_55] : memref<162xf32, #tpu.memory_space<smem>>
    %c38_56 = arith.constant 38 : index
    %218 = memref.load %arg4[%c38_56] : memref<162xf32, #tpu.memory_space<smem>>
    %c39_57 = arith.constant 39 : index
    %219 = memref.load %arg4[%c39_57] : memref<162xf32, #tpu.memory_space<smem>>
    %c40_58 = arith.constant 40 : index
    %220 = memref.load %arg4[%c40_58] : memref<162xf32, #tpu.memory_space<smem>>
    %c41_59 = arith.constant 41 : index
    %221 = memref.load %arg4[%c41_59] : memref<162xf32, #tpu.memory_space<smem>>
    %c42_60 = arith.constant 42 : index
    %222 = memref.load %arg4[%c42_60] : memref<162xf32, #tpu.memory_space<smem>>
    %c43_61 = arith.constant 43 : index
    %223 = memref.load %arg4[%c43_61] : memref<162xf32, #tpu.memory_space<smem>>
    %c44_62 = arith.constant 44 : index
    %224 = memref.load %arg4[%c44_62] : memref<162xf32, #tpu.memory_space<smem>>
    %c45_63 = arith.constant 45 : index
    %225 = memref.load %arg4[%c45_63] : memref<162xf32, #tpu.memory_space<smem>>
    %c46_64 = arith.constant 46 : index
    %226 = memref.load %arg4[%c46_64] : memref<162xf32, #tpu.memory_space<smem>>
    %c47_65 = arith.constant 47 : index
    %227 = memref.load %arg4[%c47_65] : memref<162xf32, #tpu.memory_space<smem>>
    %c48_66 = arith.constant 48 : index
    %228 = memref.load %arg4[%c48_66] : memref<162xf32, #tpu.memory_space<smem>>
    %c49_67 = arith.constant 49 : index
    %229 = memref.load %arg4[%c49_67] : memref<162xf32, #tpu.memory_space<smem>>
    %c50_68 = arith.constant 50 : index
    %230 = memref.load %arg4[%c50_68] : memref<162xf32, #tpu.memory_space<smem>>
    %c51_69 = arith.constant 51 : index
    %231 = memref.load %arg4[%c51_69] : memref<162xf32, #tpu.memory_space<smem>>
    %c52_70 = arith.constant 52 : index
    %232 = memref.load %arg4[%c52_70] : memref<162xf32, #tpu.memory_space<smem>>
    %c53_71 = arith.constant 53 : index
    %233 = memref.load %arg4[%c53_71] : memref<162xf32, #tpu.memory_space<smem>>
    %c54_72 = arith.constant 54 : index
    %234 = memref.load %arg4[%c54_72] : memref<162xf32, #tpu.memory_space<smem>>
    %c55_73 = arith.constant 55 : index
    %235 = memref.load %arg4[%c55_73] : memref<162xf32, #tpu.memory_space<smem>>
    %c56_74 = arith.constant 56 : index
    %236 = memref.load %arg4[%c56_74] : memref<162xf32, #tpu.memory_space<smem>>
    %c57_75 = arith.constant 57 : index
    %237 = memref.load %arg4[%c57_75] : memref<162xf32, #tpu.memory_space<smem>>
    %c58_76 = arith.constant 58 : index
    %238 = memref.load %arg4[%c58_76] : memref<162xf32, #tpu.memory_space<smem>>
    %c59_77 = arith.constant 59 : index
    %239 = memref.load %arg4[%c59_77] : memref<162xf32, #tpu.memory_space<smem>>
    %c60_78 = arith.constant 60 : index
    %240 = memref.load %arg4[%c60_78] : memref<162xf32, #tpu.memory_space<smem>>
    %c61_79 = arith.constant 61 : index
    %241 = memref.load %arg4[%c61_79] : memref<162xf32, #tpu.memory_space<smem>>
    %c62_80 = arith.constant 62 : index
    %242 = memref.load %arg4[%c62_80] : memref<162xf32, #tpu.memory_space<smem>>
    %c63_81 = arith.constant 63 : index
    %243 = memref.load %arg4[%c63_81] : memref<162xf32, #tpu.memory_space<smem>>
    %c64_82 = arith.constant 64 : index
    %244 = memref.load %arg4[%c64_82] : memref<162xf32, #tpu.memory_space<smem>>
    %c65_83 = arith.constant 65 : index
    %245 = memref.load %arg4[%c65_83] : memref<162xf32, #tpu.memory_space<smem>>
    %c66_84 = arith.constant 66 : index
    %246 = memref.load %arg4[%c66_84] : memref<162xf32, #tpu.memory_space<smem>>
    %c67_85 = arith.constant 67 : index
    %247 = memref.load %arg4[%c67_85] : memref<162xf32, #tpu.memory_space<smem>>
    %c68_86 = arith.constant 68 : index
    %248 = memref.load %arg4[%c68_86] : memref<162xf32, #tpu.memory_space<smem>>
    %c69_87 = arith.constant 69 : index
    %249 = memref.load %arg4[%c69_87] : memref<162xf32, #tpu.memory_space<smem>>
    %c70_88 = arith.constant 70 : index
    %250 = memref.load %arg4[%c70_88] : memref<162xf32, #tpu.memory_space<smem>>
    %c71_89 = arith.constant 71 : index
    %251 = memref.load %arg4[%c71_89] : memref<162xf32, #tpu.memory_space<smem>>
    %c72_90 = arith.constant 72 : index
    %252 = memref.load %arg4[%c72_90] : memref<162xf32, #tpu.memory_space<smem>>
    %c73_91 = arith.constant 73 : index
    %253 = memref.load %arg4[%c73_91] : memref<162xf32, #tpu.memory_space<smem>>
    %c74_92 = arith.constant 74 : index
    %254 = memref.load %arg4[%c74_92] : memref<162xf32, #tpu.memory_space<smem>>
    %c75_93 = arith.constant 75 : index
    %255 = memref.load %arg4[%c75_93] : memref<162xf32, #tpu.memory_space<smem>>
    %c76_94 = arith.constant 76 : index
    %256 = memref.load %arg4[%c76_94] : memref<162xf32, #tpu.memory_space<smem>>
    %c77_95 = arith.constant 77 : index
    %257 = memref.load %arg4[%c77_95] : memref<162xf32, #tpu.memory_space<smem>>
    %c78_96 = arith.constant 78 : index
    %258 = memref.load %arg4[%c78_96] : memref<162xf32, #tpu.memory_space<smem>>
    %c79_97 = arith.constant 79 : index
    %259 = memref.load %arg4[%c79_97] : memref<162xf32, #tpu.memory_space<smem>>
    %c80_98 = arith.constant 80 : index
    %260 = memref.load %arg4[%c80_98] : memref<162xf32, #tpu.memory_space<smem>>
    %c81_99 = arith.constant 81 : index
    %261 = memref.load %arg4[%c81_99] : memref<162xf32, #tpu.memory_space<smem>>
    %c82_100 = arith.constant 82 : index
    %262 = memref.load %arg4[%c82_100] : memref<162xf32, #tpu.memory_space<smem>>
    %c83_101 = arith.constant 83 : index
    %263 = memref.load %arg4[%c83_101] : memref<162xf32, #tpu.memory_space<smem>>
    %c84_102 = arith.constant 84 : index
    %264 = memref.load %arg4[%c84_102] : memref<162xf32, #tpu.memory_space<smem>>
    %c85_103 = arith.constant 85 : index
    %265 = memref.load %arg4[%c85_103] : memref<162xf32, #tpu.memory_space<smem>>
    %c86_104 = arith.constant 86 : index
    %266 = memref.load %arg4[%c86_104] : memref<162xf32, #tpu.memory_space<smem>>
    %c87_105 = arith.constant 87 : index
    %267 = memref.load %arg4[%c87_105] : memref<162xf32, #tpu.memory_space<smem>>
    %c88_106 = arith.constant 88 : index
    %268 = memref.load %arg4[%c88_106] : memref<162xf32, #tpu.memory_space<smem>>
    %c89_107 = arith.constant 89 : index
    %269 = memref.load %arg4[%c89_107] : memref<162xf32, #tpu.memory_space<smem>>
    %c90_108 = arith.constant 90 : index
    %270 = memref.load %arg4[%c90_108] : memref<162xf32, #tpu.memory_space<smem>>
    %c91_109 = arith.constant 91 : index
    %271 = memref.load %arg4[%c91_109] : memref<162xf32, #tpu.memory_space<smem>>
    %c92_110 = arith.constant 92 : index
    %272 = memref.load %arg4[%c92_110] : memref<162xf32, #tpu.memory_space<smem>>
    %c93_111 = arith.constant 93 : index
    %273 = memref.load %arg4[%c93_111] : memref<162xf32, #tpu.memory_space<smem>>
    %c94_112 = arith.constant 94 : index
    %274 = memref.load %arg4[%c94_112] : memref<162xf32, #tpu.memory_space<smem>>
    %c95_113 = arith.constant 95 : index
    %275 = memref.load %arg4[%c95_113] : memref<162xf32, #tpu.memory_space<smem>>
    %c96_114 = arith.constant 96 : index
    %276 = memref.load %arg4[%c96_114] : memref<162xf32, #tpu.memory_space<smem>>
    %c97_115 = arith.constant 97 : index
    %277 = memref.load %arg4[%c97_115] : memref<162xf32, #tpu.memory_space<smem>>
    %c98_116 = arith.constant 98 : index
    %278 = memref.load %arg4[%c98_116] : memref<162xf32, #tpu.memory_space<smem>>
    %c99_117 = arith.constant 99 : index
    %279 = memref.load %arg4[%c99_117] : memref<162xf32, #tpu.memory_space<smem>>
    %c100_118 = arith.constant 100 : index
    %280 = memref.load %arg4[%c100_118] : memref<162xf32, #tpu.memory_space<smem>>
    %c101_119 = arith.constant 101 : index
    %281 = memref.load %arg4[%c101_119] : memref<162xf32, #tpu.memory_space<smem>>
    %c102_120 = arith.constant 102 : index
    %282 = memref.load %arg4[%c102_120] : memref<162xf32, #tpu.memory_space<smem>>
    %c103_121 = arith.constant 103 : index
    %283 = memref.load %arg4[%c103_121] : memref<162xf32, #tpu.memory_space<smem>>
    %c104_122 = arith.constant 104 : index
    %284 = memref.load %arg4[%c104_122] : memref<162xf32, #tpu.memory_space<smem>>
    %c105_123 = arith.constant 105 : index
    %285 = memref.load %arg4[%c105_123] : memref<162xf32, #tpu.memory_space<smem>>
    %c106_124 = arith.constant 106 : index
    %286 = memref.load %arg4[%c106_124] : memref<162xf32, #tpu.memory_space<smem>>
    %c107_125 = arith.constant 107 : index
    %287 = memref.load %arg4[%c107_125] : memref<162xf32, #tpu.memory_space<smem>>
    %c108_126 = arith.constant 108 : index
    %288 = memref.load %arg4[%c108_126] : memref<162xf32, #tpu.memory_space<smem>>
    %c109_127 = arith.constant 109 : index
    %289 = memref.load %arg4[%c109_127] : memref<162xf32, #tpu.memory_space<smem>>
    %c110_128 = arith.constant 110 : index
    %290 = memref.load %arg4[%c110_128] : memref<162xf32, #tpu.memory_space<smem>>
    %c111_129 = arith.constant 111 : index
    %291 = memref.load %arg4[%c111_129] : memref<162xf32, #tpu.memory_space<smem>>
    %c112_130 = arith.constant 112 : index
    %292 = memref.load %arg4[%c112_130] : memref<162xf32, #tpu.memory_space<smem>>
    %c113_131 = arith.constant 113 : index
    %293 = memref.load %arg4[%c113_131] : memref<162xf32, #tpu.memory_space<smem>>
    %c114_132 = arith.constant 114 : index
    %294 = memref.load %arg4[%c114_132] : memref<162xf32, #tpu.memory_space<smem>>
    %c115_133 = arith.constant 115 : index
    %295 = memref.load %arg4[%c115_133] : memref<162xf32, #tpu.memory_space<smem>>
    %c116_134 = arith.constant 116 : index
    %296 = memref.load %arg4[%c116_134] : memref<162xf32, #tpu.memory_space<smem>>
    %c117_135 = arith.constant 117 : index
    %297 = memref.load %arg4[%c117_135] : memref<162xf32, #tpu.memory_space<smem>>
    %c118_136 = arith.constant 118 : index
    %298 = memref.load %arg4[%c118_136] : memref<162xf32, #tpu.memory_space<smem>>
    %c119_137 = arith.constant 119 : index
    %299 = memref.load %arg4[%c119_137] : memref<162xf32, #tpu.memory_space<smem>>
    %c120_138 = arith.constant 120 : index
    %300 = memref.load %arg4[%c120_138] : memref<162xf32, #tpu.memory_space<smem>>
    %c121_139 = arith.constant 121 : index
    %301 = memref.load %arg4[%c121_139] : memref<162xf32, #tpu.memory_space<smem>>
    %c122_140 = arith.constant 122 : index
    %302 = memref.load %arg4[%c122_140] : memref<162xf32, #tpu.memory_space<smem>>
    %c123_141 = arith.constant 123 : index
    %303 = memref.load %arg4[%c123_141] : memref<162xf32, #tpu.memory_space<smem>>
    %c124_142 = arith.constant 124 : index
    %304 = memref.load %arg4[%c124_142] : memref<162xf32, #tpu.memory_space<smem>>
    %c125_143 = arith.constant 125 : index
    %305 = memref.load %arg4[%c125_143] : memref<162xf32, #tpu.memory_space<smem>>
    %c126_144 = arith.constant 126 : index
    %306 = memref.load %arg4[%c126_144] : memref<162xf32, #tpu.memory_space<smem>>
    %c127_145 = arith.constant 127 : index
    %307 = memref.load %arg4[%c127_145] : memref<162xf32, #tpu.memory_space<smem>>
    %c128_146 = arith.constant 128 : index
    %308 = memref.load %arg4[%c128_146] : memref<162xf32, #tpu.memory_space<smem>>
    %c129_147 = arith.constant 129 : index
    %309 = memref.load %arg4[%c129_147] : memref<162xf32, #tpu.memory_space<smem>>
    %c130_148 = arith.constant 130 : index
    %310 = memref.load %arg4[%c130_148] : memref<162xf32, #tpu.memory_space<smem>>
    %c131_149 = arith.constant 131 : index
    %311 = memref.load %arg4[%c131_149] : memref<162xf32, #tpu.memory_space<smem>>
    %c132_150 = arith.constant 132 : index
    %312 = memref.load %arg4[%c132_150] : memref<162xf32, #tpu.memory_space<smem>>
    %c133_151 = arith.constant 133 : index
    %313 = memref.load %arg4[%c133_151] : memref<162xf32, #tpu.memory_space<smem>>
    %c134_152 = arith.constant 134 : index
    %314 = memref.load %arg4[%c134_152] : memref<162xf32, #tpu.memory_space<smem>>
    %c135_153 = arith.constant 135 : index
    %315 = memref.load %arg4[%c135_153] : memref<162xf32, #tpu.memory_space<smem>>
    %c136_154 = arith.constant 136 : index
    %316 = memref.load %arg4[%c136_154] : memref<162xf32, #tpu.memory_space<smem>>
    %c137_155 = arith.constant 137 : index
    %317 = memref.load %arg4[%c137_155] : memref<162xf32, #tpu.memory_space<smem>>
    %c138_156 = arith.constant 138 : index
    %318 = memref.load %arg4[%c138_156] : memref<162xf32, #tpu.memory_space<smem>>
    %c139_157 = arith.constant 139 : index
    %319 = memref.load %arg4[%c139_157] : memref<162xf32, #tpu.memory_space<smem>>
    %c140_158 = arith.constant 140 : index
    %320 = memref.load %arg4[%c140_158] : memref<162xf32, #tpu.memory_space<smem>>
    %c141_159 = arith.constant 141 : index
    %321 = memref.load %arg4[%c141_159] : memref<162xf32, #tpu.memory_space<smem>>
    %c142_160 = arith.constant 142 : index
    %322 = memref.load %arg4[%c142_160] : memref<162xf32, #tpu.memory_space<smem>>
    %c143_161 = arith.constant 143 : index
    %323 = memref.load %arg4[%c143_161] : memref<162xf32, #tpu.memory_space<smem>>
    %c144_162 = arith.constant 144 : index
    %324 = memref.load %arg4[%c144_162] : memref<162xf32, #tpu.memory_space<smem>>
    %c145_163 = arith.constant 145 : index
    %325 = memref.load %arg4[%c145_163] : memref<162xf32, #tpu.memory_space<smem>>
    %c146_164 = arith.constant 146 : index
    %326 = memref.load %arg4[%c146_164] : memref<162xf32, #tpu.memory_space<smem>>
    %c147_165 = arith.constant 147 : index
    %327 = memref.load %arg4[%c147_165] : memref<162xf32, #tpu.memory_space<smem>>
    %c148_166 = arith.constant 148 : index
    %328 = memref.load %arg4[%c148_166] : memref<162xf32, #tpu.memory_space<smem>>
    %c149_167 = arith.constant 149 : index
    %329 = memref.load %arg4[%c149_167] : memref<162xf32, #tpu.memory_space<smem>>
    %c150_168 = arith.constant 150 : index
    %330 = memref.load %arg4[%c150_168] : memref<162xf32, #tpu.memory_space<smem>>
    %c151_169 = arith.constant 151 : index
    %331 = memref.load %arg4[%c151_169] : memref<162xf32, #tpu.memory_space<smem>>
    %c152_170 = arith.constant 152 : index
    %332 = memref.load %arg4[%c152_170] : memref<162xf32, #tpu.memory_space<smem>>
    %c153_171 = arith.constant 153 : index
    %333 = memref.load %arg4[%c153_171] : memref<162xf32, #tpu.memory_space<smem>>
    %c154_172 = arith.constant 154 : index
    %334 = memref.load %arg4[%c154_172] : memref<162xf32, #tpu.memory_space<smem>>
    %c155_173 = arith.constant 155 : index
    %335 = memref.load %arg4[%c155_173] : memref<162xf32, #tpu.memory_space<smem>>
    %c156_174 = arith.constant 156 : index
    %336 = memref.load %arg4[%c156_174] : memref<162xf32, #tpu.memory_space<smem>>
    %c157_175 = arith.constant 157 : index
    %337 = memref.load %arg4[%c157_175] : memref<162xf32, #tpu.memory_space<smem>>
    %c158_176 = arith.constant 158 : index
    %338 = memref.load %arg4[%c158_176] : memref<162xf32, #tpu.memory_space<smem>>
    %c159_177 = arith.constant 159 : index
    %339 = memref.load %arg4[%c159_177] : memref<162xf32, #tpu.memory_space<smem>>
    %c160_178 = arith.constant 160 : index
    %340 = memref.load %arg4[%c160_178] : memref<162xf32, #tpu.memory_space<smem>>
    %c161_179 = arith.constant 161 : index
    %341 = memref.load %arg4[%c161_179] : memref<162xf32, #tpu.memory_space<smem>>
    %c0_180 = arith.constant 0 : index
    %342 = memref.load %arg5[%c0_180] : memref<9xf32, #tpu.memory_space<smem>>
    %c1_181 = arith.constant 1 : index
    %343 = memref.load %arg5[%c1_181] : memref<9xf32, #tpu.memory_space<smem>>
    %c2_182 = arith.constant 2 : index
    %344 = memref.load %arg5[%c2_182] : memref<9xf32, #tpu.memory_space<smem>>
    %c3_183 = arith.constant 3 : index
    %345 = memref.load %arg5[%c3_183] : memref<9xf32, #tpu.memory_space<smem>>
    %c4_184 = arith.constant 4 : index
    %346 = memref.load %arg5[%c4_184] : memref<9xf32, #tpu.memory_space<smem>>
    %c5_185 = arith.constant 5 : index
    %347 = memref.load %arg5[%c5_185] : memref<9xf32, #tpu.memory_space<smem>>
    %c6_186 = arith.constant 6 : index
    %348 = memref.load %arg5[%c6_186] : memref<9xf32, #tpu.memory_space<smem>>
    %c7_187 = arith.constant 7 : index
    %349 = memref.load %arg5[%c7_187] : memref<9xf32, #tpu.memory_space<smem>>
    %c8_188 = arith.constant 8 : index
    %350 = memref.load %arg5[%c8_188] : memref<9xf32, #tpu.memory_space<smem>>
    %c0_189 = arith.constant 0 : index
    %351 = memref.load %arg6[%c0_189] : memref<9xf32, #tpu.memory_space<smem>>
    %c1_190 = arith.constant 1 : index
    %352 = memref.load %arg6[%c1_190] : memref<9xf32, #tpu.memory_space<smem>>
    %c2_191 = arith.constant 2 : index
    %353 = memref.load %arg6[%c2_191] : memref<9xf32, #tpu.memory_space<smem>>
    %c3_192 = arith.constant 3 : index
    %354 = memref.load %arg6[%c3_192] : memref<9xf32, #tpu.memory_space<smem>>
    %c4_193 = arith.constant 4 : index
    %355 = memref.load %arg6[%c4_193] : memref<9xf32, #tpu.memory_space<smem>>
    %c5_194 = arith.constant 5 : index
    %356 = memref.load %arg6[%c5_194] : memref<9xf32, #tpu.memory_space<smem>>
    %c6_195 = arith.constant 6 : index
    %357 = memref.load %arg6[%c6_195] : memref<9xf32, #tpu.memory_space<smem>>
    %c7_196 = arith.constant 7 : index
    %358 = memref.load %arg6[%c7_196] : memref<9xf32, #tpu.memory_space<smem>>
    %c8_197 = arith.constant 8 : index
    %359 = memref.load %arg6[%c8_197] : memref<9xf32, #tpu.memory_space<smem>>
    %c0_198 = arith.constant 0 : index
    %360 = memref.load %arg7[%c0_198] : memref<1xf32, #tpu.memory_space<smem>>
    %c0_i32 = arith.constant 0 : i32
    %c8_i32 = arith.constant 8 : i32
    %361 = arith.muli %c0_i32, %c8_i32 : i32
    %362 = tpu.assume_multiple %361, 8 : i32
    %c0_199 = arith.constant 0 : index
    %363 = arith.index_cast %362 : i32 to index
    %c0_200 = arith.constant 0 : index
    %364 = vector.load %arg1[%c0_199, %363, %c0_200] : memref<9x8x128xf32, #tpu.memory_space<vmem>>, vector<1x8x128xf32>
    %365 = vector.shape_cast %364 : vector<1x8x128xf32> to vector<8x128xf32>
    %c1_201 = arith.constant 1 : index
    %366 = arith.index_cast %362 : i32 to index
    %c0_202 = arith.constant 0 : index
    %367 = vector.load %arg1[%c1_201, %366, %c0_202] : memref<9x8x128xf32, #tpu.memory_space<vmem>>, vector<1x8x128xf32>
    %368 = vector.shape_cast %367 : vector<1x8x128xf32> to vector<8x128xf32>
    %c2_203 = arith.constant 2 : index
    %369 = arith.index_cast %362 : i32 to index
    %c0_204 = arith.constant 0 : index
    %370 = vector.load %arg1[%c2_203, %369, %c0_204] : memref<9x8x128xf32, #tpu.memory_space<vmem>>, vector<1x8x128xf32>
    %371 = vector.shape_cast %370 : vector<1x8x128xf32> to vector<8x128xf32>
    %c3_205 = arith.constant 3 : index
    %372 = arith.index_cast %362 : i32 to index
    %c0_206 = arith.constant 0 : index
    %373 = vector.load %arg1[%c3_205, %372, %c0_206] : memref<9x8x128xf32, #tpu.memory_space<vmem>>, vector<1x8x128xf32>
    %374 = vector.shape_cast %373 : vector<1x8x128xf32> to vector<8x128xf32>
    %c4_207 = arith.constant 4 : index
    %375 = arith.index_cast %362 : i32 to index
    %c0_208 = arith.constant 0 : index
    %376 = vector.load %arg1[%c4_207, %375, %c0_208] : memref<9x8x128xf32, #tpu.memory_space<vmem>>, vector<1x8x128xf32>
    %377 = vector.shape_cast %376 : vector<1x8x128xf32> to vector<8x128xf32>
    %c5_209 = arith.constant 5 : index
    %378 = arith.index_cast %362 : i32 to index
    %c0_210 = arith.constant 0 : index
    %379 = vector.load %arg1[%c5_209, %378, %c0_210] : memref<9x8x128xf32, #tpu.memory_space<vmem>>, vector<1x8x128xf32>
    %380 = vector.shape_cast %379 : vector<1x8x128xf32> to vector<8x128xf32>
    %c6_211 = arith.constant 6 : index
    %381 = arith.index_cast %362 : i32 to index
    %c0_212 = arith.constant 0 : index
    %382 = vector.load %arg1[%c6_211, %381, %c0_212] : memref<9x8x128xf32, #tpu.memory_space<vmem>>, vector<1x8x128xf32>
    %383 = vector.shape_cast %382 : vector<1x8x128xf32> to vector<8x128xf32>
    %c7_213 = arith.constant 7 : index
    %384 = arith.index_cast %362 : i32 to index
    %c0_214 = arith.constant 0 : index
    %385 = vector.load %arg1[%c7_213, %384, %c0_214] : memref<9x8x128xf32, #tpu.memory_space<vmem>>, vector<1x8x128xf32>
    %386 = vector.shape_cast %385 : vector<1x8x128xf32> to vector<8x128xf32>
    %c8_215 = arith.constant 8 : index
    %387 = arith.index_cast %362 : i32 to index
    %c0_216 = arith.constant 0 : index
    %388 = vector.load %arg1[%c8_215, %387, %c0_216] : memref<9x8x128xf32, #tpu.memory_space<vmem>>, vector<1x8x128xf32>
    %389 = vector.shape_cast %388 : vector<1x8x128xf32> to vector<8x128xf32>
    %390 = vector.broadcast %0 : f32 to vector<8x128xf32>
    %391 = arith.mulf %365, %390 : vector<8x128xf32>
    %392 = vector.broadcast %1 : f32 to vector<8x128xf32>
    %393 = arith.mulf %368, %392 : vector<8x128xf32>
    %394 = arith.addf %391, %393 : vector<8x128xf32>
    %395 = vector.broadcast %2 : f32 to vector<8x128xf32>
    %396 = arith.mulf %371, %395 : vector<8x128xf32>
    %397 = arith.addf %394, %396 : vector<8x128xf32>
    %398 = vector.broadcast %3 : f32 to vector<8x128xf32>
    %399 = arith.mulf %374, %398 : vector<8x128xf32>
    %400 = arith.addf %397, %399 : vector<8x128xf32>
    %401 = vector.broadcast %4 : f32 to vector<8x128xf32>
    %402 = arith.mulf %377, %401 : vector<8x128xf32>
    %403 = arith.addf %400, %402 : vector<8x128xf32>
    %404 = vector.broadcast %5 : f32 to vector<8x128xf32>
    %405 = arith.mulf %380, %404 : vector<8x128xf32>
    %406 = arith.addf %403, %405 : vector<8x128xf32>
    %407 = vector.broadcast %6 : f32 to vector<8x128xf32>
    %408 = arith.mulf %383, %407 : vector<8x128xf32>
    %409 = arith.addf %406, %408 : vector<8x128xf32>
    %410 = vector.broadcast %7 : f32 to vector<8x128xf32>
    %411 = arith.mulf %386, %410 : vector<8x128xf32>
    %412 = arith.addf %409, %411 : vector<8x128xf32>
    %413 = vector.broadcast %8 : f32 to vector<8x128xf32>
    %414 = arith.mulf %389, %413 : vector<8x128xf32>
    %415 = arith.addf %412, %414 : vector<8x128xf32>
    %416 = vector.broadcast %162 : f32 to vector<8x128xf32>
    %417 = arith.addf %415, %416 : vector<8x128xf32>
    %cst = arith.constant 0.000000e+00 : f32
    %418 = vector.broadcast %cst : f32 to vector<8x128xf32>
    %419 = arith.maximumf %417, %418 : vector<8x128xf32>
    %420 = vector.broadcast %9 : f32 to vector<8x128xf32>
    %421 = arith.mulf %365, %420 : vector<8x128xf32>
    %422 = vector.broadcast %10 : f32 to vector<8x128xf32>
    %423 = arith.mulf %368, %422 : vector<8x128xf32>
    %424 = arith.addf %421, %423 : vector<8x128xf32>
    %425 = vector.broadcast %11 : f32 to vector<8x128xf32>
    %426 = arith.mulf %371, %425 : vector<8x128xf32>
    %427 = arith.addf %424, %426 : vector<8x128xf32>
    %428 = vector.broadcast %12 : f32 to vector<8x128xf32>
    %429 = arith.mulf %374, %428 : vector<8x128xf32>
    %430 = arith.addf %427, %429 : vector<8x128xf32>
    %431 = vector.broadcast %13 : f32 to vector<8x128xf32>
    %432 = arith.mulf %377, %431 : vector<8x128xf32>
    %433 = arith.addf %430, %432 : vector<8x128xf32>
    %434 = vector.broadcast %14 : f32 to vector<8x128xf32>
    %435 = arith.mulf %380, %434 : vector<8x128xf32>
    %436 = arith.addf %433, %435 : vector<8x128xf32>
    %437 = vector.broadcast %15 : f32 to vector<8x128xf32>
    %438 = arith.mulf %383, %437 : vector<8x128xf32>
    %439 = arith.addf %436, %438 : vector<8x128xf32>
    %440 = vector.broadcast %16 : f32 to vector<8x128xf32>
    %441 = arith.mulf %386, %440 : vector<8x128xf32>
    %442 = arith.addf %439, %441 : vector<8x128xf32>
    %443 = vector.broadcast %17 : f32 to vector<8x128xf32>
    %444 = arith.mulf %389, %443 : vector<8x128xf32>
    %445 = arith.addf %442, %444 : vector<8x128xf32>
    %446 = vector.broadcast %163 : f32 to vector<8x128xf32>
    %447 = arith.addf %445, %446 : vector<8x128xf32>
    %cst_217 = arith.constant 0.000000e+00 : f32
    %448 = vector.broadcast %cst_217 : f32 to vector<8x128xf32>
    %449 = arith.maximumf %447, %448 : vector<8x128xf32>
    %450 = vector.broadcast %18 : f32 to vector<8x128xf32>
    %451 = arith.mulf %365, %450 : vector<8x128xf32>
    %452 = vector.broadcast %19 : f32 to vector<8x128xf32>
    %453 = arith.mulf %368, %452 : vector<8x128xf32>
    %454 = arith.addf %451, %453 : vector<8x128xf32>
    %455 = vector.broadcast %20 : f32 to vector<8x128xf32>
    %456 = arith.mulf %371, %455 : vector<8x128xf32>
    %457 = arith.addf %454, %456 : vector<8x128xf32>
    %458 = vector.broadcast %21 : f32 to vector<8x128xf32>
    %459 = arith.mulf %374, %458 : vector<8x128xf32>
    %460 = arith.addf %457, %459 : vector<8x128xf32>
    %461 = vector.broadcast %22 : f32 to vector<8x128xf32>
    %462 = arith.mulf %377, %461 : vector<8x128xf32>
    %463 = arith.addf %460, %462 : vector<8x128xf32>
    %464 = vector.broadcast %23 : f32 to vector<8x128xf32>
    %465 = arith.mulf %380, %464 : vector<8x128xf32>
    %466 = arith.addf %463, %465 : vector<8x128xf32>
    %467 = vector.broadcast %24 : f32 to vector<8x128xf32>
    %468 = arith.mulf %383, %467 : vector<8x128xf32>
    %469 = arith.addf %466, %468 : vector<8x128xf32>
    %470 = vector.broadcast %25 : f32 to vector<8x128xf32>
    %471 = arith.mulf %386, %470 : vector<8x128xf32>
    %472 = arith.addf %469, %471 : vector<8x128xf32>
    %473 = vector.broadcast %26 : f32 to vector<8x128xf32>
    %474 = arith.mulf %389, %473 : vector<8x128xf32>
    %475 = arith.addf %472, %474 : vector<8x128xf32>
    %476 = vector.broadcast %164 : f32 to vector<8x128xf32>
    %477 = arith.addf %475, %476 : vector<8x128xf32>
    %cst_218 = arith.constant 0.000000e+00 : f32
    %478 = vector.broadcast %cst_218 : f32 to vector<8x128xf32>
    %479 = arith.maximumf %477, %478 : vector<8x128xf32>
    %480 = vector.broadcast %27 : f32 to vector<8x128xf32>
    %481 = arith.mulf %365, %480 : vector<8x128xf32>
    %482 = vector.broadcast %28 : f32 to vector<8x128xf32>
    %483 = arith.mulf %368, %482 : vector<8x128xf32>
    %484 = arith.addf %481, %483 : vector<8x128xf32>
    %485 = vector.broadcast %29 : f32 to vector<8x128xf32>
    %486 = arith.mulf %371, %485 : vector<8x128xf32>
    %487 = arith.addf %484, %486 : vector<8x128xf32>
    %488 = vector.broadcast %30 : f32 to vector<8x128xf32>
    %489 = arith.mulf %374, %488 : vector<8x128xf32>
    %490 = arith.addf %487, %489 : vector<8x128xf32>
    %491 = vector.broadcast %31 : f32 to vector<8x128xf32>
    %492 = arith.mulf %377, %491 : vector<8x128xf32>
    %493 = arith.addf %490, %492 : vector<8x128xf32>
    %494 = vector.broadcast %32 : f32 to vector<8x128xf32>
    %495 = arith.mulf %380, %494 : vector<8x128xf32>
    %496 = arith.addf %493, %495 : vector<8x128xf32>
    %497 = vector.broadcast %33 : f32 to vector<8x128xf32>
    %498 = arith.mulf %383, %497 : vector<8x128xf32>
    %499 = arith.addf %496, %498 : vector<8x128xf32>
    %500 = vector.broadcast %34 : f32 to vector<8x128xf32>
    %501 = arith.mulf %386, %500 : vector<8x128xf32>
    %502 = arith.addf %499, %501 : vector<8x128xf32>
    %503 = vector.broadcast %35 : f32 to vector<8x128xf32>
    %504 = arith.mulf %389, %503 : vector<8x128xf32>
    %505 = arith.addf %502, %504 : vector<8x128xf32>
    %506 = vector.broadcast %165 : f32 to vector<8x128xf32>
    %507 = arith.addf %505, %506 : vector<8x128xf32>
    %cst_219 = arith.constant 0.000000e+00 : f32
    %508 = vector.broadcast %cst_219 : f32 to vector<8x128xf32>
    %509 = arith.maximumf %507, %508 : vector<8x128xf32>
    %510 = vector.broadcast %36 : f32 to vector<8x128xf32>
    %511 = arith.mulf %365, %510 : vector<8x128xf32>
    %512 = vector.broadcast %37 : f32 to vector<8x128xf32>
    %513 = arith.mulf %368, %512 : vector<8x128xf32>
    %514 = arith.addf %511, %513 : vector<8x128xf32>
    %515 = vector.broadcast %38 : f32 to vector<8x128xf32>
    %516 = arith.mulf %371, %515 : vector<8x128xf32>
    %517 = arith.addf %514, %516 : vector<8x128xf32>
    %518 = vector.broadcast %39 : f32 to vector<8x128xf32>
    %519 = arith.mulf %374, %518 : vector<8x128xf32>
    %520 = arith.addf %517, %519 : vector<8x128xf32>
    %521 = vector.broadcast %40 : f32 to vector<8x128xf32>
    %522 = arith.mulf %377, %521 : vector<8x128xf32>
    %523 = arith.addf %520, %522 : vector<8x128xf32>
    %524 = vector.broadcast %41 : f32 to vector<8x128xf32>
    %525 = arith.mulf %380, %524 : vector<8x128xf32>
    %526 = arith.addf %523, %525 : vector<8x128xf32>
    %527 = vector.broadcast %42 : f32 to vector<8x128xf32>
    %528 = arith.mulf %383, %527 : vector<8x128xf32>
    %529 = arith.addf %526, %528 : vector<8x128xf32>
    %530 = vector.broadcast %43 : f32 to vector<8x128xf32>
    %531 = arith.mulf %386, %530 : vector<8x128xf32>
    %532 = arith.addf %529, %531 : vector<8x128xf32>
    %533 = vector.broadcast %44 : f32 to vector<8x128xf32>
    %534 = arith.mulf %389, %533 : vector<8x128xf32>
    %535 = arith.addf %532, %534 : vector<8x128xf32>
    %536 = vector.broadcast %166 : f32 to vector<8x128xf32>
    %537 = arith.addf %535, %536 : vector<8x128xf32>
    %cst_220 = arith.constant 0.000000e+00 : f32
    %538 = vector.broadcast %cst_220 : f32 to vector<8x128xf32>
    %539 = arith.maximumf %537, %538 : vector<8x128xf32>
    %540 = vector.broadcast %45 : f32 to vector<8x128xf32>
    %541 = arith.mulf %365, %540 : vector<8x128xf32>
    %542 = vector.broadcast %46 : f32 to vector<8x128xf32>
    %543 = arith.mulf %368, %542 : vector<8x128xf32>
    %544 = arith.addf %541, %543 : vector<8x128xf32>
    %545 = vector.broadcast %47 : f32 to vector<8x128xf32>
    %546 = arith.mulf %371, %545 : vector<8x128xf32>
    %547 = arith.addf %544, %546 : vector<8x128xf32>
    %548 = vector.broadcast %48 : f32 to vector<8x128xf32>
    %549 = arith.mulf %374, %548 : vector<8x128xf32>
    %550 = arith.addf %547, %549 : vector<8x128xf32>
    %551 = vector.broadcast %49 : f32 to vector<8x128xf32>
    %552 = arith.mulf %377, %551 : vector<8x128xf32>
    %553 = arith.addf %550, %552 : vector<8x128xf32>
    %554 = vector.broadcast %50 : f32 to vector<8x128xf32>
    %555 = arith.mulf %380, %554 : vector<8x128xf32>
    %556 = arith.addf %553, %555 : vector<8x128xf32>
    %557 = vector.broadcast %51 : f32 to vector<8x128xf32>
    %558 = arith.mulf %383, %557 : vector<8x128xf32>
    %559 = arith.addf %556, %558 : vector<8x128xf32>
    %560 = vector.broadcast %52 : f32 to vector<8x128xf32>
    %561 = arith.mulf %386, %560 : vector<8x128xf32>
    %562 = arith.addf %559, %561 : vector<8x128xf32>
    %563 = vector.broadcast %53 : f32 to vector<8x128xf32>
    %564 = arith.mulf %389, %563 : vector<8x128xf32>
    %565 = arith.addf %562, %564 : vector<8x128xf32>
    %566 = vector.broadcast %167 : f32 to vector<8x128xf32>
    %567 = arith.addf %565, %566 : vector<8x128xf32>
    %cst_221 = arith.constant 0.000000e+00 : f32
    %568 = vector.broadcast %cst_221 : f32 to vector<8x128xf32>
    %569 = arith.maximumf %567, %568 : vector<8x128xf32>
    %570 = vector.broadcast %54 : f32 to vector<8x128xf32>
    %571 = arith.mulf %365, %570 : vector<8x128xf32>
    %572 = vector.broadcast %55 : f32 to vector<8x128xf32>
    %573 = arith.mulf %368, %572 : vector<8x128xf32>
    %574 = arith.addf %571, %573 : vector<8x128xf32>
    %575 = vector.broadcast %56 : f32 to vector<8x128xf32>
    %576 = arith.mulf %371, %575 : vector<8x128xf32>
    %577 = arith.addf %574, %576 : vector<8x128xf32>
    %578 = vector.broadcast %57 : f32 to vector<8x128xf32>
    %579 = arith.mulf %374, %578 : vector<8x128xf32>
    %580 = arith.addf %577, %579 : vector<8x128xf32>
    %581 = vector.broadcast %58 : f32 to vector<8x128xf32>
    %582 = arith.mulf %377, %581 : vector<8x128xf32>
    %583 = arith.addf %580, %582 : vector<8x128xf32>
    %584 = vector.broadcast %59 : f32 to vector<8x128xf32>
    %585 = arith.mulf %380, %584 : vector<8x128xf32>
    %586 = arith.addf %583, %585 : vector<8x128xf32>
    %587 = vector.broadcast %60 : f32 to vector<8x128xf32>
    %588 = arith.mulf %383, %587 : vector<8x128xf32>
    %589 = arith.addf %586, %588 : vector<8x128xf32>
    %590 = vector.broadcast %61 : f32 to vector<8x128xf32>
    %591 = arith.mulf %386, %590 : vector<8x128xf32>
    %592 = arith.addf %589, %591 : vector<8x128xf32>
    %593 = vector.broadcast %62 : f32 to vector<8x128xf32>
    %594 = arith.mulf %389, %593 : vector<8x128xf32>
    %595 = arith.addf %592, %594 : vector<8x128xf32>
    %596 = vector.broadcast %168 : f32 to vector<8x128xf32>
    %597 = arith.addf %595, %596 : vector<8x128xf32>
    %cst_222 = arith.constant 0.000000e+00 : f32
    %598 = vector.broadcast %cst_222 : f32 to vector<8x128xf32>
    %599 = arith.maximumf %597, %598 : vector<8x128xf32>
    %600 = vector.broadcast %63 : f32 to vector<8x128xf32>
    %601 = arith.mulf %365, %600 : vector<8x128xf32>
    %602 = vector.broadcast %64 : f32 to vector<8x128xf32>
    %603 = arith.mulf %368, %602 : vector<8x128xf32>
    %604 = arith.addf %601, %603 : vector<8x128xf32>
    %605 = vector.broadcast %65 : f32 to vector<8x128xf32>
    %606 = arith.mulf %371, %605 : vector<8x128xf32>
    %607 = arith.addf %604, %606 : vector<8x128xf32>
    %608 = vector.broadcast %66 : f32 to vector<8x128xf32>
    %609 = arith.mulf %374, %608 : vector<8x128xf32>
    %610 = arith.addf %607, %609 : vector<8x128xf32>
    %611 = vector.broadcast %67 : f32 to vector<8x128xf32>
    %612 = arith.mulf %377, %611 : vector<8x128xf32>
    %613 = arith.addf %610, %612 : vector<8x128xf32>
    %614 = vector.broadcast %68 : f32 to vector<8x128xf32>
    %615 = arith.mulf %380, %614 : vector<8x128xf32>
    %616 = arith.addf %613, %615 : vector<8x128xf32>
    %617 = vector.broadcast %69 : f32 to vector<8x128xf32>
    %618 = arith.mulf %383, %617 : vector<8x128xf32>
    %619 = arith.addf %616, %618 : vector<8x128xf32>
    %620 = vector.broadcast %70 : f32 to vector<8x128xf32>
    %621 = arith.mulf %386, %620 : vector<8x128xf32>
    %622 = arith.addf %619, %621 : vector<8x128xf32>
    %623 = vector.broadcast %71 : f32 to vector<8x128xf32>
    %624 = arith.mulf %389, %623 : vector<8x128xf32>
    %625 = arith.addf %622, %624 : vector<8x128xf32>
    %626 = vector.broadcast %169 : f32 to vector<8x128xf32>
    %627 = arith.addf %625, %626 : vector<8x128xf32>
    %cst_223 = arith.constant 0.000000e+00 : f32
    %628 = vector.broadcast %cst_223 : f32 to vector<8x128xf32>
    %629 = arith.maximumf %627, %628 : vector<8x128xf32>
    %630 = vector.broadcast %72 : f32 to vector<8x128xf32>
    %631 = arith.mulf %365, %630 : vector<8x128xf32>
    %632 = vector.broadcast %73 : f32 to vector<8x128xf32>
    %633 = arith.mulf %368, %632 : vector<8x128xf32>
    %634 = arith.addf %631, %633 : vector<8x128xf32>
    %635 = vector.broadcast %74 : f32 to vector<8x128xf32>
    %636 = arith.mulf %371, %635 : vector<8x128xf32>
    %637 = arith.addf %634, %636 : vector<8x128xf32>
    %638 = vector.broadcast %75 : f32 to vector<8x128xf32>
    %639 = arith.mulf %374, %638 : vector<8x128xf32>
    %640 = arith.addf %637, %639 : vector<8x128xf32>
    %641 = vector.broadcast %76 : f32 to vector<8x128xf32>
    %642 = arith.mulf %377, %641 : vector<8x128xf32>
    %643 = arith.addf %640, %642 : vector<8x128xf32>
    %644 = vector.broadcast %77 : f32 to vector<8x128xf32>
    %645 = arith.mulf %380, %644 : vector<8x128xf32>
    %646 = arith.addf %643, %645 : vector<8x128xf32>
    %647 = vector.broadcast %78 : f32 to vector<8x128xf32>
    %648 = arith.mulf %383, %647 : vector<8x128xf32>
    %649 = arith.addf %646, %648 : vector<8x128xf32>
    %650 = vector.broadcast %79 : f32 to vector<8x128xf32>
    %651 = arith.mulf %386, %650 : vector<8x128xf32>
    %652 = arith.addf %649, %651 : vector<8x128xf32>
    %653 = vector.broadcast %80 : f32 to vector<8x128xf32>
    %654 = arith.mulf %389, %653 : vector<8x128xf32>
    %655 = arith.addf %652, %654 : vector<8x128xf32>
    %656 = vector.broadcast %170 : f32 to vector<8x128xf32>
    %657 = arith.addf %655, %656 : vector<8x128xf32>
    %cst_224 = arith.constant 0.000000e+00 : f32
    %658 = vector.broadcast %cst_224 : f32 to vector<8x128xf32>
    %659 = arith.maximumf %657, %658 : vector<8x128xf32>
    %660 = vector.broadcast %81 : f32 to vector<8x128xf32>
    %661 = arith.mulf %365, %660 : vector<8x128xf32>
    %662 = vector.broadcast %82 : f32 to vector<8x128xf32>
    %663 = arith.mulf %368, %662 : vector<8x128xf32>
    %664 = arith.addf %661, %663 : vector<8x128xf32>
    %665 = vector.broadcast %83 : f32 to vector<8x128xf32>
    %666 = arith.mulf %371, %665 : vector<8x128xf32>
    %667 = arith.addf %664, %666 : vector<8x128xf32>
    %668 = vector.broadcast %84 : f32 to vector<8x128xf32>
    %669 = arith.mulf %374, %668 : vector<8x128xf32>
    %670 = arith.addf %667, %669 : vector<8x128xf32>
    %671 = vector.broadcast %85 : f32 to vector<8x128xf32>
    %672 = arith.mulf %377, %671 : vector<8x128xf32>
    %673 = arith.addf %670, %672 : vector<8x128xf32>
    %674 = vector.broadcast %86 : f32 to vector<8x128xf32>
    %675 = arith.mulf %380, %674 : vector<8x128xf32>
    %676 = arith.addf %673, %675 : vector<8x128xf32>
    %677 = vector.broadcast %87 : f32 to vector<8x128xf32>
    %678 = arith.mulf %383, %677 : vector<8x128xf32>
    %679 = arith.addf %676, %678 : vector<8x128xf32>
    %680 = vector.broadcast %88 : f32 to vector<8x128xf32>
    %681 = arith.mulf %386, %680 : vector<8x128xf32>
    %682 = arith.addf %679, %681 : vector<8x128xf32>
    %683 = vector.broadcast %89 : f32 to vector<8x128xf32>
    %684 = arith.mulf %389, %683 : vector<8x128xf32>
    %685 = arith.addf %682, %684 : vector<8x128xf32>
    %686 = vector.broadcast %171 : f32 to vector<8x128xf32>
    %687 = arith.addf %685, %686 : vector<8x128xf32>
    %cst_225 = arith.constant 0.000000e+00 : f32
    %688 = vector.broadcast %cst_225 : f32 to vector<8x128xf32>
    %689 = arith.maximumf %687, %688 : vector<8x128xf32>
    %690 = vector.broadcast %90 : f32 to vector<8x128xf32>
    %691 = arith.mulf %365, %690 : vector<8x128xf32>
    %692 = vector.broadcast %91 : f32 to vector<8x128xf32>
    %693 = arith.mulf %368, %692 : vector<8x128xf32>
    %694 = arith.addf %691, %693 : vector<8x128xf32>
    %695 = vector.broadcast %92 : f32 to vector<8x128xf32>
    %696 = arith.mulf %371, %695 : vector<8x128xf32>
    %697 = arith.addf %694, %696 : vector<8x128xf32>
    %698 = vector.broadcast %93 : f32 to vector<8x128xf32>
    %699 = arith.mulf %374, %698 : vector<8x128xf32>
    %700 = arith.addf %697, %699 : vector<8x128xf32>
    %701 = vector.broadcast %94 : f32 to vector<8x128xf32>
    %702 = arith.mulf %377, %701 : vector<8x128xf32>
    %703 = arith.addf %700, %702 : vector<8x128xf32>
    %704 = vector.broadcast %95 : f32 to vector<8x128xf32>
    %705 = arith.mulf %380, %704 : vector<8x128xf32>
    %706 = arith.addf %703, %705 : vector<8x128xf32>
    %707 = vector.broadcast %96 : f32 to vector<8x128xf32>
    %708 = arith.mulf %383, %707 : vector<8x128xf32>
    %709 = arith.addf %706, %708 : vector<8x128xf32>
    %710 = vector.broadcast %97 : f32 to vector<8x128xf32>
    %711 = arith.mulf %386, %710 : vector<8x128xf32>
    %712 = arith.addf %709, %711 : vector<8x128xf32>
    %713 = vector.broadcast %98 : f32 to vector<8x128xf32>
    %714 = arith.mulf %389, %713 : vector<8x128xf32>
    %715 = arith.addf %712, %714 : vector<8x128xf32>
    %716 = vector.broadcast %172 : f32 to vector<8x128xf32>
    %717 = arith.addf %715, %716 : vector<8x128xf32>
    %cst_226 = arith.constant 0.000000e+00 : f32
    %718 = vector.broadcast %cst_226 : f32 to vector<8x128xf32>
    %719 = arith.maximumf %717, %718 : vector<8x128xf32>
    %720 = vector.broadcast %99 : f32 to vector<8x128xf32>
    %721 = arith.mulf %365, %720 : vector<8x128xf32>
    %722 = vector.broadcast %100 : f32 to vector<8x128xf32>
    %723 = arith.mulf %368, %722 : vector<8x128xf32>
    %724 = arith.addf %721, %723 : vector<8x128xf32>
    %725 = vector.broadcast %101 : f32 to vector<8x128xf32>
    %726 = arith.mulf %371, %725 : vector<8x128xf32>
    %727 = arith.addf %724, %726 : vector<8x128xf32>
    %728 = vector.broadcast %102 : f32 to vector<8x128xf32>
    %729 = arith.mulf %374, %728 : vector<8x128xf32>
    %730 = arith.addf %727, %729 : vector<8x128xf32>
    %731 = vector.broadcast %103 : f32 to vector<8x128xf32>
    %732 = arith.mulf %377, %731 : vector<8x128xf32>
    %733 = arith.addf %730, %732 : vector<8x128xf32>
    %734 = vector.broadcast %104 : f32 to vector<8x128xf32>
    %735 = arith.mulf %380, %734 : vector<8x128xf32>
    %736 = arith.addf %733, %735 : vector<8x128xf32>
    %737 = vector.broadcast %105 : f32 to vector<8x128xf32>
    %738 = arith.mulf %383, %737 : vector<8x128xf32>
    %739 = arith.addf %736, %738 : vector<8x128xf32>
    %740 = vector.broadcast %106 : f32 to vector<8x128xf32>
    %741 = arith.mulf %386, %740 : vector<8x128xf32>
    %742 = arith.addf %739, %741 : vector<8x128xf32>
    %743 = vector.broadcast %107 : f32 to vector<8x128xf32>
    %744 = arith.mulf %389, %743 : vector<8x128xf32>
    %745 = arith.addf %742, %744 : vector<8x128xf32>
    %746 = vector.broadcast %173 : f32 to vector<8x128xf32>
    %747 = arith.addf %745, %746 : vector<8x128xf32>
    %cst_227 = arith.constant 0.000000e+00 : f32
    %748 = vector.broadcast %cst_227 : f32 to vector<8x128xf32>
    %749 = arith.maximumf %747, %748 : vector<8x128xf32>
    %750 = vector.broadcast %108 : f32 to vector<8x128xf32>
    %751 = arith.mulf %365, %750 : vector<8x128xf32>
    %752 = vector.broadcast %109 : f32 to vector<8x128xf32>
    %753 = arith.mulf %368, %752 : vector<8x128xf32>
    %754 = arith.addf %751, %753 : vector<8x128xf32>
    %755 = vector.broadcast %110 : f32 to vector<8x128xf32>
    %756 = arith.mulf %371, %755 : vector<8x128xf32>
    %757 = arith.addf %754, %756 : vector<8x128xf32>
    %758 = vector.broadcast %111 : f32 to vector<8x128xf32>
    %759 = arith.mulf %374, %758 : vector<8x128xf32>
    %760 = arith.addf %757, %759 : vector<8x128xf32>
    %761 = vector.broadcast %112 : f32 to vector<8x128xf32>
    %762 = arith.mulf %377, %761 : vector<8x128xf32>
    %763 = arith.addf %760, %762 : vector<8x128xf32>
    %764 = vector.broadcast %113 : f32 to vector<8x128xf32>
    %765 = arith.mulf %380, %764 : vector<8x128xf32>
    %766 = arith.addf %763, %765 : vector<8x128xf32>
    %767 = vector.broadcast %114 : f32 to vector<8x128xf32>
    %768 = arith.mulf %383, %767 : vector<8x128xf32>
    %769 = arith.addf %766, %768 : vector<8x128xf32>
    %770 = vector.broadcast %115 : f32 to vector<8x128xf32>
    %771 = arith.mulf %386, %770 : vector<8x128xf32>
    %772 = arith.addf %769, %771 : vector<8x128xf32>
    %773 = vector.broadcast %116 : f32 to vector<8x128xf32>
    %774 = arith.mulf %389, %773 : vector<8x128xf32>
    %775 = arith.addf %772, %774 : vector<8x128xf32>
    %776 = vector.broadcast %174 : f32 to vector<8x128xf32>
    %777 = arith.addf %775, %776 : vector<8x128xf32>
    %cst_228 = arith.constant 0.000000e+00 : f32
    %778 = vector.broadcast %cst_228 : f32 to vector<8x128xf32>
    %779 = arith.maximumf %777, %778 : vector<8x128xf32>
    %780 = vector.broadcast %117 : f32 to vector<8x128xf32>
    %781 = arith.mulf %365, %780 : vector<8x128xf32>
    %782 = vector.broadcast %118 : f32 to vector<8x128xf32>
    %783 = arith.mulf %368, %782 : vector<8x128xf32>
    %784 = arith.addf %781, %783 : vector<8x128xf32>
    %785 = vector.broadcast %119 : f32 to vector<8x128xf32>
    %786 = arith.mulf %371, %785 : vector<8x128xf32>
    %787 = arith.addf %784, %786 : vector<8x128xf32>
    %788 = vector.broadcast %120 : f32 to vector<8x128xf32>
    %789 = arith.mulf %374, %788 : vector<8x128xf32>
    %790 = arith.addf %787, %789 : vector<8x128xf32>
    %791 = vector.broadcast %121 : f32 to vector<8x128xf32>
    %792 = arith.mulf %377, %791 : vector<8x128xf32>
    %793 = arith.addf %790, %792 : vector<8x128xf32>
    %794 = vector.broadcast %122 : f32 to vector<8x128xf32>
    %795 = arith.mulf %380, %794 : vector<8x128xf32>
    %796 = arith.addf %793, %795 : vector<8x128xf32>
    %797 = vector.broadcast %123 : f32 to vector<8x128xf32>
    %798 = arith.mulf %383, %797 : vector<8x128xf32>
    %799 = arith.addf %796, %798 : vector<8x128xf32>
    %800 = vector.broadcast %124 : f32 to vector<8x128xf32>
    %801 = arith.mulf %386, %800 : vector<8x128xf32>
    %802 = arith.addf %799, %801 : vector<8x128xf32>
    %803 = vector.broadcast %125 : f32 to vector<8x128xf32>
    %804 = arith.mulf %389, %803 : vector<8x128xf32>
    %805 = arith.addf %802, %804 : vector<8x128xf32>
    %806 = vector.broadcast %175 : f32 to vector<8x128xf32>
    %807 = arith.addf %805, %806 : vector<8x128xf32>
    %cst_229 = arith.constant 0.000000e+00 : f32
    %808 = vector.broadcast %cst_229 : f32 to vector<8x128xf32>
    %809 = arith.maximumf %807, %808 : vector<8x128xf32>
    %810 = vector.broadcast %126 : f32 to vector<8x128xf32>
    %811 = arith.mulf %365, %810 : vector<8x128xf32>
    %812 = vector.broadcast %127 : f32 to vector<8x128xf32>
    %813 = arith.mulf %368, %812 : vector<8x128xf32>
    %814 = arith.addf %811, %813 : vector<8x128xf32>
    %815 = vector.broadcast %128 : f32 to vector<8x128xf32>
    %816 = arith.mulf %371, %815 : vector<8x128xf32>
    %817 = arith.addf %814, %816 : vector<8x128xf32>
    %818 = vector.broadcast %129 : f32 to vector<8x128xf32>
    %819 = arith.mulf %374, %818 : vector<8x128xf32>
    %820 = arith.addf %817, %819 : vector<8x128xf32>
    %821 = vector.broadcast %130 : f32 to vector<8x128xf32>
    %822 = arith.mulf %377, %821 : vector<8x128xf32>
    %823 = arith.addf %820, %822 : vector<8x128xf32>
    %824 = vector.broadcast %131 : f32 to vector<8x128xf32>
    %825 = arith.mulf %380, %824 : vector<8x128xf32>
    %826 = arith.addf %823, %825 : vector<8x128xf32>
    %827 = vector.broadcast %132 : f32 to vector<8x128xf32>
    %828 = arith.mulf %383, %827 : vector<8x128xf32>
    %829 = arith.addf %826, %828 : vector<8x128xf32>
    %830 = vector.broadcast %133 : f32 to vector<8x128xf32>
    %831 = arith.mulf %386, %830 : vector<8x128xf32>
    %832 = arith.addf %829, %831 : vector<8x128xf32>
    %833 = vector.broadcast %134 : f32 to vector<8x128xf32>
    %834 = arith.mulf %389, %833 : vector<8x128xf32>
    %835 = arith.addf %832, %834 : vector<8x128xf32>
    %836 = vector.broadcast %176 : f32 to vector<8x128xf32>
    %837 = arith.addf %835, %836 : vector<8x128xf32>
    %cst_230 = arith.constant 0.000000e+00 : f32
    %838 = vector.broadcast %cst_230 : f32 to vector<8x128xf32>
    %839 = arith.maximumf %837, %838 : vector<8x128xf32>
    %840 = vector.broadcast %135 : f32 to vector<8x128xf32>
    %841 = arith.mulf %365, %840 : vector<8x128xf32>
    %842 = vector.broadcast %136 : f32 to vector<8x128xf32>
    %843 = arith.mulf %368, %842 : vector<8x128xf32>
    %844 = arith.addf %841, %843 : vector<8x128xf32>
    %845 = vector.broadcast %137 : f32 to vector<8x128xf32>
    %846 = arith.mulf %371, %845 : vector<8x128xf32>
    %847 = arith.addf %844, %846 : vector<8x128xf32>
    %848 = vector.broadcast %138 : f32 to vector<8x128xf32>
    %849 = arith.mulf %374, %848 : vector<8x128xf32>
    %850 = arith.addf %847, %849 : vector<8x128xf32>
    %851 = vector.broadcast %139 : f32 to vector<8x128xf32>
    %852 = arith.mulf %377, %851 : vector<8x128xf32>
    %853 = arith.addf %850, %852 : vector<8x128xf32>
    %854 = vector.broadcast %140 : f32 to vector<8x128xf32>
    %855 = arith.mulf %380, %854 : vector<8x128xf32>
    %856 = arith.addf %853, %855 : vector<8x128xf32>
    %857 = vector.broadcast %141 : f32 to vector<8x128xf32>
    %858 = arith.mulf %383, %857 : vector<8x128xf32>
    %859 = arith.addf %856, %858 : vector<8x128xf32>
    %860 = vector.broadcast %142 : f32 to vector<8x128xf32>
    %861 = arith.mulf %386, %860 : vector<8x128xf32>
    %862 = arith.addf %859, %861 : vector<8x128xf32>
    %863 = vector.broadcast %143 : f32 to vector<8x128xf32>
    %864 = arith.mulf %389, %863 : vector<8x128xf32>
    %865 = arith.addf %862, %864 : vector<8x128xf32>
    %866 = vector.broadcast %177 : f32 to vector<8x128xf32>
    %867 = arith.addf %865, %866 : vector<8x128xf32>
    %cst_231 = arith.constant 0.000000e+00 : f32
    %868 = vector.broadcast %cst_231 : f32 to vector<8x128xf32>
    %869 = arith.maximumf %867, %868 : vector<8x128xf32>
    %870 = vector.broadcast %144 : f32 to vector<8x128xf32>
    %871 = arith.mulf %365, %870 : vector<8x128xf32>
    %872 = vector.broadcast %145 : f32 to vector<8x128xf32>
    %873 = arith.mulf %368, %872 : vector<8x128xf32>
    %874 = arith.addf %871, %873 : vector<8x128xf32>
    %875 = vector.broadcast %146 : f32 to vector<8x128xf32>
    %876 = arith.mulf %371, %875 : vector<8x128xf32>
    %877 = arith.addf %874, %876 : vector<8x128xf32>
    %878 = vector.broadcast %147 : f32 to vector<8x128xf32>
    %879 = arith.mulf %374, %878 : vector<8x128xf32>
    %880 = arith.addf %877, %879 : vector<8x128xf32>
    %881 = vector.broadcast %148 : f32 to vector<8x128xf32>
    %882 = arith.mulf %377, %881 : vector<8x128xf32>
    %883 = arith.addf %880, %882 : vector<8x128xf32>
    %884 = vector.broadcast %149 : f32 to vector<8x128xf32>
    %885 = arith.mulf %380, %884 : vector<8x128xf32>
    %886 = arith.addf %883, %885 : vector<8x128xf32>
    %887 = vector.broadcast %150 : f32 to vector<8x128xf32>
    %888 = arith.mulf %383, %887 : vector<8x128xf32>
    %889 = arith.addf %886, %888 : vector<8x128xf32>
    %890 = vector.broadcast %151 : f32 to vector<8x128xf32>
    %891 = arith.mulf %386, %890 : vector<8x128xf32>
    %892 = arith.addf %889, %891 : vector<8x128xf32>
    %893 = vector.broadcast %152 : f32 to vector<8x128xf32>
    %894 = arith.mulf %389, %893 : vector<8x128xf32>
    %895 = arith.addf %892, %894 : vector<8x128xf32>
    %896 = vector.broadcast %178 : f32 to vector<8x128xf32>
    %897 = arith.addf %895, %896 : vector<8x128xf32>
    %cst_232 = arith.constant 0.000000e+00 : f32
    %898 = vector.broadcast %cst_232 : f32 to vector<8x128xf32>
    %899 = arith.maximumf %897, %898 : vector<8x128xf32>
    %900 = vector.broadcast %153 : f32 to vector<8x128xf32>
    %901 = arith.mulf %365, %900 : vector<8x128xf32>
    %902 = vector.broadcast %154 : f32 to vector<8x128xf32>
    %903 = arith.mulf %368, %902 : vector<8x128xf32>
    %904 = arith.addf %901, %903 : vector<8x128xf32>
    %905 = vector.broadcast %155 : f32 to vector<8x128xf32>
    %906 = arith.mulf %371, %905 : vector<8x128xf32>
    %907 = arith.addf %904, %906 : vector<8x128xf32>
    %908 = vector.broadcast %156 : f32 to vector<8x128xf32>
    %909 = arith.mulf %374, %908 : vector<8x128xf32>
    %910 = arith.addf %907, %909 : vector<8x128xf32>
    %911 = vector.broadcast %157 : f32 to vector<8x128xf32>
    %912 = arith.mulf %377, %911 : vector<8x128xf32>
    %913 = arith.addf %910, %912 : vector<8x128xf32>
    %914 = vector.broadcast %158 : f32 to vector<8x128xf32>
    %915 = arith.mulf %380, %914 : vector<8x128xf32>
    %916 = arith.addf %913, %915 : vector<8x128xf32>
    %917 = vector.broadcast %159 : f32 to vector<8x128xf32>
    %918 = arith.mulf %383, %917 : vector<8x128xf32>
    %919 = arith.addf %916, %918 : vector<8x128xf32>
    %920 = vector.broadcast %160 : f32 to vector<8x128xf32>
    %921 = arith.mulf %386, %920 : vector<8x128xf32>
    %922 = arith.addf %919, %921 : vector<8x128xf32>
    %923 = vector.broadcast %161 : f32 to vector<8x128xf32>
    %924 = arith.mulf %389, %923 : vector<8x128xf32>
    %925 = arith.addf %922, %924 : vector<8x128xf32>
    %926 = vector.broadcast %179 : f32 to vector<8x128xf32>
    %927 = arith.addf %925, %926 : vector<8x128xf32>
    %cst_233 = arith.constant 0.000000e+00 : f32
    %928 = vector.broadcast %cst_233 : f32 to vector<8x128xf32>
    %929 = arith.maximumf %927, %928 : vector<8x128xf32>
    %930 = vector.broadcast %180 : f32 to vector<8x128xf32>
    %931 = arith.mulf %419, %930 : vector<8x128xf32>
    %932 = vector.broadcast %181 : f32 to vector<8x128xf32>
    %933 = arith.mulf %449, %932 : vector<8x128xf32>
    %934 = arith.addf %931, %933 : vector<8x128xf32>
    %935 = vector.broadcast %182 : f32 to vector<8x128xf32>
    %936 = arith.mulf %479, %935 : vector<8x128xf32>
    %937 = arith.addf %934, %936 : vector<8x128xf32>
    %938 = vector.broadcast %183 : f32 to vector<8x128xf32>
    %939 = arith.mulf %509, %938 : vector<8x128xf32>
    %940 = arith.addf %937, %939 : vector<8x128xf32>
    %941 = vector.broadcast %184 : f32 to vector<8x128xf32>
    %942 = arith.mulf %539, %941 : vector<8x128xf32>
    %943 = arith.addf %940, %942 : vector<8x128xf32>
    %944 = vector.broadcast %185 : f32 to vector<8x128xf32>
    %945 = arith.mulf %569, %944 : vector<8x128xf32>
    %946 = arith.addf %943, %945 : vector<8x128xf32>
    %947 = vector.broadcast %186 : f32 to vector<8x128xf32>
    %948 = arith.mulf %599, %947 : vector<8x128xf32>
    %949 = arith.addf %946, %948 : vector<8x128xf32>
    %950 = vector.broadcast %187 : f32 to vector<8x128xf32>
    %951 = arith.mulf %629, %950 : vector<8x128xf32>
    %952 = arith.addf %949, %951 : vector<8x128xf32>
    %953 = vector.broadcast %188 : f32 to vector<8x128xf32>
    %954 = arith.mulf %659, %953 : vector<8x128xf32>
    %955 = arith.addf %952, %954 : vector<8x128xf32>
    %956 = vector.broadcast %189 : f32 to vector<8x128xf32>
    %957 = arith.mulf %689, %956 : vector<8x128xf32>
    %958 = arith.addf %955, %957 : vector<8x128xf32>
    %959 = vector.broadcast %190 : f32 to vector<8x128xf32>
    %960 = arith.mulf %719, %959 : vector<8x128xf32>
    %961 = arith.addf %958, %960 : vector<8x128xf32>
    %962 = vector.broadcast %191 : f32 to vector<8x128xf32>
    %963 = arith.mulf %749, %962 : vector<8x128xf32>
    %964 = arith.addf %961, %963 : vector<8x128xf32>
    %965 = vector.broadcast %192 : f32 to vector<8x128xf32>
    %966 = arith.mulf %779, %965 : vector<8x128xf32>
    %967 = arith.addf %964, %966 : vector<8x128xf32>
    %968 = vector.broadcast %193 : f32 to vector<8x128xf32>
    %969 = arith.mulf %809, %968 : vector<8x128xf32>
    %970 = arith.addf %967, %969 : vector<8x128xf32>
    %971 = vector.broadcast %194 : f32 to vector<8x128xf32>
    %972 = arith.mulf %839, %971 : vector<8x128xf32>
    %973 = arith.addf %970, %972 : vector<8x128xf32>
    %974 = vector.broadcast %195 : f32 to vector<8x128xf32>
    %975 = arith.mulf %869, %974 : vector<8x128xf32>
    %976 = arith.addf %973, %975 : vector<8x128xf32>
    %977 = vector.broadcast %196 : f32 to vector<8x128xf32>
    %978 = arith.mulf %899, %977 : vector<8x128xf32>
    %979 = arith.addf %976, %978 : vector<8x128xf32>
    %980 = vector.broadcast %197 : f32 to vector<8x128xf32>
    %981 = arith.mulf %929, %980 : vector<8x128xf32>
    %982 = arith.addf %979, %981 : vector<8x128xf32>
    %983 = vector.broadcast %342 : f32 to vector<8x128xf32>
    %984 = arith.addf %982, %983 : vector<8x128xf32>
    %cst_234 = arith.constant 0.000000e+00 : f32
    %985 = vector.broadcast %cst_234 : f32 to vector<8x128xf32>
    %986 = arith.maximumf %984, %985 : vector<8x128xf32>
    %987 = vector.broadcast %198 : f32 to vector<8x128xf32>
    %988 = arith.mulf %419, %987 : vector<8x128xf32>
    %989 = vector.broadcast %199 : f32 to vector<8x128xf32>
    %990 = arith.mulf %449, %989 : vector<8x128xf32>
    %991 = arith.addf %988, %990 : vector<8x128xf32>
    %992 = vector.broadcast %200 : f32 to vector<8x128xf32>
    %993 = arith.mulf %479, %992 : vector<8x128xf32>
    %994 = arith.addf %991, %993 : vector<8x128xf32>
    %995 = vector.broadcast %201 : f32 to vector<8x128xf32>
    %996 = arith.mulf %509, %995 : vector<8x128xf32>
    %997 = arith.addf %994, %996 : vector<8x128xf32>
    %998 = vector.broadcast %202 : f32 to vector<8x128xf32>
    %999 = arith.mulf %539, %998 : vector<8x128xf32>
    %1000 = arith.addf %997, %999 : vector<8x128xf32>
    %1001 = vector.broadcast %203 : f32 to vector<8x128xf32>
    %1002 = arith.mulf %569, %1001 : vector<8x128xf32>
    %1003 = arith.addf %1000, %1002 : vector<8x128xf32>
    %1004 = vector.broadcast %204 : f32 to vector<8x128xf32>
    %1005 = arith.mulf %599, %1004 : vector<8x128xf32>
    %1006 = arith.addf %1003, %1005 : vector<8x128xf32>
    %1007 = vector.broadcast %205 : f32 to vector<8x128xf32>
    %1008 = arith.mulf %629, %1007 : vector<8x128xf32>
    %1009 = arith.addf %1006, %1008 : vector<8x128xf32>
    %1010 = vector.broadcast %206 : f32 to vector<8x128xf32>
    %1011 = arith.mulf %659, %1010 : vector<8x128xf32>
    %1012 = arith.addf %1009, %1011 : vector<8x128xf32>
    %1013 = vector.broadcast %207 : f32 to vector<8x128xf32>
    %1014 = arith.mulf %689, %1013 : vector<8x128xf32>
    %1015 = arith.addf %1012, %1014 : vector<8x128xf32>
    %1016 = vector.broadcast %208 : f32 to vector<8x128xf32>
    %1017 = arith.mulf %719, %1016 : vector<8x128xf32>
    %1018 = arith.addf %1015, %1017 : vector<8x128xf32>
    %1019 = vector.broadcast %209 : f32 to vector<8x128xf32>
    %1020 = arith.mulf %749, %1019 : vector<8x128xf32>
    %1021 = arith.addf %1018, %1020 : vector<8x128xf32>
    %1022 = vector.broadcast %210 : f32 to vector<8x128xf32>
    %1023 = arith.mulf %779, %1022 : vector<8x128xf32>
    %1024 = arith.addf %1021, %1023 : vector<8x128xf32>
    %1025 = vector.broadcast %211 : f32 to vector<8x128xf32>
    %1026 = arith.mulf %809, %1025 : vector<8x128xf32>
    %1027 = arith.addf %1024, %1026 : vector<8x128xf32>
    %1028 = vector.broadcast %212 : f32 to vector<8x128xf32>
    %1029 = arith.mulf %839, %1028 : vector<8x128xf32>
    %1030 = arith.addf %1027, %1029 : vector<8x128xf32>
    %1031 = vector.broadcast %213 : f32 to vector<8x128xf32>
    %1032 = arith.mulf %869, %1031 : vector<8x128xf32>
    %1033 = arith.addf %1030, %1032 : vector<8x128xf32>
    %1034 = vector.broadcast %214 : f32 to vector<8x128xf32>
    %1035 = arith.mulf %899, %1034 : vector<8x128xf32>
    %1036 = arith.addf %1033, %1035 : vector<8x128xf32>
    %1037 = vector.broadcast %215 : f32 to vector<8x128xf32>
    %1038 = arith.mulf %929, %1037 : vector<8x128xf32>
    %1039 = arith.addf %1036, %1038 : vector<8x128xf32>
    %1040 = vector.broadcast %343 : f32 to vector<8x128xf32>
    %1041 = arith.addf %1039, %1040 : vector<8x128xf32>
    %cst_235 = arith.constant 0.000000e+00 : f32
    %1042 = vector.broadcast %cst_235 : f32 to vector<8x128xf32>
    %1043 = arith.maximumf %1041, %1042 : vector<8x128xf32>
    %1044 = vector.broadcast %216 : f32 to vector<8x128xf32>
    %1045 = arith.mulf %419, %1044 : vector<8x128xf32>
    %1046 = vector.broadcast %217 : f32 to vector<8x128xf32>
    %1047 = arith.mulf %449, %1046 : vector<8x128xf32>
    %1048 = arith.addf %1045, %1047 : vector<8x128xf32>
    %1049 = vector.broadcast %218 : f32 to vector<8x128xf32>
    %1050 = arith.mulf %479, %1049 : vector<8x128xf32>
    %1051 = arith.addf %1048, %1050 : vector<8x128xf32>
    %1052 = vector.broadcast %219 : f32 to vector<8x128xf32>
    %1053 = arith.mulf %509, %1052 : vector<8x128xf32>
    %1054 = arith.addf %1051, %1053 : vector<8x128xf32>
    %1055 = vector.broadcast %220 : f32 to vector<8x128xf32>
    %1056 = arith.mulf %539, %1055 : vector<8x128xf32>
    %1057 = arith.addf %1054, %1056 : vector<8x128xf32>
    %1058 = vector.broadcast %221 : f32 to vector<8x128xf32>
    %1059 = arith.mulf %569, %1058 : vector<8x128xf32>
    %1060 = arith.addf %1057, %1059 : vector<8x128xf32>
    %1061 = vector.broadcast %222 : f32 to vector<8x128xf32>
    %1062 = arith.mulf %599, %1061 : vector<8x128xf32>
    %1063 = arith.addf %1060, %1062 : vector<8x128xf32>
    %1064 = vector.broadcast %223 : f32 to vector<8x128xf32>
    %1065 = arith.mulf %629, %1064 : vector<8x128xf32>
    %1066 = arith.addf %1063, %1065 : vector<8x128xf32>
    %1067 = vector.broadcast %224 : f32 to vector<8x128xf32>
    %1068 = arith.mulf %659, %1067 : vector<8x128xf32>
    %1069 = arith.addf %1066, %1068 : vector<8x128xf32>
    %1070 = vector.broadcast %225 : f32 to vector<8x128xf32>
    %1071 = arith.mulf %689, %1070 : vector<8x128xf32>
    %1072 = arith.addf %1069, %1071 : vector<8x128xf32>
    %1073 = vector.broadcast %226 : f32 to vector<8x128xf32>
    %1074 = arith.mulf %719, %1073 : vector<8x128xf32>
    %1075 = arith.addf %1072, %1074 : vector<8x128xf32>
    %1076 = vector.broadcast %227 : f32 to vector<8x128xf32>
    %1077 = arith.mulf %749, %1076 : vector<8x128xf32>
    %1078 = arith.addf %1075, %1077 : vector<8x128xf32>
    %1079 = vector.broadcast %228 : f32 to vector<8x128xf32>
    %1080 = arith.mulf %779, %1079 : vector<8x128xf32>
    %1081 = arith.addf %1078, %1080 : vector<8x128xf32>
    %1082 = vector.broadcast %229 : f32 to vector<8x128xf32>
    %1083 = arith.mulf %809, %1082 : vector<8x128xf32>
    %1084 = arith.addf %1081, %1083 : vector<8x128xf32>
    %1085 = vector.broadcast %230 : f32 to vector<8x128xf32>
    %1086 = arith.mulf %839, %1085 : vector<8x128xf32>
    %1087 = arith.addf %1084, %1086 : vector<8x128xf32>
    %1088 = vector.broadcast %231 : f32 to vector<8x128xf32>
    %1089 = arith.mulf %869, %1088 : vector<8x128xf32>
    %1090 = arith.addf %1087, %1089 : vector<8x128xf32>
    %1091 = vector.broadcast %232 : f32 to vector<8x128xf32>
    %1092 = arith.mulf %899, %1091 : vector<8x128xf32>
    %1093 = arith.addf %1090, %1092 : vector<8x128xf32>
    %1094 = vector.broadcast %233 : f32 to vector<8x128xf32>
    %1095 = arith.mulf %929, %1094 : vector<8x128xf32>
    %1096 = arith.addf %1093, %1095 : vector<8x128xf32>
    %1097 = vector.broadcast %344 : f32 to vector<8x128xf32>
    %1098 = arith.addf %1096, %1097 : vector<8x128xf32>
    %cst_236 = arith.constant 0.000000e+00 : f32
    %1099 = vector.broadcast %cst_236 : f32 to vector<8x128xf32>
    %1100 = arith.maximumf %1098, %1099 : vector<8x128xf32>
    %1101 = vector.broadcast %234 : f32 to vector<8x128xf32>
    %1102 = arith.mulf %419, %1101 : vector<8x128xf32>
    %1103 = vector.broadcast %235 : f32 to vector<8x128xf32>
    %1104 = arith.mulf %449, %1103 : vector<8x128xf32>
    %1105 = arith.addf %1102, %1104 : vector<8x128xf32>
    %1106 = vector.broadcast %236 : f32 to vector<8x128xf32>
    %1107 = arith.mulf %479, %1106 : vector<8x128xf32>
    %1108 = arith.addf %1105, %1107 : vector<8x128xf32>
    %1109 = vector.broadcast %237 : f32 to vector<8x128xf32>
    %1110 = arith.mulf %509, %1109 : vector<8x128xf32>
    %1111 = arith.addf %1108, %1110 : vector<8x128xf32>
    %1112 = vector.broadcast %238 : f32 to vector<8x128xf32>
    %1113 = arith.mulf %539, %1112 : vector<8x128xf32>
    %1114 = arith.addf %1111, %1113 : vector<8x128xf32>
    %1115 = vector.broadcast %239 : f32 to vector<8x128xf32>
    %1116 = arith.mulf %569, %1115 : vector<8x128xf32>
    %1117 = arith.addf %1114, %1116 : vector<8x128xf32>
    %1118 = vector.broadcast %240 : f32 to vector<8x128xf32>
    %1119 = arith.mulf %599, %1118 : vector<8x128xf32>
    %1120 = arith.addf %1117, %1119 : vector<8x128xf32>
    %1121 = vector.broadcast %241 : f32 to vector<8x128xf32>
    %1122 = arith.mulf %629, %1121 : vector<8x128xf32>
    %1123 = arith.addf %1120, %1122 : vector<8x128xf32>
    %1124 = vector.broadcast %242 : f32 to vector<8x128xf32>
    %1125 = arith.mulf %659, %1124 : vector<8x128xf32>
    %1126 = arith.addf %1123, %1125 : vector<8x128xf32>
    %1127 = vector.broadcast %243 : f32 to vector<8x128xf32>
    %1128 = arith.mulf %689, %1127 : vector<8x128xf32>
    %1129 = arith.addf %1126, %1128 : vector<8x128xf32>
    %1130 = vector.broadcast %244 : f32 to vector<8x128xf32>
    %1131 = arith.mulf %719, %1130 : vector<8x128xf32>
    %1132 = arith.addf %1129, %1131 : vector<8x128xf32>
    %1133 = vector.broadcast %245 : f32 to vector<8x128xf32>
    %1134 = arith.mulf %749, %1133 : vector<8x128xf32>
    %1135 = arith.addf %1132, %1134 : vector<8x128xf32>
    %1136 = vector.broadcast %246 : f32 to vector<8x128xf32>
    %1137 = arith.mulf %779, %1136 : vector<8x128xf32>
    %1138 = arith.addf %1135, %1137 : vector<8x128xf32>
    %1139 = vector.broadcast %247 : f32 to vector<8x128xf32>
    %1140 = arith.mulf %809, %1139 : vector<8x128xf32>
    %1141 = arith.addf %1138, %1140 : vector<8x128xf32>
    %1142 = vector.broadcast %248 : f32 to vector<8x128xf32>
    %1143 = arith.mulf %839, %1142 : vector<8x128xf32>
    %1144 = arith.addf %1141, %1143 : vector<8x128xf32>
    %1145 = vector.broadcast %249 : f32 to vector<8x128xf32>
    %1146 = arith.mulf %869, %1145 : vector<8x128xf32>
    %1147 = arith.addf %1144, %1146 : vector<8x128xf32>
    %1148 = vector.broadcast %250 : f32 to vector<8x128xf32>
    %1149 = arith.mulf %899, %1148 : vector<8x128xf32>
    %1150 = arith.addf %1147, %1149 : vector<8x128xf32>
    %1151 = vector.broadcast %251 : f32 to vector<8x128xf32>
    %1152 = arith.mulf %929, %1151 : vector<8x128xf32>
    %1153 = arith.addf %1150, %1152 : vector<8x128xf32>
    %1154 = vector.broadcast %345 : f32 to vector<8x128xf32>
    %1155 = arith.addf %1153, %1154 : vector<8x128xf32>
    %cst_237 = arith.constant 0.000000e+00 : f32
    %1156 = vector.broadcast %cst_237 : f32 to vector<8x128xf32>
    %1157 = arith.maximumf %1155, %1156 : vector<8x128xf32>
    %1158 = vector.broadcast %252 : f32 to vector<8x128xf32>
    %1159 = arith.mulf %419, %1158 : vector<8x128xf32>
    %1160 = vector.broadcast %253 : f32 to vector<8x128xf32>
    %1161 = arith.mulf %449, %1160 : vector<8x128xf32>
    %1162 = arith.addf %1159, %1161 : vector<8x128xf32>
    %1163 = vector.broadcast %254 : f32 to vector<8x128xf32>
    %1164 = arith.mulf %479, %1163 : vector<8x128xf32>
    %1165 = arith.addf %1162, %1164 : vector<8x128xf32>
    %1166 = vector.broadcast %255 : f32 to vector<8x128xf32>
    %1167 = arith.mulf %509, %1166 : vector<8x128xf32>
    %1168 = arith.addf %1165, %1167 : vector<8x128xf32>
    %1169 = vector.broadcast %256 : f32 to vector<8x128xf32>
    %1170 = arith.mulf %539, %1169 : vector<8x128xf32>
    %1171 = arith.addf %1168, %1170 : vector<8x128xf32>
    %1172 = vector.broadcast %257 : f32 to vector<8x128xf32>
    %1173 = arith.mulf %569, %1172 : vector<8x128xf32>
    %1174 = arith.addf %1171, %1173 : vector<8x128xf32>
    %1175 = vector.broadcast %258 : f32 to vector<8x128xf32>
    %1176 = arith.mulf %599, %1175 : vector<8x128xf32>
    %1177 = arith.addf %1174, %1176 : vector<8x128xf32>
    %1178 = vector.broadcast %259 : f32 to vector<8x128xf32>
    %1179 = arith.mulf %629, %1178 : vector<8x128xf32>
    %1180 = arith.addf %1177, %1179 : vector<8x128xf32>
    %1181 = vector.broadcast %260 : f32 to vector<8x128xf32>
    %1182 = arith.mulf %659, %1181 : vector<8x128xf32>
    %1183 = arith.addf %1180, %1182 : vector<8x128xf32>
    %1184 = vector.broadcast %261 : f32 to vector<8x128xf32>
    %1185 = arith.mulf %689, %1184 : vector<8x128xf32>
    %1186 = arith.addf %1183, %1185 : vector<8x128xf32>
    %1187 = vector.broadcast %262 : f32 to vector<8x128xf32>
    %1188 = arith.mulf %719, %1187 : vector<8x128xf32>
    %1189 = arith.addf %1186, %1188 : vector<8x128xf32>
    %1190 = vector.broadcast %263 : f32 to vector<8x128xf32>
    %1191 = arith.mulf %749, %1190 : vector<8x128xf32>
    %1192 = arith.addf %1189, %1191 : vector<8x128xf32>
    %1193 = vector.broadcast %264 : f32 to vector<8x128xf32>
    %1194 = arith.mulf %779, %1193 : vector<8x128xf32>
    %1195 = arith.addf %1192, %1194 : vector<8x128xf32>
    %1196 = vector.broadcast %265 : f32 to vector<8x128xf32>
    %1197 = arith.mulf %809, %1196 : vector<8x128xf32>
    %1198 = arith.addf %1195, %1197 : vector<8x128xf32>
    %1199 = vector.broadcast %266 : f32 to vector<8x128xf32>
    %1200 = arith.mulf %839, %1199 : vector<8x128xf32>
    %1201 = arith.addf %1198, %1200 : vector<8x128xf32>
    %1202 = vector.broadcast %267 : f32 to vector<8x128xf32>
    %1203 = arith.mulf %869, %1202 : vector<8x128xf32>
    %1204 = arith.addf %1201, %1203 : vector<8x128xf32>
    %1205 = vector.broadcast %268 : f32 to vector<8x128xf32>
    %1206 = arith.mulf %899, %1205 : vector<8x128xf32>
    %1207 = arith.addf %1204, %1206 : vector<8x128xf32>
    %1208 = vector.broadcast %269 : f32 to vector<8x128xf32>
    %1209 = arith.mulf %929, %1208 : vector<8x128xf32>
    %1210 = arith.addf %1207, %1209 : vector<8x128xf32>
    %1211 = vector.broadcast %346 : f32 to vector<8x128xf32>
    %1212 = arith.addf %1210, %1211 : vector<8x128xf32>
    %cst_238 = arith.constant 0.000000e+00 : f32
    %1213 = vector.broadcast %cst_238 : f32 to vector<8x128xf32>
    %1214 = arith.maximumf %1212, %1213 : vector<8x128xf32>
    %1215 = vector.broadcast %270 : f32 to vector<8x128xf32>
    %1216 = arith.mulf %419, %1215 : vector<8x128xf32>
    %1217 = vector.broadcast %271 : f32 to vector<8x128xf32>
    %1218 = arith.mulf %449, %1217 : vector<8x128xf32>
    %1219 = arith.addf %1216, %1218 : vector<8x128xf32>
    %1220 = vector.broadcast %272 : f32 to vector<8x128xf32>
    %1221 = arith.mulf %479, %1220 : vector<8x128xf32>
    %1222 = arith.addf %1219, %1221 : vector<8x128xf32>
    %1223 = vector.broadcast %273 : f32 to vector<8x128xf32>
    %1224 = arith.mulf %509, %1223 : vector<8x128xf32>
    %1225 = arith.addf %1222, %1224 : vector<8x128xf32>
    %1226 = vector.broadcast %274 : f32 to vector<8x128xf32>
    %1227 = arith.mulf %539, %1226 : vector<8x128xf32>
    %1228 = arith.addf %1225, %1227 : vector<8x128xf32>
    %1229 = vector.broadcast %275 : f32 to vector<8x128xf32>
    %1230 = arith.mulf %569, %1229 : vector<8x128xf32>
    %1231 = arith.addf %1228, %1230 : vector<8x128xf32>
    %1232 = vector.broadcast %276 : f32 to vector<8x128xf32>
    %1233 = arith.mulf %599, %1232 : vector<8x128xf32>
    %1234 = arith.addf %1231, %1233 : vector<8x128xf32>
    %1235 = vector.broadcast %277 : f32 to vector<8x128xf32>
    %1236 = arith.mulf %629, %1235 : vector<8x128xf32>
    %1237 = arith.addf %1234, %1236 : vector<8x128xf32>
    %1238 = vector.broadcast %278 : f32 to vector<8x128xf32>
    %1239 = arith.mulf %659, %1238 : vector<8x128xf32>
    %1240 = arith.addf %1237, %1239 : vector<8x128xf32>
    %1241 = vector.broadcast %279 : f32 to vector<8x128xf32>
    %1242 = arith.mulf %689, %1241 : vector<8x128xf32>
    %1243 = arith.addf %1240, %1242 : vector<8x128xf32>
    %1244 = vector.broadcast %280 : f32 to vector<8x128xf32>
    %1245 = arith.mulf %719, %1244 : vector<8x128xf32>
    %1246 = arith.addf %1243, %1245 : vector<8x128xf32>
    %1247 = vector.broadcast %281 : f32 to vector<8x128xf32>
    %1248 = arith.mulf %749, %1247 : vector<8x128xf32>
    %1249 = arith.addf %1246, %1248 : vector<8x128xf32>
    %1250 = vector.broadcast %282 : f32 to vector<8x128xf32>
    %1251 = arith.mulf %779, %1250 : vector<8x128xf32>
    %1252 = arith.addf %1249, %1251 : vector<8x128xf32>
    %1253 = vector.broadcast %283 : f32 to vector<8x128xf32>
    %1254 = arith.mulf %809, %1253 : vector<8x128xf32>
    %1255 = arith.addf %1252, %1254 : vector<8x128xf32>
    %1256 = vector.broadcast %284 : f32 to vector<8x128xf32>
    %1257 = arith.mulf %839, %1256 : vector<8x128xf32>
    %1258 = arith.addf %1255, %1257 : vector<8x128xf32>
    %1259 = vector.broadcast %285 : f32 to vector<8x128xf32>
    %1260 = arith.mulf %869, %1259 : vector<8x128xf32>
    %1261 = arith.addf %1258, %1260 : vector<8x128xf32>
    %1262 = vector.broadcast %286 : f32 to vector<8x128xf32>
    %1263 = arith.mulf %899, %1262 : vector<8x128xf32>
    %1264 = arith.addf %1261, %1263 : vector<8x128xf32>
    %1265 = vector.broadcast %287 : f32 to vector<8x128xf32>
    %1266 = arith.mulf %929, %1265 : vector<8x128xf32>
    %1267 = arith.addf %1264, %1266 : vector<8x128xf32>
    %1268 = vector.broadcast %347 : f32 to vector<8x128xf32>
    %1269 = arith.addf %1267, %1268 : vector<8x128xf32>
    %cst_239 = arith.constant 0.000000e+00 : f32
    %1270 = vector.broadcast %cst_239 : f32 to vector<8x128xf32>
    %1271 = arith.maximumf %1269, %1270 : vector<8x128xf32>
    %1272 = vector.broadcast %288 : f32 to vector<8x128xf32>
    %1273 = arith.mulf %419, %1272 : vector<8x128xf32>
    %1274 = vector.broadcast %289 : f32 to vector<8x128xf32>
    %1275 = arith.mulf %449, %1274 : vector<8x128xf32>
    %1276 = arith.addf %1273, %1275 : vector<8x128xf32>
    %1277 = vector.broadcast %290 : f32 to vector<8x128xf32>
    %1278 = arith.mulf %479, %1277 : vector<8x128xf32>
    %1279 = arith.addf %1276, %1278 : vector<8x128xf32>
    %1280 = vector.broadcast %291 : f32 to vector<8x128xf32>
    %1281 = arith.mulf %509, %1280 : vector<8x128xf32>
    %1282 = arith.addf %1279, %1281 : vector<8x128xf32>
    %1283 = vector.broadcast %292 : f32 to vector<8x128xf32>
    %1284 = arith.mulf %539, %1283 : vector<8x128xf32>
    %1285 = arith.addf %1282, %1284 : vector<8x128xf32>
    %1286 = vector.broadcast %293 : f32 to vector<8x128xf32>
    %1287 = arith.mulf %569, %1286 : vector<8x128xf32>
    %1288 = arith.addf %1285, %1287 : vector<8x128xf32>
    %1289 = vector.broadcast %294 : f32 to vector<8x128xf32>
    %1290 = arith.mulf %599, %1289 : vector<8x128xf32>
    %1291 = arith.addf %1288, %1290 : vector<8x128xf32>
    %1292 = vector.broadcast %295 : f32 to vector<8x128xf32>
    %1293 = arith.mulf %629, %1292 : vector<8x128xf32>
    %1294 = arith.addf %1291, %1293 : vector<8x128xf32>
    %1295 = vector.broadcast %296 : f32 to vector<8x128xf32>
    %1296 = arith.mulf %659, %1295 : vector<8x128xf32>
    %1297 = arith.addf %1294, %1296 : vector<8x128xf32>
    %1298 = vector.broadcast %297 : f32 to vector<8x128xf32>
    %1299 = arith.mulf %689, %1298 : vector<8x128xf32>
    %1300 = arith.addf %1297, %1299 : vector<8x128xf32>
    %1301 = vector.broadcast %298 : f32 to vector<8x128xf32>
    %1302 = arith.mulf %719, %1301 : vector<8x128xf32>
    %1303 = arith.addf %1300, %1302 : vector<8x128xf32>
    %1304 = vector.broadcast %299 : f32 to vector<8x128xf32>
    %1305 = arith.mulf %749, %1304 : vector<8x128xf32>
    %1306 = arith.addf %1303, %1305 : vector<8x128xf32>
    %1307 = vector.broadcast %300 : f32 to vector<8x128xf32>
    %1308 = arith.mulf %779, %1307 : vector<8x128xf32>
    %1309 = arith.addf %1306, %1308 : vector<8x128xf32>
    %1310 = vector.broadcast %301 : f32 to vector<8x128xf32>
    %1311 = arith.mulf %809, %1310 : vector<8x128xf32>
    %1312 = arith.addf %1309, %1311 : vector<8x128xf32>
    %1313 = vector.broadcast %302 : f32 to vector<8x128xf32>
    %1314 = arith.mulf %839, %1313 : vector<8x128xf32>
    %1315 = arith.addf %1312, %1314 : vector<8x128xf32>
    %1316 = vector.broadcast %303 : f32 to vector<8x128xf32>
    %1317 = arith.mulf %869, %1316 : vector<8x128xf32>
    %1318 = arith.addf %1315, %1317 : vector<8x128xf32>
    %1319 = vector.broadcast %304 : f32 to vector<8x128xf32>
    %1320 = arith.mulf %899, %1319 : vector<8x128xf32>
    %1321 = arith.addf %1318, %1320 : vector<8x128xf32>
    %1322 = vector.broadcast %305 : f32 to vector<8x128xf32>
    %1323 = arith.mulf %929, %1322 : vector<8x128xf32>
    %1324 = arith.addf %1321, %1323 : vector<8x128xf32>
    %1325 = vector.broadcast %348 : f32 to vector<8x128xf32>
    %1326 = arith.addf %1324, %1325 : vector<8x128xf32>
    %cst_240 = arith.constant 0.000000e+00 : f32
    %1327 = vector.broadcast %cst_240 : f32 to vector<8x128xf32>
    %1328 = arith.maximumf %1326, %1327 : vector<8x128xf32>
    %1329 = vector.broadcast %306 : f32 to vector<8x128xf32>
    %1330 = arith.mulf %419, %1329 : vector<8x128xf32>
    %1331 = vector.broadcast %307 : f32 to vector<8x128xf32>
    %1332 = arith.mulf %449, %1331 : vector<8x128xf32>
    %1333 = arith.addf %1330, %1332 : vector<8x128xf32>
    %1334 = vector.broadcast %308 : f32 to vector<8x128xf32>
    %1335 = arith.mulf %479, %1334 : vector<8x128xf32>
    %1336 = arith.addf %1333, %1335 : vector<8x128xf32>
    %1337 = vector.broadcast %309 : f32 to vector<8x128xf32>
    %1338 = arith.mulf %509, %1337 : vector<8x128xf32>
    %1339 = arith.addf %1336, %1338 : vector<8x128xf32>
    %1340 = vector.broadcast %310 : f32 to vector<8x128xf32>
    %1341 = arith.mulf %539, %1340 : vector<8x128xf32>
    %1342 = arith.addf %1339, %1341 : vector<8x128xf32>
    %1343 = vector.broadcast %311 : f32 to vector<8x128xf32>
    %1344 = arith.mulf %569, %1343 : vector<8x128xf32>
    %1345 = arith.addf %1342, %1344 : vector<8x128xf32>
    %1346 = vector.broadcast %312 : f32 to vector<8x128xf32>
    %1347 = arith.mulf %599, %1346 : vector<8x128xf32>
    %1348 = arith.addf %1345, %1347 : vector<8x128xf32>
    %1349 = vector.broadcast %313 : f32 to vector<8x128xf32>
    %1350 = arith.mulf %629, %1349 : vector<8x128xf32>
    %1351 = arith.addf %1348, %1350 : vector<8x128xf32>
    %1352 = vector.broadcast %314 : f32 to vector<8x128xf32>
    %1353 = arith.mulf %659, %1352 : vector<8x128xf32>
    %1354 = arith.addf %1351, %1353 : vector<8x128xf32>
    %1355 = vector.broadcast %315 : f32 to vector<8x128xf32>
    %1356 = arith.mulf %689, %1355 : vector<8x128xf32>
    %1357 = arith.addf %1354, %1356 : vector<8x128xf32>
    %1358 = vector.broadcast %316 : f32 to vector<8x128xf32>
    %1359 = arith.mulf %719, %1358 : vector<8x128xf32>
    %1360 = arith.addf %1357, %1359 : vector<8x128xf32>
    %1361 = vector.broadcast %317 : f32 to vector<8x128xf32>
    %1362 = arith.mulf %749, %1361 : vector<8x128xf32>
    %1363 = arith.addf %1360, %1362 : vector<8x128xf32>
    %1364 = vector.broadcast %318 : f32 to vector<8x128xf32>
    %1365 = arith.mulf %779, %1364 : vector<8x128xf32>
    %1366 = arith.addf %1363, %1365 : vector<8x128xf32>
    %1367 = vector.broadcast %319 : f32 to vector<8x128xf32>
    %1368 = arith.mulf %809, %1367 : vector<8x128xf32>
    %1369 = arith.addf %1366, %1368 : vector<8x128xf32>
    %1370 = vector.broadcast %320 : f32 to vector<8x128xf32>
    %1371 = arith.mulf %839, %1370 : vector<8x128xf32>
    %1372 = arith.addf %1369, %1371 : vector<8x128xf32>
    %1373 = vector.broadcast %321 : f32 to vector<8x128xf32>
    %1374 = arith.mulf %869, %1373 : vector<8x128xf32>
    %1375 = arith.addf %1372, %1374 : vector<8x128xf32>
    %1376 = vector.broadcast %322 : f32 to vector<8x128xf32>
    %1377 = arith.mulf %899, %1376 : vector<8x128xf32>
    %1378 = arith.addf %1375, %1377 : vector<8x128xf32>
    %1379 = vector.broadcast %323 : f32 to vector<8x128xf32>
    %1380 = arith.mulf %929, %1379 : vector<8x128xf32>
    %1381 = arith.addf %1378, %1380 : vector<8x128xf32>
    %1382 = vector.broadcast %349 : f32 to vector<8x128xf32>
    %1383 = arith.addf %1381, %1382 : vector<8x128xf32>
    %cst_241 = arith.constant 0.000000e+00 : f32
    %1384 = vector.broadcast %cst_241 : f32 to vector<8x128xf32>
    %1385 = arith.maximumf %1383, %1384 : vector<8x128xf32>
    %1386 = vector.broadcast %324 : f32 to vector<8x128xf32>
    %1387 = arith.mulf %419, %1386 : vector<8x128xf32>
    %1388 = vector.broadcast %325 : f32 to vector<8x128xf32>
    %1389 = arith.mulf %449, %1388 : vector<8x128xf32>
    %1390 = arith.addf %1387, %1389 : vector<8x128xf32>
    %1391 = vector.broadcast %326 : f32 to vector<8x128xf32>
    %1392 = arith.mulf %479, %1391 : vector<8x128xf32>
    %1393 = arith.addf %1390, %1392 : vector<8x128xf32>
    %1394 = vector.broadcast %327 : f32 to vector<8x128xf32>
    %1395 = arith.mulf %509, %1394 : vector<8x128xf32>
    %1396 = arith.addf %1393, %1395 : vector<8x128xf32>
    %1397 = vector.broadcast %328 : f32 to vector<8x128xf32>
    %1398 = arith.mulf %539, %1397 : vector<8x128xf32>
    %1399 = arith.addf %1396, %1398 : vector<8x128xf32>
    %1400 = vector.broadcast %329 : f32 to vector<8x128xf32>
    %1401 = arith.mulf %569, %1400 : vector<8x128xf32>
    %1402 = arith.addf %1399, %1401 : vector<8x128xf32>
    %1403 = vector.broadcast %330 : f32 to vector<8x128xf32>
    %1404 = arith.mulf %599, %1403 : vector<8x128xf32>
    %1405 = arith.addf %1402, %1404 : vector<8x128xf32>
    %1406 = vector.broadcast %331 : f32 to vector<8x128xf32>
    %1407 = arith.mulf %629, %1406 : vector<8x128xf32>
    %1408 = arith.addf %1405, %1407 : vector<8x128xf32>
    %1409 = vector.broadcast %332 : f32 to vector<8x128xf32>
    %1410 = arith.mulf %659, %1409 : vector<8x128xf32>
    %1411 = arith.addf %1408, %1410 : vector<8x128xf32>
    %1412 = vector.broadcast %333 : f32 to vector<8x128xf32>
    %1413 = arith.mulf %689, %1412 : vector<8x128xf32>
    %1414 = arith.addf %1411, %1413 : vector<8x128xf32>
    %1415 = vector.broadcast %334 : f32 to vector<8x128xf32>
    %1416 = arith.mulf %719, %1415 : vector<8x128xf32>
    %1417 = arith.addf %1414, %1416 : vector<8x128xf32>
    %1418 = vector.broadcast %335 : f32 to vector<8x128xf32>
    %1419 = arith.mulf %749, %1418 : vector<8x128xf32>
    %1420 = arith.addf %1417, %1419 : vector<8x128xf32>
    %1421 = vector.broadcast %336 : f32 to vector<8x128xf32>
    %1422 = arith.mulf %779, %1421 : vector<8x128xf32>
    %1423 = arith.addf %1420, %1422 : vector<8x128xf32>
    %1424 = vector.broadcast %337 : f32 to vector<8x128xf32>
    %1425 = arith.mulf %809, %1424 : vector<8x128xf32>
    %1426 = arith.addf %1423, %1425 : vector<8x128xf32>
    %1427 = vector.broadcast %338 : f32 to vector<8x128xf32>
    %1428 = arith.mulf %839, %1427 : vector<8x128xf32>
    %1429 = arith.addf %1426, %1428 : vector<8x128xf32>
    %1430 = vector.broadcast %339 : f32 to vector<8x128xf32>
    %1431 = arith.mulf %869, %1430 : vector<8x128xf32>
    %1432 = arith.addf %1429, %1431 : vector<8x128xf32>
    %1433 = vector.broadcast %340 : f32 to vector<8x128xf32>
    %1434 = arith.mulf %899, %1433 : vector<8x128xf32>
    %1435 = arith.addf %1432, %1434 : vector<8x128xf32>
    %1436 = vector.broadcast %341 : f32 to vector<8x128xf32>
    %1437 = arith.mulf %929, %1436 : vector<8x128xf32>
    %1438 = arith.addf %1435, %1437 : vector<8x128xf32>
    %1439 = vector.broadcast %350 : f32 to vector<8x128xf32>
    %1440 = arith.addf %1438, %1439 : vector<8x128xf32>
    %cst_242 = arith.constant 0.000000e+00 : f32
    %1441 = vector.broadcast %cst_242 : f32 to vector<8x128xf32>
    %1442 = arith.maximumf %1440, %1441 : vector<8x128xf32>
    %1443 = vector.broadcast %351 : f32 to vector<8x128xf32>
    %1444 = arith.mulf %986, %1443 : vector<8x128xf32>
    %1445 = vector.broadcast %352 : f32 to vector<8x128xf32>
    %1446 = arith.mulf %1043, %1445 : vector<8x128xf32>
    %1447 = arith.addf %1444, %1446 : vector<8x128xf32>
    %1448 = vector.broadcast %353 : f32 to vector<8x128xf32>
    %1449 = arith.mulf %1100, %1448 : vector<8x128xf32>
    %1450 = arith.addf %1447, %1449 : vector<8x128xf32>
    %1451 = vector.broadcast %354 : f32 to vector<8x128xf32>
    %1452 = arith.mulf %1157, %1451 : vector<8x128xf32>
    %1453 = arith.addf %1450, %1452 : vector<8x128xf32>
    %1454 = vector.broadcast %355 : f32 to vector<8x128xf32>
    %1455 = arith.mulf %1214, %1454 : vector<8x128xf32>
    %1456 = arith.addf %1453, %1455 : vector<8x128xf32>
    %1457 = vector.broadcast %356 : f32 to vector<8x128xf32>
    %1458 = arith.mulf %1271, %1457 : vector<8x128xf32>
    %1459 = arith.addf %1456, %1458 : vector<8x128xf32>
    %1460 = vector.broadcast %357 : f32 to vector<8x128xf32>
    %1461 = arith.mulf %1328, %1460 : vector<8x128xf32>
    %1462 = arith.addf %1459, %1461 : vector<8x128xf32>
    %1463 = vector.broadcast %358 : f32 to vector<8x128xf32>
    %1464 = arith.mulf %1385, %1463 : vector<8x128xf32>
    %1465 = arith.addf %1462, %1464 : vector<8x128xf32>
    %1466 = vector.broadcast %359 : f32 to vector<8x128xf32>
    %1467 = arith.mulf %1442, %1466 : vector<8x128xf32>
    %1468 = arith.addf %1465, %1467 : vector<8x128xf32>
    %1469 = vector.broadcast %360 : f32 to vector<8x128xf32>
    %1470 = arith.addf %1468, %1469 : vector<8x128xf32>
    %1471 = arith.negf %1470 : vector<8x128xf32>
    %1472 = math.exp %1471 : vector<8x128xf32>
    %cst_243 = arith.constant 1.000000e+00 : f32
    %1473 = vector.broadcast %cst_243 : f32 to vector<8x128xf32>
    %1474 = arith.addf %1473, %1472 : vector<8x128xf32>
    %1475 = arith.divf %1473, %1474 : vector<8x128xf32>
    %1476 = arith.index_cast %362 : i32 to index
    %c0_244 = arith.constant 0 : index
    %1477 = vector.load %arg8[%1476, %c0_244] : memref<8x128xf32, #tpu.memory_space<vmem>>, vector<8x128xf32>
    tpu.vector_store %arg8[%1476, %c0_244], %1475 {strides = array<i32>} : memref<8x128xf32, #tpu.memory_space<vmem>>, vector<8x128xf32>,
    %c1_i32 = arith.constant 1 : i32
    return
  }
  func.func @transform_0(%arg0: i32) -> (i32, i32, i32) {
    %c0_i32 = arith.constant 0 : i32
    %c0_i32_0 = arith.constant 0 : i32
    %c0_i32_1 = arith.constant 0 : i32
    return %c0_i32, %arg0, %c0_i32_0 : i32, i32, i32
  }
  func.func @transform_1(%arg0: i32) -> i32 {
    %c0_i32 = arith.constant 0 : i32
    %c0_i32_0 = arith.constant 0 : i32
    return %c0_i32 : i32
  }
  func.func @transform_2(%arg0: i32) -> i32 {
    %c0_i32 = arith.constant 0 : i32
    %c0_i32_0 = arith.constant 0 : i32
    return %c0_i32 : i32
  }
  func.func @transform_3(%arg0: i32) -> i32 {
    %c0_i32 = arith.constant 0 : i32
    %c0_i32_0 = arith.constant 0 : i32
    return %c0_i32 : i32
  }
  func.func @transform_4(%arg0: i32) -> i32 {
    %c0_i32 = arith.constant 0 : i32
    %c0_i32_0 = arith.constant 0 : i32
    return %c0_i32 : i32
  }
  func.func @transform_5(%arg0: i32) -> i32 {
    %c0_i32 = arith.constant 0 : i32
    %c0_i32_0 = arith.constant 0 : i32
    return %c0_i32 : i32
  }
  func.func @transform_6(%arg0: i32) -> i32 {
    %c0_i32 = arith.constant 0 : i32
    %c0_i32_0 = arith.constant 0 : i32
    return %c0_i32 : i32
  }
  func.func @transform_7(%arg0: i32) -> (i32, i32) {
    %c0_i32 = arith.constant 0 : i32
    %c0_i32_0 = arith.constant 0 : i32
    return %arg0, %c0_i32 : i32, i32
  }
}

</mosaic_0001>

<llo_original>
// kernel: neural_net_forward.1
$region0: #{neural_net_forward.1}
  #allocation0 [shape = 'u32[]', space=smem, size = 0x4, offset = 0x4, fixed_abs, tag = 'smem constant byte address 0x4 - core index']
  #allocation1 [shape = 'u32[144,128]{1,0:T(1,128)}', space=vmem, size = 0x12000, scoped, tag = 'internal scratch']
  #allocation2 [shape = 'f32[1]{0:T(128)S(6)}', space=smem, size = 0x200, scoped, tag = 'scoped memory for neural_net_forward.1']
  %s0 = inlined_call_operand.vmem [shape: f32[9,8,128], index: 0, kind: input, shape index: {}]
  %s1 = inlined_call_operand.vmem [shape: f32[162], index: 1, kind: input, shape index: {}]
  %s2 = inlined_call_operand.vmem [shape: f32[18], index: 2, kind: input, shape index: {}]
  %s3 = inlined_call_operand.vmem [shape: f32[162], index: 3, kind: input, shape index: {}]
  %s4 = inlined_call_operand.vmem [shape: f32[9], index: 4, kind: input, shape index: {}]
  %s5 = inlined_call_operand.vmem [shape: f32[9], index: 5, kind: input, shape index: {}]
  %s6 = inlined_call_operand.<no memory space> [shape: f32[1], index: 6, kind: input, shape index: {}]
  %s7 = inlined_call_operand.vmem [shape: f32[8,128], index: 7, kind: output, shape index: {}]
  %s8 = sld [smem:[#allocation0]]
  $region58: #{neural_net_forward.1} parent=0
    _
  %s10 = ssub.s32 1, %s8
  %s11 = scalar_select 0, %s10, %s8
  %12 = sst [smem:[#allocation2]] %s6
  $region1: #{neural_net_forward.1} parent=0
    #allocation3 [shape = 'u8[1024]{0}', space=smem, size = 0x400, scoped, tag = 'input window, operand 1, single buffered']
    #allocation4 [shape = 's32[1]{0}', space=sflag, size = 0x4, scoped, tag = 'scoped memory for neural_net_forward.1']
    #allocation5 [shape = 'u8[512]{0}', space=smem, size = 0x200, scoped, tag = 'input window, operand 2, single buffered']
    #allocation6 [shape = 's32[1]{0}', space=sflag, size = 0x4, scoped, tag = 'scoped memory for neural_net_forward.1']
    #allocation7 [shape = 'u8[1024]{0}', space=smem, size = 0x400, scoped, tag = 'input window, operand 3, single buffered']
    #allocation8 [shape = 'u8[512]{0}', space=smem, size = 0x200, scoped, tag = 'input window, operand 4, single buffered']
    #allocation9 [shape = 's32[1]{0}', space=sflag, size = 0x4, scoped, tag = 'scoped memory for neural_net_forward.1']
    #allocation10 [shape = 'u8[512]{0}', space=smem, size = 0x200, scoped, tag = 'input window, operand 5, single buffered']
    %13 = vsyncpa [#allocation4], 0
    %14 = vsyncpa [#allocation6], 0
    %15 = vsyncpa [#allocation9], 0
    // Predicated region
    $region2: #{neural_net_forward.1} parent=1 // pred_check
      _
    $region3: #{neural_net_forward.1} parent=1 // pred_check_branch
      %17 = sbr.rel (0) target = $region5
    $region4: #{neural_net_forward.1} parent=1 // pred_region
      _
    $region5: #{neural_net_forward.1} parent=1 // pred_fallthru
      _
    // Predicated region
    $region6: #{neural_net_forward.1} parent=1 // pred_check
      _
    $region7: #{neural_net_forward.1} parent=1 // pred_check_branch
      %19 = sbr.rel (0) target = $region9
    $region8: #{neural_net_forward.1} parent=1 // pred_region
      %s21 = ssub.s32 32, 32
      %22 = vsyncadd [#allocation4], %s21
      %s24 = sshll.u32 %s1, 4
      %s25 = int_to_ptr.vmem [resolvable:$true] %s24
      %27 = dma.vmem_to_smem %s25, 32, [#allocation3], [#allocation4]
    $region9: #{neural_net_forward.1} parent=1 // pred_fallthru
      _
    // Predicated region
    $region10: #{neural_net_forward.1} parent=1 // pred_check
      _
    $region11: #{neural_net_forward.1} parent=1 // pred_check_branch
      %29 = sbr.rel (0) target = $region13
    $region12: #{neural_net_forward.1} parent=1 // pred_region
      %s31 = ssub.s32 16, 16
      %32 = vsyncadd [#allocation6], %s31
      %s34 = sshll.u32 %s2, 4
      %s35 = int_to_ptr.vmem [resolvable:$true] %s34
      %37 = dma.vmem_to_smem %s35, 16, [#allocation5], [#allocation6]
    $region13: #{neural_net_forward.1} parent=1 // pred_fallthru
      _
    // Predicated region
    $region14: #{neural_net_forward.1} parent=1 // pred_check
      _
    $region15: #{neural_net_forward.1} parent=1 // pred_check_branch
      %39 = sbr.rel (0) target = $region17
    $region16: #{neural_net_forward.1} parent=1 // pred_region
      %s41 = ssub.s32 32, 32
      %42 = vsyncadd [#allocation6], %s41
      %s44 = sshll.u32 %s3, 4
      %s45 = int_to_ptr.vmem [resolvable:$true] %s44
      %47 = dma.vmem_to_smem %s45, 32, [#allocation7], [#allocation6]
    $region17: #{neural_net_forward.1} parent=1 // pred_fallthru
      _
    // Predicated region
    $region18: #{neural_net_forward.1} parent=1 // pred_check
      _
    $region19: #{neural_net_forward.1} parent=1 // pred_check_branch
      %49 = sbr.rel (0) target = $region21
    $region20: #{neural_net_forward.1} parent=1 // pred_region
      %s51 = ssub.s32 16, 16
      %52 = vsyncadd [#allocation9], %s51
      %s54 = sshll.u32 %s4, 4
      %s55 = int_to_ptr.vmem [resolvable:$true] %s54
      %57 = dma.vmem_to_smem %s55, 16, [#allocation8], [#allocation9]
    $region21: #{neural_net_forward.1} parent=1 // pred_fallthru
      _
    // Predicated region
    $region22: #{neural_net_forward.1} parent=1 // pred_check
      _
    $region23: #{neural_net_forward.1} parent=1 // pred_check_branch
      %59 = sbr.rel (0) target = $region25
    $region24: #{neural_net_forward.1} parent=1 // pred_region
      %s61 = ssub.s32 16, 16
      %62 = vsyncadd [#allocation9], %s61
      %s64 = sshll.u32 %s5, 4
      %s65 = int_to_ptr.vmem [resolvable:$true] %s64
      %67 = dma.vmem_to_smem %s65, 16, [#allocation10], [#allocation9]
    $region25: #{neural_net_forward.1} parent=1 // pred_fallthru
      _
    // Predicated region
    $region26: #{neural_net_forward.1} parent=1 // pred_check
      _
    $region27: #{neural_net_forward.1} parent=1 // pred_check_branch
      %69 = sbr.rel (0) target = $region29
    $region28: #{neural_net_forward.1} parent=1 // pred_region
      _
    $region29: #{neural_net_forward.1} parent=1 // pred_fallthru
      _
    // Predicated region
    $region30: #{neural_net_forward.1} parent=1 // pred_check
      _
    $region31: #{neural_net_forward.1} parent=1 // pred_check_branch
      %71 = sbr.rel (0) target = $region33
    $region32: #{neural_net_forward.1} parent=1 // pred_region
      %72 = dma.done [#allocation4], 32
    $region33: #{neural_net_forward.1} parent=1 // pred_fallthru
      _
    // Predicated region
    $region34: #{neural_net_forward.1} parent=1 // pred_check
      _
    $region35: #{neural_net_forward.1} parent=1 // pred_check_branch
      %74 = sbr.rel (0) target = $region37
    $region36: #{neural_net_forward.1} parent=1 // pred_region
      %75 = dma.done [#allocation6], 16
    $region37: #{neural_net_forward.1} parent=1 // pred_fallthru
      _
    // Predicated region
    $region38: #{neural_net_forward.1} parent=1 // pred_check
      _
    $region39: #{neural_net_forward.1} parent=1 // pred_check_branch
      %77 = sbr.rel (0) target = $region41
    $region40: #{neural_net_forward.1} parent=1 // pred_region
      %78 = dma.done [#allocation6], 32
    $region41: #{neural_net_forward.1} parent=1 // pred_fallthru
      _
    // Predicated region
    $region42: #{neural_net_forward.1} parent=1 // pred_check
      _
    $region43: #{neural_net_forward.1} parent=1 // pred_check_branch
      %80 = sbr.rel (0) target = $region45
    $region44: #{neural_net_forward.1} parent=1 // pred_region
      %81 = dma.done [#allocation9], 16
    $region45: #{neural_net_forward.1} parent=1 // pred_fallthru
      _
    // Predicated region
    $region46: #{neural_net_forward.1} parent=1 // pred_check
      _
    $region47: #{neural_net_forward.1} parent=1 // pred_check_branch
      %83 = sbr.rel (0) target = $region49
    $region48: #{neural_net_forward.1} parent=1 // pred_region
      %84 = dma.done [#allocation9], 16
    $region49: #{neural_net_forward.1} parent=1 // pred_fallthru
      _
    %85 = sfence
    %s86 = sld [smem:[#allocation3]]
    %s87 = sld [smem:[#allocation3 + $0x1]]
    %s88 = sld [smem:[#allocation3 + $0x2]]
    %s89 = sld [smem:[#allocation3 + $0x3]]
    %s90 = sld [smem:[#allocation3 + $0x4]]
    %s91 = sld [smem:[#allocation3 + $0x5]]
    %s92 = sld [smem:[#allocation3 + $0x6]]
    %s93 = sld [smem:[#allocation3 + $0x7]]
    %s94 = sld [smem:[#allocation3 + $0x8]]
    %s95 = sld [smem:[#allocation3 + $0x9]]
    %s96 = sld [smem:[#allocation3 + $0xa]]
    %s97 = sld [smem:[#allocation3 + $0xb]]
    %s98 = sld [smem:[#allocation3 + $0xc]]
    %s99 = sld [smem:[#allocation3 + $0xd]]
    %s100 = sld [smem:[#allocation3 + $0xe]]
    %s101 = sld [smem:[#allocation3 + $0xf]]
    %s102 = sld [smem:[#allocation3 + $0x10]]
    %s103 = sld [smem:[#allocation3 + $0x11]]
    %s104 = sld [smem:[#allocation3 + $0x12]]
    %s105 = sld [smem:[#allocation3 + $0x13]]
    %s106 = sld [smem:[#allocation3 + $0x14]]
    %s107 = sld [smem:[#allocation3 + $0x15]]
    %s108 = sld [smem:[#allocation3 + $0x16]]
    %s109 = sld [smem:[#allocation3 + $0x17]]
    %s110 = sld [smem:[#allocation3 + $0x18]]
    %s111 = sld [smem:[#allocation3 + $0x19]]
    %s112 = sld [smem:[#allocation3 + $0x1a]]
    %s113 = sld [smem:[#allocation3 + $0x1b]]
    %s114 = sld [smem:[#allocation3 + $0x1c]]
    %s115 = sld [smem:[#allocation3 + $0x1d]]
    %s116 = sld [smem:[#allocation3 + $0x1e]]
    %s117 = sld [smem:[#allocation3 + $0x1f]]
    %s118 = sld [smem:[#allocation3 + $0x20]]
    %s119 = sld [smem:[#allocation3 + $0x21]]
    %s120 = sld [smem:[#allocation3 + $0x22]]
    %s121 = sld [smem:[#allocation3 + $0x23]]
    %s122 = sld [smem:[#allocation3 + $0x24]]
    %s123 = sld [smem:[#allocation3 + $0x25]]
    %s124 = sld [smem:[#allocation3 + $0x26]]
    %s125 = sld [smem:[#allocation3 + $0x27]]
    %s126 = sld [smem:[#allocation3 + $0x28]]
    %s127 = sld [smem:[#allocation3 + $0x29]]
    %s128 = sld [smem:[#allocation3 + $0x2a]]
    %s129 = sld [smem:[#allocation3 + $0x2b]]
    %s130 = sld [smem:[#allocation3 + $0x2c]]
    %s131 = sld [smem:[#allocation3 + $0x2d]]
    %s132 = sld [smem:[#allocation3 + $0x2e]]
    %s133 = sld [smem:[#allocation3 + $0x2f]]
    %s134 = sld [smem:[#allocation3 + $0x30]]
    %s135 = sld [smem:[#allocation3 + $0x31]]
    %s136 = sld [smem:[#allocation3 + $0x32]]
    %s137 = sld [smem:[#allocation3 + $0x33]]
    %s138 = sld [smem:[#allocation3 + $0x34]]
    %s139 = sld [smem:[#allocation3 + $0x35]]
    %s140 = sld [smem:[#allocation3 + $0x36]]
    %s141 = sld [smem:[#allocation3 + $0x37]]
    %s142 = sld [smem:[#allocation3 + $0x38]]
    %s143 = sld [smem:[#allocation3 + $0x39]]
    %s144 = sld [smem:[#allocation3 + $0x3a]]
    %s145 = sld [smem:[#allocation3 + $0x3b]]
    %s146 = sld [smem:[#allocation3 + $0x3c]]
    %s147 = sld [smem:[#allocation3 + $0x3d]]
    %s148 = sld [smem:[#allocation3 + $0x3e]]
    %s149 = sld [smem:[#allocation3 + $0x3f]]
    %s150 = sld [smem:[#allocation3 + $0x40]]
    %s151 = sld [smem:[#allocation3 + $0x41]]
    %s152 = sld [smem:[#allocation3 + $0x42]]
    %s153 = sld [smem:[#allocation3 + $0x43]]
    %s154 = sld [smem:[#allocation3 + $0x44]]
    %s155 = sld [smem:[#allocation3 + $0x45]]
    %s156 = sld [smem:[#allocation3 + $0x46]]
    %s157 = sld [smem:[#allocation3 + $0x47]]
    %s158 = sld [smem:[#allocation3 + $0x48]]
    %s159 = sld [smem:[#allocation3 + $0x49]]
    %s160 = sld [smem:[#allocation3 + $0x4a]]
    %s161 = sld [smem:[#allocation3 + $0x4b]]
    %s162 = sld [smem:[#allocation3 + $0x4c]]
    %s163 = sld [smem:[#allocation3 + $0x4d]]
    %s164 = sld [smem:[#allocation3 + $0x4e]]
    %s165 = sld [smem:[#allocation3 + $0x4f]]
    %s166 = sld [smem:[#allocation3 + $0x50]]
    %s167 = sld [smem:[#allocation3 + $0x51]]
    %s168 = sld [smem:[#allocation3 + $0x52]]
    %s169 = sld [smem:[#allocation3 + $0x53]]
    %s170 = sld [smem:[#allocation3 + $0x54]]
    %s171 = sld [smem:[#allocation3 + $0x55]]
    %s172 = sld [smem:[#allocation3 + $0x56]]
    %s173 = sld [smem:[#allocation3 + $0x57]]
    %s174 = sld [smem:[#allocation3 + $0x58]]
    %s175 = sld [smem:[#allocation3 + $0x59]]
    %s176 = sld [smem:[#allocation3 + $0x5a]]
    %s177 = sld [smem:[#allocation3 + $0x5b]]
    %s178 = sld [smem:[#allocation3 + $0x5c]]
    %s179 = sld [smem:[#allocation3 + $0x5d]]
    %s180 = sld [smem:[#allocation3 + $0x5e]]
    %s181 = sld [smem:[#allocation3 + $0x5f]]
    %s182 = sld [smem:[#allocation3 + $0x60]]
    %s183 = sld [smem:[#allocation3 + $0x61]]
    %s184 = sld [smem:[#allocation3 + $0x62]]
    %s185 = sld [smem:[#allocation3 + $0x63]]
    %s186 = sld [smem:[#allocation3 + $0x64]]
    %s187 = sld [smem:[#allocation3 + $0x65]]
    %s188 = sld [smem:[#allocation3 + $0x66]]
    %s189 = sld [smem:[#allocation3 + $0x67]]
    %s190 = sld [smem:[#allocation3 + $0x68]]
    %s191 = sld [smem:[#allocation3 + $0x69]]
    %s192 = sld [smem:[#allocation3 + $0x6a]]
    %s193 = sld [smem:[#allocation3 + $0x6b]]
    %s194 = sld [smem:[#allocation3 + $0x6c]]
    %s195 = sld [smem:[#allocation3 + $0x6d]]
    %s196 = sld [smem:[#allocation3 + $0x6e]]
    %s197 = sld [smem:[#allocation3 + $0x6f]]
    %s198 = sld [smem:[#allocation3 + $0x70]]
    %s199 = sld [smem:[#allocation3 + $0x71]]
    %s200 = sld [smem:[#allocation3 + $0x72]]
    %s201 = sld [smem:[#allocation3 + $0x73]]
    %s202 = sld [smem:[#allocation3 + $0x74]]
    %s203 = sld [smem:[#allocation3 + $0x75]]
    %s204 = sld [smem:[#allocation3 + $0x76]]
    %s205 = sld [smem:[#allocation3 + $0x77]]
    %s206 = sld [smem:[#allocation3 + $0x78]]
    %s207 = sld [smem:[#allocation3 + $0x79]]
    %s208 = sld [smem:[#allocation3 + $0x7a]]
    %s209 = sld [smem:[#allocation3 + $0x7b]]
    %s210 = sld [smem:[#allocation3 + $0x7c]]
    %s211 = sld [smem:[#allocation3 + $0x7d]]
    %s212 = sld [smem:[#allocation3 + $0x7e]]
    %s213 = sld [smem:[#allocation3 + $0x7f]]
    %s214 = sld [smem:[#allocation3 + $0x80]]
    %s215 = sld [smem:[#allocation3 + $0x81]]
    %s216 = sld [smem:[#allocation3 + $0x82]]
    %s217 = sld [smem:[#allocation3 + $0x83]]
    %s218 = sld [smem:[#allocation3 + $0x84]]
    %s219 = sld [smem:[#allocation3 + $0x85]]
    %s220 = sld [smem:[#allocation3 + $0x86]]
    %s221 = sld [smem:[#allocation3 + $0x87]]
    %s222 = sld [smem:[#allocation3 + $0x88]]
    %s223 = sld [smem:[#allocation3 + $0x89]]
    %s224 = sld [smem:[#allocation3 + $0x8a]]
    %s225 = sld [smem:[#allocation3 + $0x8b]]
    %s226 = sld [smem:[#allocation3 + $0x8c]]
    %s227 = sld [smem:[#allocation3 + $0x8d]]
    %s228 = sld [smem:[#allocation3 + $0x8e]]
    %s229 = sld [smem:[#allocation3 + $0x8f]]
    %s230 = sld [smem:[#allocation3 + $0x90]]
    %s231 = sld [smem:[#allocation3 + $0x91]]
    %s232 = sld [smem:[#allocation3 + $0x92]]
    %s233 = sld [smem:[#allocation3 + $0x93]]
    %s234 = sld [smem:[#allocation3 + $0x94]]
    %s235 = sld [smem:[#allocation3 + $0x95]]
    %s236 = sld [smem:[#allocation3 + $0x96]]
    %s237 = sld [smem:[#allocation3 + $0x97]]
    %s238 = sld [smem:[#allocation3 + $0x98]]
    %s239 = sld [smem:[#allocation3 + $0x99]]
    %s240 = sld [smem:[#allocation3 + $0x9a]]
    %s241 = sld [smem:[#allocation3 + $0x9b]]
    %s242 = sld [smem:[#allocation3 + $0x9c]]
    %s243 = sld [smem:[#allocation3 + $0x9d]]
    %s244 = sld [smem:[#allocation3 + $0x9e]]
    %s245 = sld [smem:[#allocation3 + $0x9f]]
    %s246 = sld [smem:[#allocation3 + $0xa0]]
    %s247 = sld [smem:[#allocation3 + $0xa1]]
    %s248 = sld [smem:[#allocation5]]
    %s249 = sld [smem:[#allocation5 + $0x1]]
    %s250 = sld [smem:[#allocation5 + $0x2]]
    %s251 = sld [smem:[#allocation5 + $0x3]]
    %s252 = sld [smem:[#allocation5 + $0x4]]
    %s253 = sld [smem:[#allocation5 + $0x5]]
    %s254 = sld [smem:[#allocation5 + $0x6]]
    %s255 = sld [smem:[#allocation5 + $0x7]]
    %s256 = sld [smem:[#allocation5 + $0x8]]
    %s257 = sld [smem:[#allocation5 + $0x9]]
    %s258 = sld [smem:[#allocation5 + $0xa]]
    %s259 = sld [smem:[#allocation5 + $0xb]]
    %s260 = sld [smem:[#allocation5 + $0xc]]
    %s261 = sld [smem:[#allocation5 + $0xd]]
    %s262 = sld [smem:[#allocation5 + $0xe]]
    %s263 = sld [smem:[#allocation5 + $0xf]]
    %s264 = sld [smem:[#allocation5 + $0x10]]
    %s265 = sld [smem:[#allocation5 + $0x11]]
    %s266 = sld [smem:[#allocation7]]
    %s267 = sld [smem:[#allocation7 + $0x1]]
    %s268 = sld [smem:[#allocation7 + $0x2]]
    %s269 = sld [smem:[#allocation7 + $0x3]]
    %s270 = sld [smem:[#allocation7 + $0x4]]
    %s271 = sld [smem:[#allocation7 + $0x5]]
    %s272 = sld [smem:[#allocation7 + $0x6]]
    %s273 = sld [smem:[#allocation7 + $0x7]]
    %s274 = sld [smem:[#allocation7 + $0x8]]
    %s275 = sld [smem:[#allocation7 + $0x9]]
    %s276 = sld [smem:[#allocation7 + $0xa]]
    %s277 = sld [smem:[#allocation7 + $0xb]]
    %s278 = sld [smem:[#allocation7 + $0xc]]
    %s279 = sld [smem:[#allocation7 + $0xd]]
    %s280 = sld [smem:[#allocation7 + $0xe]]
    %s281 = sld [smem:[#allocation7 + $0xf]]
    %s282 = sld [smem:[#allocation7 + $0x10]]
    %s283 = sld [smem:[#allocation7 + $0x11]]
    %s284 = sld [smem:[#allocation7 + $0x12]]
    %s285 = sld [smem:[#allocation7 + $0x13]]
    %s286 = sld [smem:[#allocation7 + $0x14]]
    %s287 = sld [smem:[#allocation7 + $0x15]]
    %s288 = sld [smem:[#allocation7 + $0x16]]
    %s289 = sld [smem:[#allocation7 + $0x17]]
    %s290 = sld [smem:[#allocation7 + $0x18]]
    %s291 = sld [smem:[#allocation7 + $0x19]]
    %s292 = sld [smem:[#allocation7 + $0x1a]]
    %s293 = sld [smem:[#allocation7 + $0x1b]]
    %s294 = sld [smem:[#allocation7 + $0x1c]]
    %s295 = sld [smem:[#allocation7 + $0x1d]]
    %s296 = sld [smem:[#allocation7 + $0x1e]]
    %s297 = sld [smem:[#allocation7 + $0x1f]]
    %s298 = sld [smem:[#allocation7 + $0x20]]
    %s299 = sld [smem:[#allocation7 + $0x21]]
    %s300 = sld [smem:[#allocation7 + $0x22]]
    %s301 = sld [smem:[#allocation7 + $0x23]]
    %s302 = sld [smem:[#allocation7 + $0x24]]
    %s303 = sld [smem:[#allocation7 + $0x25]]
    %s304 = sld [smem:[#allocation7 + $0x26]]
    %s305 = sld [smem:[#allocation7 + $0x27]]
    %s306 = sld [smem:[#allocation7 + $0x28]]
    %s307 = sld [smem:[#allocation7 + $0x29]]
    %s308 = sld [smem:[#allocation7 + $0x2a]]
    %s309 = sld [smem:[#allocation7 + $0x2b]]
    %s310 = sld [smem:[#allocation7 + $0x2c]]
    %s311 = sld [smem:[#allocation7 + $0x2d]]
    %s312 = sld [smem:[#allocation7 + $0x2e]]
    %s313 = sld [smem:[#allocation7 + $0x2f]]
    %s314 = sld [smem:[#allocation7 + $0x30]]
    %s315 = sld [smem:[#allocation7 + $0x31]]
    %s316 = sld [smem:[#allocation7 + $0x32]]
    %s317 = sld [smem:[#allocation7 + $0x33]]
    %s318 = sld [smem:[#allocation7 + $0x34]]
    %s319 = sld [smem:[#allocation7 + $0x35]]
    %s320 = sld [smem:[#allocation7 + $0x36]]
    %s321 = sld [smem:[#allocation7 + $0x37]]
    %s322 = sld [smem:[#allocation7 + $0x38]]
    %s323 = sld [smem:[#allocation7 + $0x39]]
    %s324 = sld [smem:[#allocation7 + $0x3a]]
    %s325 = sld [smem:[#allocation7 + $0x3b]]
    %s326 = sld [smem:[#allocation7 + $0x3c]]
    %s327 = sld [smem:[#allocation7 + $0x3d]]
    %s328 = sld [smem:[#allocation7 + $0x3e]]
    %s329 = sld [smem:[#allocation7 + $0x3f]]
    %s330 = sld [smem:[#allocation7 + $0x40]]
    %s331 = sld [smem:[#allocation7 + $0x41]]
    %s332 = sld [smem:[#allocation7 + $0x42]]
    %s333 = sld [smem:[#allocation7 + $0x43]]
    %s334 = sld [smem:[#allocation7 + $0x44]]
    %s335 = sld [smem:[#allocation7 + $0x45]]
    %s336 = sld [smem:[#allocation7 + $0x46]]
    %s337 = sld [smem:[#allocation7 + $0x47]]
    %s338 = sld [smem:[#allocation7 + $0x48]]
    %s339 = sld [smem:[#allocation7 + $0x49]]
    %s340 = sld [smem:[#allocation7 + $0x4a]]
    %s341 = sld [smem:[#allocation7 + $0x4b]]
    %s342 = sld [smem:[#allocation7 + $0x4c]]
    %s343 = sld [smem:[#allocation7 + $0x4d]]
    %s344 = sld [smem:[#allocation7 + $0x4e]]
    %s345 = sld [smem:[#allocation7 + $0x4f]]
    %s346 = sld [smem:[#allocation7 + $0x50]]
    %s347 = sld [smem:[#allocation7 + $0x51]]
    %s348 = sld [smem:[#allocation7 + $0x52]]
    %s349 = sld [smem:[#allocation7 + $0x53]]
    %s350 = sld [smem:[#allocation7 + $0x54]]
    %s351 = sld [smem:[#allocation7 + $0x55]]
    %s352 = sld [smem:[#allocation7 + $0x56]]
    %s353 = sld [smem:[#allocation7 + $0x57]]
    %s354 = sld [smem:[#allocation7 + $0x58]]
    %s355 = sld [smem:[#allocation7 + $0x59]]
    %s356 = sld [smem:[#allocation7 + $0x5a]]
    %s357 = sld [smem:[#allocation7 + $0x5b]]
    %s358 = sld [smem:[#allocation7 + $0x5c]]
    %s359 = sld [smem:[#allocation7 + $0x5d]]
    %s360 = sld [smem:[#allocation7 + $0x5e]]
    %s361 = sld [smem:[#allocation7 + $0x5f]]
    %s362 = sld [smem:[#allocation7 + $0x60]]
    %s363 = sld [smem:[#allocation7 + $0x61]]
    %s364 = sld [smem:[#allocation7 + $0x62]]
    %s365 = sld [smem:[#allocation7 + $0x63]]
    %s366 = sld [smem:[#allocation7 + $0x64]]
    %s367 = sld [smem:[#allocation7 + $0x65]]
    %s368 = sld [smem:[#allocation7 + $0x66]]
    %s369 = sld [smem:[#allocation7 + $0x67]]
    %s370 = sld [smem:[#allocation7 + $0x68]]
    %s371 = sld [smem:[#allocation7 + $0x69]]
    %s372 = sld [smem:[#allocation7 + $0x6a]]
    %s373 = sld [smem:[#allocation7 + $0x6b]]
    %s374 = sld [smem:[#allocation7 + $0x6c]]
    %s375 = sld [smem:[#allocation7 + $0x6d]]
    %s376 = sld [smem:[#allocation7 + $0x6e]]
    %s377 = sld [smem:[#allocation7 + $0x6f]]
    %s378 = sld [smem:[#allocation7 + $0x70]]
    %s379 = sld [smem:[#allocation7 + $0x71]]
    %s380 = sld [smem:[#allocation7 + $0x72]]
    %s381 = sld [smem:[#allocation7 + $0x73]]
    %s382 = sld [smem:[#allocation7 + $0x74]]
    %s383 = sld [smem:[#allocation7 + $0x75]]
    %s384 = sld [smem:[#allocation7 + $0x76]]
    %s385 = sld [smem:[#allocation7 + $0x77]]
    %s386 = sld [smem:[#allocation7 + $0x78]]
    %s387 = sld [smem:[#allocation7 + $0x79]]
    %s388 = sld [smem:[#allocation7 + $0x7a]]
    %s389 = sld [smem:[#allocation7 + $0x7b]]
    %s390 = sld [smem:[#allocation7 + $0x7c]]
    %s391 = sld [smem:[#allocation7 + $0x7d]]
    %s392 = sld [smem:[#allocation7 + $0x7e]]
    %s393 = sld [smem:[#allocation7 + $0x7f]]
    %s394 = sld [smem:[#allocation7 + $0x80]]
    %s395 = sld [smem:[#allocation7 + $0x81]]
    %s396 = sld [smem:[#allocation7 + $0x82]]
    %s397 = sld [smem:[#allocation7 + $0x83]]
    %s398 = sld [smem:[#allocation7 + $0x84]]
    %s399 = sld [smem:[#allocation7 + $0x85]]
    %s400 = sld [smem:[#allocation7 + $0x86]]
    %s401 = sld [smem:[#allocation7 + $0x87]]
    %s402 = sld [smem:[#allocation7 + $0x88]]
    %s403 = sld [smem:[#allocation7 + $0x89]]
    %s404 = sld [smem:[#allocation7 + $0x8a]]
    %s405 = sld [smem:[#allocation7 + $0x8b]]
    %s406 = sld [smem:[#allocation7 + $0x8c]]
    %s407 = sld [smem:[#allocation7 + $0x8d]]
    %s408 = sld [smem:[#allocation7 + $0x8e]]
    %s409 = sld [smem:[#allocation7 + $0x8f]]
    %s410 = sld [smem:[#allocation7 + $0x90]]
    %s411 = sld [smem:[#allocation7 + $0x91]]
    %s412 = sld [smem:[#allocation7 + $0x92]]
    %s413 = sld [smem:[#allocation7 + $0x93]]
    %s414 = sld [smem:[#allocation7 + $0x94]]
    %s415 = sld [smem:[#allocation7 + $0x95]]
    %s416 = sld [smem:[#allocation7 + $0x96]]
    %s417 = sld [smem:[#allocation7 + $0x97]]
    %s418 = sld [smem:[#allocation7 + $0x98]]
    %s419 = sld [smem:[#allocation7 + $0x99]]
    %s420 = sld [smem:[#allocation7 + $0x9a]]
    %s421 = sld [smem:[#allocation7 + $0x9b]]
    %s422 = sld [smem:[#allocation7 + $0x9c]]
    %s423 = sld [smem:[#allocation7 + $0x9d]]
    %s424 = sld [smem:[#allocation7 + $0x9e]]
    %s425 = sld [smem:[#allocation7 + $0x9f]]
    %s426 = sld [smem:[#allocation7 + $0xa0]]
    %s427 = sld [smem:[#allocation7 + $0xa1]]
    %s428 = sld [smem:[#allocation8]]
    %s429 = sld [smem:[#allocation8 + $0x1]]
    %s430 = sld [smem:[#allocation8 + $0x2]]
    %s431 = sld [smem:[#allocation8 + $0x3]]
    %s432 = sld [smem:[#allocation8 + $0x4]]
    %s433 = sld [smem:[#allocation8 + $0x5]]
    %s434 = sld [smem:[#allocation8 + $0x6]]
    %s435 = sld [smem:[#allocation8 + $0x7]]
    %s436 = sld [smem:[#allocation8 + $0x8]]
    %s437 = sld [smem:[#allocation10]]
    %s438 = sld [smem:[#allocation10 + $0x1]]
    %s439 = sld [smem:[#allocation10 + $0x2]]
    %s440 = sld [smem:[#allocation10 + $0x3]]
    %s441 = sld [smem:[#allocation10 + $0x4]]
    %s442 = sld [smem:[#allocation10 + $0x5]]
    %s443 = sld [smem:[#allocation10 + $0x6]]
    %s444 = sld [smem:[#allocation10 + $0x7]]
    %s445 = sld [smem:[#allocation10 + $0x8]]
    %s446 = sld [smem:[#allocation2]]
    %v447 = vld [vmem:[%s0] sm:$0xff]
    %s448 = sadd.s32 0, 8
    %s449 = scalar_lea.vmem %s0, %s448
    %v450 = vld [vmem:[%s449] sm:$0xff]
    %s451 = sadd.s32 0, 16
    %s452 = scalar_lea.vmem %s0, %s451
    %v453 = vld [vmem:[%s452] sm:$0xff]
    %s454 = sadd.s32 0, 24
    %s455 = scalar_lea.vmem %s0, %s454
    %v456 = vld [vmem:[%s455] sm:$0xff]
    %s457 = sadd.s32 0, 32
    %s458 = scalar_lea.vmem %s0, %s457
    %v459 = vld [vmem:[%s458] sm:$0xff]
    %s460 = sadd.s32 0, 40
    %s461 = scalar_lea.vmem %s0, %s460
    %v462 = vld [vmem:[%s461] sm:$0xff]
    %s463 = sadd.s32 0, 48
    %s464 = scalar_lea.vmem %s0, %s463
    %v465 = vld [vmem:[%s464] sm:$0xff]
    %s466 = sadd.s32 0, 56
    %s467 = scalar_lea.vmem %s0, %s466
    %v468 = vld [vmem:[%s467] sm:$0xff]
    %s469 = sadd.s32 0, 64
    %s470 = scalar_lea.vmem %s0, %s469
    %v471 = vld [vmem:[%s470] sm:$0xff]
    %v472 = vstv %s86
    %v473 = vmul.f32 %v447, %v472
    %v474 = vstv %s87
    %v475 = vmul.f32 %v450, %v474
    %v476 = vadd.f32 %v473, %v475
    %v477 = vstv %s88
    %v478 = vmul.f32 %v453, %v477
    %v479 = vadd.f32 %v476, %v478
    %v480 = vstv %s89
    %v481 = vmul.f32 %v456, %v480
    %v482 = vadd.f32 %v479, %v481
    %v483 = vstv %s90
    %v484 = vmul.f32 %v459, %v483
    %v485 = vadd.f32 %v482, %v484
    %v486 = vstv %s91
    %v487 = vmul.f32 %v462, %v486
    %v488 = vadd.f32 %v485, %v487
    %v489 = vstv %s92
    %v490 = vmul.f32 %v465, %v489
    %v491 = vadd.f32 %v488, %v490
    %v492 = vstv %s93
    %v493 = vmul.f32 %v468, %v492
    %v494 = vadd.f32 %v491, %v493
    %v495 = vstv %s94
    %v496 = vmul.f32 %v471, %v495
    %v497 = vadd.f32 %v494, %v496
    %v498 = vstv %s248
    %v499 = vadd.f32 %v497, %v498
    %v500 = vmax.f32 %v499, 0.0
    %v501 = vstv %s95
    %v502 = vmul.f32 %v447, %v501
    %v503 = vstv %s96
    %v504 = vmul.f32 %v450, %v503
    %v505 = vadd.f32 %v502, %v504
    %v506 = vstv %s97
    %v507 = vmul.f32 %v453, %v506
    %v508 = vadd.f32 %v505, %v507
    %v509 = vstv %s98
    %v510 = vmul.f32 %v456, %v509
    %v511 = vadd.f32 %v508, %v510
    %v512 = vstv %s99
    %v513 = vmul.f32 %v459, %v512
    %v514 = vadd.f32 %v511, %v513
    %v515 = vstv %s100
    %v516 = vmul.f32 %v462, %v515
    %v517 = vadd.f32 %v514, %v516
    %v518 = vstv %s101
    %v519 = vmul.f32 %v465, %v518
    %v520 = vadd.f32 %v517, %v519
    %v521 = vstv %s102
    %v522 = vmul.f32 %v468, %v521
    %v523 = vadd.f32 %v520, %v522
    %v524 = vstv %s103
    %v525 = vmul.f32 %v471, %v524
    %v526 = vadd.f32 %v523, %v525
    %v527 = vstv %s249
    %v528 = vadd.f32 %v526, %v527
    %v529 = vmax.f32 %v528, 0.0
    %v530 = vstv %s104
    %v531 = vmul.f32 %v447, %v530
    %v532 = vstv %s105
    %v533 = vmul.f32 %v450, %v532
    %v534 = vadd.f32 %v531, %v533
    %v535 = vstv %s106
    %v536 = vmul.f32 %v453, %v535
    %v537 = vadd.f32 %v534, %v536
    %v538 = vstv %s107
    %v539 = vmul.f32 %v456, %v538
    %v540 = vadd.f32 %v537, %v539
    %v541 = vstv %s108
    %v542 = vmul.f32 %v459, %v541
    %v543 = vadd.f32 %v540, %v542
    %v544 = vstv %s109
    %v545 = vmul.f32 %v462, %v544
    %v546 = vadd.f32 %v543, %v545
    %v547 = vstv %s110
    %v548 = vmul.f32 %v465, %v547
    %v549 = vadd.f32 %v546, %v548
    %v550 = vstv %s111
    %v551 = vmul.f32 %v468, %v550
    %v552 = vadd.f32 %v549, %v551
    %v553 = vstv %s112
    %v554 = vmul.f32 %v471, %v553
    %v555 = vadd.f32 %v552, %v554
    %v556 = vstv %s250
    %v557 = vadd.f32 %v555, %v556
    %v558 = vmax.f32 %v557, 0.0
    %v559 = vstv %s113
    %v560 = vmul.f32 %v447, %v559
    %v561 = vstv %s114
    %v562 = vmul.f32 %v450, %v561
    %v563 = vadd.f32 %v560, %v562
    %v564 = vstv %s115
    %v565 = vmul.f32 %v453, %v564
    %v566 = vadd.f32 %v563, %v565
    %v567 = vstv %s116
    %v568 = vmul.f32 %v456, %v567
    %v569 = vadd.f32 %v566, %v568
    %v570 = vstv %s117
    %v571 = vmul.f32 %v459, %v570
    %v572 = vadd.f32 %v569, %v571
    %v573 = vstv %s118
    %v574 = vmul.f32 %v462, %v573
    %v575 = vadd.f32 %v572, %v574
    %v576 = vstv %s119
    %v577 = vmul.f32 %v465, %v576
    %v578 = vadd.f32 %v575, %v577
    %v579 = vstv %s120
    %v580 = vmul.f32 %v468, %v579
    %v581 = vadd.f32 %v578, %v580
    %v582 = vstv %s121
    %v583 = vmul.f32 %v471, %v582
    %v584 = vadd.f32 %v581, %v583
    %v585 = vstv %s251
    %v586 = vadd.f32 %v584, %v585
    %v587 = vmax.f32 %v586, 0.0
    %v588 = vstv %s122
    %v589 = vmul.f32 %v447, %v588
    %v590 = vstv %s123
    %v591 = vmul.f32 %v450, %v590
    %v592 = vadd.f32 %v589, %v591
    %v593 = vstv %s124
    %v594 = vmul.f32 %v453, %v593
    %v595 = vadd.f32 %v592, %v594
    %v596 = vstv %s125
    %v597 = vmul.f32 %v456, %v596
    %v598 = vadd.f32 %v595, %v597
    %v599 = vstv %s126
    %v600 = vmul.f32 %v459, %v599
    %v601 = vadd.f32 %v598, %v600
    %v602 = vstv %s127
    %v603 = vmul.f32 %v462, %v602
    %v604 = vadd.f32 %v601, %v603
    %v605 = vstv %s128
    %v606 = vmul.f32 %v465, %v605
    %v607 = vadd.f32 %v604, %v606
    %v608 = vstv %s129
    %v609 = vmul.f32 %v468, %v608
    %v610 = vadd.f32 %v607, %v609
    %v611 = vstv %s130
    %v612 = vmul.f32 %v471, %v611
    %v613 = vadd.f32 %v610, %v612
    %v614 = vstv %s252
    %v615 = vadd.f32 %v613, %v614
    %v616 = vmax.f32 %v615, 0.0
    %v617 = vstv %s131
    %v618 = vmul.f32 %v447, %v617
    %v619 = vstv %s132
    %v620 = vmul.f32 %v450, %v619
    %v621 = vadd.f32 %v618, %v620
    %v622 = vstv %s133
    %v623 = vmul.f32 %v453, %v622
    %v624 = vadd.f32 %v621, %v623
    %v625 = vstv %s134
    %v626 = vmul.f32 %v456, %v625
    %v627 = vadd.f32 %v624, %v626
    %v628 = vstv %s135
    %v629 = vmul.f32 %v459, %v628
    %v630 = vadd.f32 %v627, %v629
    %v631 = vstv %s136
    %v632 = vmul.f32 %v462, %v631
    %v633 = vadd.f32 %v630, %v632
    %v634 = vstv %s137
    %v635 = vmul.f32 %v465, %v634
    %v636 = vadd.f32 %v633, %v635
    %v637 = vstv %s138
    %v638 = vmul.f32 %v468, %v637
    %v639 = vadd.f32 %v636, %v638
    %v640 = vstv %s139
    %v641 = vmul.f32 %v471, %v640
    %v642 = vadd.f32 %v639, %v641
    %v643 = vstv %s253
    %v644 = vadd.f32 %v642, %v643
    %v645 = vmax.f32 %v644, 0.0
    %v646 = vstv %s140
    %v647 = vmul.f32 %v447, %v646
    %v648 = vstv %s141
    %v649 = vmul.f32 %v450, %v648
    %v650 = vadd.f32 %v647, %v649
    %v651 = vstv %s142
    %v652 = vmul.f32 %v453, %v651
    %v653 = vadd.f32 %v650, %v652
    %v654 = vstv %s143
    %v655 = vmul.f32 %v456, %v654
    %v656 = vadd.f32 %v653, %v655
    %v657 = vstv %s144
    %v658 = vmul.f32 %v459, %v657
    %v659 = vadd.f32 %v656, %v658
    %v660 = vstv %s145
    %v661 = vmul.f32 %v462, %v660
    %v662 = vadd.f32 %v659, %v661
    %v663 = vstv %s146
    %v664 = vmul.f32 %v465, %v663
    %v665 = vadd.f32 %v662, %v664
    %v666 = vstv %s147
    %v667 = vmul.f32 %v468, %v666
    %v668 = vadd.f32 %v665, %v667
    %v669 = vstv %s148
    %v670 = vmul.f32 %v471, %v669
    %v671 = vadd.f32 %v668, %v670
    %v672 = vstv %s254
    %v673 = vadd.f32 %v671, %v672
    %v674 = vmax.f32 %v673, 0.0
    %v675 = vstv %s149
    %v676 = vmul.f32 %v447, %v675
    %v677 = vstv %s150
    %v678 = vmul.f32 %v450, %v677
    %v679 = vadd.f32 %v676, %v678
    %v680 = vstv %s151
    %v681 = vmul.f32 %v453, %v680
    %v682 = vadd.f32 %v679, %v681
    %v683 = vstv %s152
    %v684 = vmul.f32 %v456, %v683
    %v685 = vadd.f32 %v682, %v684
    %v686 = vstv %s153
    %v687 = vmul.f32 %v459, %v686
    %v688 = vadd.f32 %v685, %v687
    %v689 = vstv %s154
    %v690 = vmul.f32 %v462, %v689
    %v691 = vadd.f32 %v688, %v690
    %v692 = vstv %s155
    %v693 = vmul.f32 %v465, %v692
    %v694 = vadd.f32 %v691, %v693
    %v695 = vstv %s156
    %v696 = vmul.f32 %v468, %v695
    %v697 = vadd.f32 %v694, %v696
    %v698 = vstv %s157
    %v699 = vmul.f32 %v471, %v698
    %v700 = vadd.f32 %v697, %v699
    %v701 = vstv %s255
    %v702 = vadd.f32 %v700, %v701
    %v703 = vmax.f32 %v702, 0.0
    %v704 = vstv %s158
    %v705 = vmul.f32 %v447, %v704
    %v706 = vstv %s159
    %v707 = vmul.f32 %v450, %v706
    %v708 = vadd.f32 %v705, %v707
    %v709 = vstv %s160
    %v710 = vmul.f32 %v453, %v709
    %v711 = vadd.f32 %v708, %v710
    %v712 = vstv %s161
    %v713 = vmul.f32 %v456, %v712
    %v714 = vadd.f32 %v711, %v713
    %v715 = vstv %s162
    %v716 = vmul.f32 %v459, %v715
    %v717 = vadd.f32 %v714, %v716
    %v718 = vstv %s163
    %v719 = vmul.f32 %v462, %v718
    %v720 = vadd.f32 %v717, %v719
    %v721 = vstv %s164
    %v722 = vmul.f32 %v465, %v721
    %v723 = vadd.f32 %v720, %v722
    %v724 = vstv %s165
    %v725 = vmul.f32 %v468, %v724
    %v726 = vadd.f32 %v723, %v725
    %v727 = vstv %s166
    %v728 = vmul.f32 %v471, %v727
    %v729 = vadd.f32 %v726, %v728
    %v730 = vstv %s256
    %v731 = vadd.f32 %v729, %v730
    %v732 = vmax.f32 %v731, 0.0
    %v733 = vstv %s167
    %v734 = vmul.f32 %v447, %v733
    %v735 = vstv %s168
    %v736 = vmul.f32 %v450, %v735
    %v737 = vadd.f32 %v734, %v736
    %v738 = vstv %s169
    %v739 = vmul.f32 %v453, %v738
    %v740 = vadd.f32 %v737, %v739
    %v741 = vstv %s170
    %v742 = vmul.f32 %v456, %v741
    %v743 = vadd.f32 %v740, %v742
    %v744 = vstv %s171
    %v745 = vmul.f32 %v459, %v744
    %v746 = vadd.f32 %v743, %v745
    %v747 = vstv %s172
    %v748 = vmul.f32 %v462, %v747
    %v749 = vadd.f32 %v746, %v748
    %v750 = vstv %s173
    %v751 = vmul.f32 %v465, %v750
    %v752 = vadd.f32 %v749, %v751
    %v753 = vstv %s174
    %v754 = vmul.f32 %v468, %v753
    %v755 = vadd.f32 %v752, %v754
    %v756 = vstv %s175
    %v757 = vmul.f32 %v471, %v756
    %v758 = vadd.f32 %v755, %v757
    %v759 = vstv %s257
    %v760 = vadd.f32 %v758, %v759
    %v761 = vmax.f32 %v760, 0.0
    %v762 = vstv %s176
    %v763 = vmul.f32 %v447, %v762
    %v764 = vstv %s177
    %v765 = vmul.f32 %v450, %v764
    %v766 = vadd.f32 %v763, %v765
    %v767 = vstv %s178
    %v768 = vmul.f32 %v453, %v767
    %v769 = vadd.f32 %v766, %v768
    %v770 = vstv %s179
    %v771 = vmul.f32 %v456, %v770
    %v772 = vadd.f32 %v769, %v771
    %v773 = vstv %s180
    %v774 = vmul.f32 %v459, %v773
    %v775 = vadd.f32 %v772, %v774
    %v776 = vstv %s181
    %v777 = vmul.f32 %v462, %v776
    %v778 = vadd.f32 %v775, %v777
    %v779 = vstv %s182
    %v780 = vmul.f32 %v465, %v779
    %v781 = vadd.f32 %v778, %v780
    %v782 = vstv %s183
    %v783 = vmul.f32 %v468, %v782
    %v784 = vadd.f32 %v781, %v783
    %v785 = vstv %s184
    %v786 = vmul.f32 %v471, %v785
    %v787 = vadd.f32 %v784, %v786
    %v788 = vstv %s258
    %v789 = vadd.f32 %v787, %v788
    %v790 = vmax.f32 %v789, 0.0
    %v791 = vstv %s185
    %v792 = vmul.f32 %v447, %v791
    %v793 = vstv %s186
    %v794 = vmul.f32 %v450, %v793
    %v795 = vadd.f32 %v792, %v794
    %v796 = vstv %s187
    %v797 = vmul.f32 %v453, %v796
    %v798 = vadd.f32 %v795, %v797
    %v799 = vstv %s188
    %v800 = vmul.f32 %v456, %v799
    %v801 = vadd.f32 %v798, %v800
    %v802 = vstv %s189
    %v803 = vmul.f32 %v459, %v802
    %v804 = vadd.f32 %v801, %v803
    %v805 = vstv %s190
    %v806 = vmul.f32 %v462, %v805
    %v807 = vadd.f32 %v804, %v806
    %v808 = vstv %s191
    %v809 = vmul.f32 %v465, %v808
    %v810 = vadd.f32 %v807, %v809
    %v811 = vstv %s192
    %v812 = vmul.f32 %v468, %v811
    %v813 = vadd.f32 %v810, %v812
    %v814 = vstv %s193
    %v815 = vmul.f32 %v471, %v814
    %v816 = vadd.f32 %v813, %v815
    %v817 = vstv %s259
    %v818 = vadd.f32 %v816, %v817
    %v819 = vmax.f32 %v818, 0.0
    %v820 = vstv %s194
    %v821 = vmul.f32 %v447, %v820
    %v822 = vstv %s195
    %v823 = vmul.f32 %v450, %v822
    %v824 = vadd.f32 %v821, %v823
    %v825 = vstv %s196
    %v826 = vmul.f32 %v453, %v825
    %v827 = vadd.f32 %v824, %v826
    %v828 = vstv %s197
    %v829 = vmul.f32 %v456, %v828
    %v830 = vadd.f32 %v827, %v829
    %v831 = vstv %s198
    %v832 = vmul.f32 %v459, %v831
    %v833 = vadd.f32 %v830, %v832
    %v834 = vstv %s199
    %v835 = vmul.f32 %v462, %v834
    %v836 = vadd.f32 %v833, %v835
    %v837 = vstv %s200
    %v838 = vmul.f32 %v465, %v837
    %v839 = vadd.f32 %v836, %v838
    %v840 = vstv %s201
    %v841 = vmul.f32 %v468, %v840
    %v842 = vadd.f32 %v839, %v841
    %v843 = vstv %s202
    %v844 = vmul.f32 %v471, %v843
    %v845 = vadd.f32 %v842, %v844
    %v846 = vstv %s260
    %v847 = vadd.f32 %v845, %v846
    %v848 = vmax.f32 %v847, 0.0
    %v849 = vstv %s203
    %v850 = vmul.f32 %v447, %v849
    %v851 = vstv %s204
    %v852 = vmul.f32 %v450, %v851
    %v853 = vadd.f32 %v850, %v852
    %v854 = vstv %s205
    %v855 = vmul.f32 %v453, %v854
    %v856 = vadd.f32 %v853, %v855
    %v857 = vstv %s206
    %v858 = vmul.f32 %v456, %v857
    %v859 = vadd.f32 %v856, %v858
    %v860 = vstv %s207
    %v861 = vmul.f32 %v459, %v860
    %v862 = vadd.f32 %v859, %v861
    %v863 = vstv %s208
    %v864 = vmul.f32 %v462, %v863
    %v865 = vadd.f32 %v862, %v864
    %v866 = vstv %s209
    %v867 = vmul.f32 %v465, %v866
    %v868 = vadd.f32 %v865, %v867
    %v869 = vstv %s210
    %v870 = vmul.f32 %v468, %v869
    %v871 = vadd.f32 %v868, %v870
    %v872 = vstv %s211
    %v873 = vmul.f32 %v471, %v872
    %v874 = vadd.f32 %v871, %v873
    %v875 = vstv %s261
    %v876 = vadd.f32 %v874, %v875
    %v877 = vmax.f32 %v876, 0.0
    %v878 = vstv %s212
    %v879 = vmul.f32 %v447, %v878
    %v880 = vstv %s213
    %v881 = vmul.f32 %v450, %v880
    %v882 = vadd.f32 %v879, %v881
    %v883 = vstv %s214
    %v884 = vmul.f32 %v453, %v883
    %v885 = vadd.f32 %v882, %v884
    %v886 = vstv %s215
    %v887 = vmul.f32 %v456, %v886
    %v888 = vadd.f32 %v885, %v887
    %v889 = vstv %s216
    %v890 = vmul.f32 %v459, %v889
    %v891 = vadd.f32 %v888, %v890
    %v892 = vstv %s217
    %v893 = vmul.f32 %v462, %v892
    %v894 = vadd.f32 %v891, %v893
    %v895 = vstv %s218
    %v896 = vmul.f32 %v465, %v895
    %v897 = vadd.f32 %v894, %v896
    %v898 = vstv %s219
    %v899 = vmul.f32 %v468, %v898
    %v900 = vadd.f32 %v897, %v899
    %v901 = vstv %s220
    %v902 = vmul.f32 %v471, %v901
    %v903 = vadd.f32 %v900, %v902
    %v904 = vstv %s262
    %v905 = vadd.f32 %v903, %v904
    %v906 = vmax.f32 %v905, 0.0
    %v907 = vstv %s221
    %v908 = vmul.f32 %v447, %v907
    %v909 = vstv %s222
    %v910 = vmul.f32 %v450, %v909
    %v911 = vadd.f32 %v908, %v910
    %v912 = vstv %s223
    %v913 = vmul.f32 %v453, %v912
    %v914 = vadd.f32 %v911, %v913
    %v915 = vstv %s224
    %v916 = vmul.f32 %v456, %v915
    %v917 = vadd.f32 %v914, %v916
    %v918 = vstv %s225
    %v919 = vmul.f32 %v459, %v918
    %v920 = vadd.f32 %v917, %v919
    %v921 = vstv %s226
    %v922 = vmul.f32 %v462, %v921
    %v923 = vadd.f32 %v920, %v922
    %v924 = vstv %s227
    %v925 = vmul.f32 %v465, %v924
    %v926 = vadd.f32 %v923, %v925
    %v927 = vstv %s228
    %v928 = vmul.f32 %v468, %v927
    %v929 = vadd.f32 %v926, %v928
    %v930 = vstv %s229
    %v931 = vmul.f32 %v471, %v930
    %v932 = vadd.f32 %v929, %v931
    %v933 = vstv %s263
    %v934 = vadd.f32 %v932, %v933
    %v935 = vmax.f32 %v934, 0.0
    %v936 = vstv %s230
    %v937 = vmul.f32 %v447, %v936
    %v938 = vstv %s231
    %v939 = vmul.f32 %v450, %v938
    %v940 = vadd.f32 %v937, %v939
    %v941 = vstv %s232
    %v942 = vmul.f32 %v453, %v941
    %v943 = vadd.f32 %v940, %v942
    %v944 = vstv %s233
    %v945 = vmul.f32 %v456, %v944
    %v946 = vadd.f32 %v943, %v945
    %v947 = vstv %s234
    %v948 = vmul.f32 %v459, %v947
    %v949 = vadd.f32 %v946, %v948
    %v950 = vstv %s235
    %v951 = vmul.f32 %v462, %v950
    %v952 = vadd.f32 %v949, %v951
    %v953 = vstv %s236
    %v954 = vmul.f32 %v465, %v953
    %v955 = vadd.f32 %v952, %v954
    %v956 = vstv %s237
    %v957 = vmul.f32 %v468, %v956
    %v958 = vadd.f32 %v955, %v957
    %v959 = vstv %s238
    %v960 = vmul.f32 %v471, %v959
    %v961 = vadd.f32 %v958, %v960
    %v962 = vstv %s264
    %v963 = vadd.f32 %v961, %v962
    %v964 = vmax.f32 %v963, 0.0
    %v965 = vstv %s239
    %v966 = vmul.f32 %v447, %v965
    %v967 = vstv %s240
    %v968 = vmul.f32 %v450, %v967
    %v969 = vadd.f32 %v966, %v968
    %v970 = vstv %s241
    %v971 = vmul.f32 %v453, %v970
    %v972 = vadd.f32 %v969, %v971
    %v973 = vstv %s242
    %v974 = vmul.f32 %v456, %v973
    %v975 = vadd.f32 %v972, %v974
    %v976 = vstv %s243
    %v977 = vmul.f32 %v459, %v976
    %v978 = vadd.f32 %v975, %v977
    %v979 = vstv %s244
    %v980 = vmul.f32 %v462, %v979
    %v981 = vadd.f32 %v978, %v980
    %v982 = vstv %s245
    %v983 = vmul.f32 %v465, %v982
    %v984 = vadd.f32 %v981, %v983
    %v985 = vstv %s246
    %v986 = vmul.f32 %v468, %v985
    %v987 = vadd.f32 %v984, %v986
    %v988 = vstv %s247
    %v989 = vmul.f32 %v471, %v988
    %v990 = vadd.f32 %v987, %v989
    %v991 = vstv %s265
    %v992 = vadd.f32 %v990, %v991
    %v993 = vmax.f32 %v992, 0.0
    %v994 = vstv %s266
    %v995 = vmul.f32 %v500, %v994
    %v996 = vstv %s267
    %v997 = vmul.f32 %v529, %v996
    %v998 = vadd.f32 %v995, %v997
    %v999 = vstv %s268
    %v1000 = vmul.f32 %v558, %v999
    %v1001 = vadd.f32 %v998, %v1000
    %v1002 = vstv %s269
    %v1003 = vmul.f32 %v587, %v1002
    %v1004 = vadd.f32 %v1001, %v1003
    %v1005 = vstv %s270
    %v1006 = vmul.f32 %v616, %v1005
    %v1007 = vadd.f32 %v1004, %v1006
    %v1008 = vstv %s271
    %v1009 = vmul.f32 %v645, %v1008
    %v1010 = vadd.f32 %v1007, %v1009
    %v1011 = vstv %s272
    %v1012 = vmul.f32 %v674, %v1011
    %v1013 = vadd.f32 %v1010, %v1012
    %v1014 = vstv %s273
    %v1015 = vmul.f32 %v703, %v1014
    %v1016 = vadd.f32 %v1013, %v1015
    %v1017 = vstv %s274
    %v1018 = vmul.f32 %v732, %v1017
    %v1019 = vadd.f32 %v1016, %v1018
    %v1020 = vstv %s275
    %v1021 = vmul.f32 %v761, %v1020
    %v1022 = vadd.f32 %v1019, %v1021
    %v1023 = vstv %s276
    %v1024 = vmul.f32 %v790, %v1023
    %v1025 = vadd.f32 %v1022, %v1024
    %v1026 = vstv %s277
    %v1027 = vmul.f32 %v819, %v1026
    %v1028 = vadd.f32 %v1025, %v1027
    %v1029 = vstv %s278
    %v1030 = vmul.f32 %v848, %v1029
    %v1031 = vadd.f32 %v1028, %v1030
    %v1032 = vstv %s279
    %v1033 = vmul.f32 %v877, %v1032
    %v1034 = vadd.f32 %v1031, %v1033
    %v1035 = vstv %s280
    %v1036 = vmul.f32 %v906, %v1035
    %v1037 = vadd.f32 %v1034, %v1036
    %v1038 = vstv %s281
    %v1039 = vmul.f32 %v935, %v1038
    %v1040 = vadd.f32 %v1037, %v1039
    %v1041 = vstv %s282
    %v1042 = vmul.f32 %v964, %v1041
    %v1043 = vadd.f32 %v1040, %v1042
    %v1044 = vstv %s283
    %v1045 = vmul.f32 %v993, %v1044
    %v1046 = vadd.f32 %v1043, %v1045
    %v1047 = vstv %s428
    %v1048 = vadd.f32 %v1046, %v1047
    %v1049 = vmax.f32 %v1048, 0.0
    %v1050 = vstv %s284
    %v1051 = vmul.f32 %v500, %v1050
    %v1052 = vstv %s285
    %v1053 = vmul.f32 %v529, %v1052
    %v1054 = vadd.f32 %v1051, %v1053
    %v1055 = vstv %s286
    %v1056 = vmul.f32 %v558, %v1055
    %v1057 = vadd.f32 %v1054, %v1056
    %v1058 = vstv %s287
    %v1059 = vmul.f32 %v587, %v1058
    %v1060 = vadd.f32 %v1057, %v1059
    %v1061 = vstv %s288
    %v1062 = vmul.f32 %v616, %v1061
    %v1063 = vadd.f32 %v1060, %v1062
    %v1064 = vstv %s289
    %v1065 = vmul.f32 %v645, %v1064
    %v1066 = vadd.f32 %v1063, %v1065
    %v1067 = vstv %s290
    %v1068 = vmul.f32 %v674, %v1067
    %v1069 = vadd.f32 %v1066, %v1068
    %v1070 = vstv %s291
    %v1071 = vmul.f32 %v703, %v1070
    %v1072 = vadd.f32 %v1069, %v1071
    %v1073 = vstv %s292
    %v1074 = vmul.f32 %v732, %v1073
    %v1075 = vadd.f32 %v1072, %v1074
    %v1076 = vstv %s293
    %v1077 = vmul.f32 %v761, %v1076
    %v1078 = vadd.f32 %v1075, %v1077
    %v1079 = vstv %s294
    %v1080 = vmul.f32 %v790, %v1079
    %v1081 = vadd.f32 %v1078, %v1080
    %v1082 = vstv %s295
    %v1083 = vmul.f32 %v819, %v1082
    %v1084 = vadd.f32 %v1081, %v1083
    %v1085 = vstv %s296
    %v1086 = vmul.f32 %v848, %v1085
    %v1087 = vadd.f32 %v1084, %v1086
    %v1088 = vstv %s297
    %v1089 = vmul.f32 %v877, %v1088
    %v1090 = vadd.f32 %v1087, %v1089
    %v1091 = vstv %s298
    %v1092 = vmul.f32 %v906, %v1091
    %v1093 = vadd.f32 %v1090, %v1092
    %v1094 = vstv %s299
    %v1095 = vmul.f32 %v935, %v1094
    %v1096 = vadd.f32 %v1093, %v1095
    %v1097 = vstv %s300
    %v1098 = vmul.f32 %v964, %v1097
    %v1099 = vadd.f32 %v1096, %v1098
    %v1100 = vstv %s301
    %v1101 = vmul.f32 %v993, %v1100
    %v1102 = vadd.f32 %v1099, %v1101
    %v1103 = vstv %s429
    %v1104 = vadd.f32 %v1102, %v1103
    %v1105 = vmax.f32 %v1104, 0.0
    %v1106 = vstv %s302
    %v1107 = vmul.f32 %v500, %v1106
    %v1108 = vstv %s303
    %v1109 = vmul.f32 %v529, %v1108
    %v1110 = vadd.f32 %v1107, %v1109
    %v1111 = vstv %s304
    %v1112 = vmul.f32 %v558, %v1111
    %v1113 = vadd.f32 %v1110, %v1112
    %v1114 = vstv %s305
    %v1115 = vmul.f32 %v587, %v1114
    %v1116 = vadd.f32 %v1113, %v1115
    %v1117 = vstv %s306
    %v1118 = vmul.f32 %v616, %v1117
    %v1119 = vadd.f32 %v1116, %v1118
    %v1120 = vstv %s307
    %v1121 = vmul.f32 %v645, %v1120
    %v1122 = vadd.f32 %v1119, %v1121
    %v1123 = vstv %s308
    %v1124 = vmul.f32 %v674, %v1123
    %v1125 = vadd.f32 %v1122, %v1124
    %v1126 = vstv %s309
    %v1127 = vmul.f32 %v703, %v1126
    %v1128 = vadd.f32 %v1125, %v1127
    %v1129 = vstv %s310
    %v1130 = vmul.f32 %v732, %v1129
    %v1131 = vadd.f32 %v1128, %v1130
    %v1132 = vstv %s311
    %v1133 = vmul.f32 %v761, %v1132
    %v1134 = vadd.f32 %v1131, %v1133
    %v1135 = vstv %s312
    %v1136 = vmul.f32 %v790, %v1135
    %v1137 = vadd.f32 %v1134, %v1136
    %v1138 = vstv %s313
    %v1139 = vmul.f32 %v819, %v1138
    %v1140 = vadd.f32 %v1137, %v1139
    %v1141 = vstv %s314
    %v1142 = vmul.f32 %v848, %v1141
    %v1143 = vadd.f32 %v1140, %v1142
    %v1144 = vstv %s315
    %v1145 = vmul.f32 %v877, %v1144
    %v1146 = vadd.f32 %v1143, %v1145
    %v1147 = vstv %s316
    %v1148 = vmul.f32 %v906, %v1147
    %v1149 = vadd.f32 %v1146, %v1148
    %v1150 = vstv %s317
    %v1151 = vmul.f32 %v935, %v1150
    %v1152 = vadd.f32 %v1149, %v1151
    %v1153 = vstv %s318
    %v1154 = vmul.f32 %v964, %v1153
    %v1155 = vadd.f32 %v1152, %v1154
    %v1156 = vstv %s319
    %v1157 = vmul.f32 %v993, %v1156
    %v1158 = vadd.f32 %v1155, %v1157
    %v1159 = vstv %s430
    %v1160 = vadd.f32 %v1158, %v1159
    %v1161 = vmax.f32 %v1160, 0.0
    %v1162 = vstv %s320
    %v1163 = vmul.f32 %v500, %v1162
    %v1164 = vstv %s321
    %v1165 = vmul.f32 %v529, %v1164
    %v1166 = vadd.f32 %v1163, %v1165
    %v1167 = vstv %s322
    %v1168 = vmul.f32 %v558, %v1167
    %v1169 = vadd.f32 %v1166, %v1168
    %v1170 = vstv %s323
    %v1171 = vmul.f32 %v587, %v1170
    %v1172 = vadd.f32 %v1169, %v1171
    %v1173 = vstv %s324
    %v1174 = vmul.f32 %v616, %v1173
    %v1175 = vadd.f32 %v1172, %v1174
    %v1176 = vstv %s325
    %v1177 = vmul.f32 %v645, %v1176
    %v1178 = vadd.f32 %v1175, %v1177
    %v1179 = vstv %s326
    %v1180 = vmul.f32 %v674, %v1179
    %v1181 = vadd.f32 %v1178, %v1180
    %v1182 = vstv %s327
    %v1183 = vmul.f32 %v703, %v1182
    %v1184 = vadd.f32 %v1181, %v1183
    %v1185 = vstv %s328
    %v1186 = vmul.f32 %v732, %v1185
    %v1187 = vadd.f32 %v1184, %v1186
    %v1188 = vstv %s329
    %v1189 = vmul.f32 %v761, %v1188
    %v1190 = vadd.f32 %v1187, %v1189
    %v1191 = vstv %s330
    %v1192 = vmul.f32 %v790, %v1191
    %v1193 = vadd.f32 %v1190, %v1192
    %v1194 = vstv %s331
    %v1195 = vmul.f32 %v819, %v1194
    %v1196 = vadd.f32 %v1193, %v1195
    %v1197 = vstv %s332
    %v1198 = vmul.f32 %v848, %v1197
    %v1199 = vadd.f32 %v1196, %v1198
    %v1200 = vstv %s333
    %v1201 = vmul.f32 %v877, %v1200
    %v1202 = vadd.f32 %v1199, %v1201
    %v1203 = vstv %s334
    %v1204 = vmul.f32 %v906, %v1203
    %v1205 = vadd.f32 %v1202, %v1204
    %v1206 = vstv %s335
    %v1207 = vmul.f32 %v935, %v1206
    %v1208 = vadd.f32 %v1205, %v1207
    %v1209 = vstv %s336
    %v1210 = vmul.f32 %v964, %v1209
    %v1211 = vadd.f32 %v1208, %v1210
    %v1212 = vstv %s337
    %v1213 = vmul.f32 %v993, %v1212
    %v1214 = vadd.f32 %v1211, %v1213
    %v1215 = vstv %s431
    %v1216 = vadd.f32 %v1214, %v1215
    %v1217 = vmax.f32 %v1216, 0.0
    %v1218 = vstv %s338
    %v1219 = vmul.f32 %v500, %v1218
    %v1220 = vstv %s339
    %v1221 = vmul.f32 %v529, %v1220
    %v1222 = vadd.f32 %v1219, %v1221
    %v1223 = vstv %s340
    %v1224 = vmul.f32 %v558, %v1223
    %v1225 = vadd.f32 %v1222, %v1224
    %v1226 = vstv %s341
    %v1227 = vmul.f32 %v587, %v1226
    %v1228 = vadd.f32 %v1225, %v1227
    %v1229 = vstv %s342
    %v1230 = vmul.f32 %v616, %v1229
    %v1231 = vadd.f32 %v1228, %v1230
    %v1232 = vstv %s343
    %v1233 = vmul.f32 %v645, %v1232
    %v1234 = vadd.f32 %v1231, %v1233
    %v1235 = vstv %s344
    %v1236 = vmul.f32 %v674, %v1235
    %v1237 = vadd.f32 %v1234, %v1236
    %v1238 = vstv %s345
    %v1239 = vmul.f32 %v703, %v1238
    %v1240 = vadd.f32 %v1237, %v1239
    %v1241 = vstv %s346
    %v1242 = vmul.f32 %v732, %v1241
    %v1243 = vadd.f32 %v1240, %v1242
    %v1244 = vstv %s347
    %v1245 = vmul.f32 %v761, %v1244
    %v1246 = vadd.f32 %v1243, %v1245
    %v1247 = vstv %s348
    %v1248 = vmul.f32 %v790, %v1247
    %v1249 = vadd.f32 %v1246, %v1248
    %v1250 = vstv %s349
    %v1251 = vmul.f32 %v819, %v1250
    %v1252 = vadd.f32 %v1249, %v1251
    %v1253 = vstv %s350
    %v1254 = vmul.f32 %v848, %v1253
    %v1255 = vadd.f32 %v1252, %v1254
    %v1256 = vstv %s351
    %v1257 = vmul.f32 %v877, %v1256
    %v1258 = vadd.f32 %v1255, %v1257
    %v1259 = vstv %s352
    %v1260 = vmul.f32 %v906, %v1259
    %v1261 = vadd.f32 %v1258, %v1260
    %v1262 = vstv %s353
    %v1263 = vmul.f32 %v935, %v1262
    %v1264 = vadd.f32 %v1261, %v1263
    %v1265 = vstv %s354
    %v1266 = vmul.f32 %v964, %v1265
    %v1267 = vadd.f32 %v1264, %v1266
    %v1268 = vstv %s355
    %v1269 = vmul.f32 %v993, %v1268
    %v1270 = vadd.f32 %v1267, %v1269
    %v1271 = vstv %s432
    %v1272 = vadd.f32 %v1270, %v1271
    %v1273 = vmax.f32 %v1272, 0.0
    %v1274 = vstv %s356
    %v1275 = vmul.f32 %v500, %v1274
    %v1276 = vstv %s357
    %v1277 = vmul.f32 %v529, %v1276
    %v1278 = vadd.f32 %v1275, %v1277
    %v1279 = vstv %s358
    %v1280 = vmul.f32 %v558, %v1279
    %v1281 = vadd.f32 %v1278, %v1280
    %v1282 = vstv %s359
    %v1283 = vmul.f32 %v587, %v1282
    %v1284 = vadd.f32 %v1281, %v1283
    %v1285 = vstv %s360
    %v1286 = vmul.f32 %v616, %v1285
    %v1287 = vadd.f32 %v1284, %v1286
    %v1288 = vstv %s361
    %v1289 = vmul.f32 %v645, %v1288
    %v1290 = vadd.f32 %v1287, %v1289
    %v1291 = vstv %s362
    %v1292 = vmul.f32 %v674, %v1291
    %v1293 = vadd.f32 %v1290, %v1292
    %v1294 = vstv %s363
    %v1295 = vmul.f32 %v703, %v1294
    %v1296 = vadd.f32 %v1293, %v1295
    %v1297 = vstv %s364
    %v1298 = vmul.f32 %v732, %v1297
    %v1299 = vadd.f32 %v1296, %v1298
    %v1300 = vstv %s365
    %v1301 = vmul.f32 %v761, %v1300
    %v1302 = vadd.f32 %v1299, %v1301
    %v1303 = vstv %s366
    %v1304 = vmul.f32 %v790, %v1303
    %v1305 = vadd.f32 %v1302, %v1304
    %v1306 = vstv %s367
    %v1307 = vmul.f32 %v819, %v1306
    %v1308 = vadd.f32 %v1305, %v1307
    %v1309 = vstv %s368
    %v1310 = vmul.f32 %v848, %v1309
    %v1311 = vadd.f32 %v1308, %v1310
    %v1312 = vstv %s369
    %v1313 = vmul.f32 %v877, %v1312
    %v1314 = vadd.f32 %v1311, %v1313
    %v1315 = vstv %s370
    %v1316 = vmul.f32 %v906, %v1315
    %v1317 = vadd.f32 %v1314, %v1316
    %v1318 = vstv %s371
    %v1319 = vmul.f32 %v935, %v1318
    %v1320 = vadd.f32 %v1317, %v1319
    %v1321 = vstv %s372
    %v1322 = vmul.f32 %v964, %v1321
    %v1323 = vadd.f32 %v1320, %v1322
    %v1324 = vstv %s373
    %v1325 = vmul.f32 %v993, %v1324
    %v1326 = vadd.f32 %v1323, %v1325
    %v1327 = vstv %s433
    %v1328 = vadd.f32 %v1326, %v1327
    %v1329 = vmax.f32 %v1328, 0.0
    %v1330 = vstv %s374
    %v1331 = vmul.f32 %v500, %v1330
    %v1332 = vstv %s375
    %v1333 = vmul.f32 %v529, %v1332
    %v1334 = vadd.f32 %v1331, %v1333
    %v1335 = vstv %s376
    %v1336 = vmul.f32 %v558, %v1335
    %v1337 = vadd.f32 %v1334, %v1336
    %v1338 = vstv %s377
    %v1339 = vmul.f32 %v587, %v1338
    %v1340 = vadd.f32 %v1337, %v1339
    %v1341 = vstv %s378
    %v1342 = vmul.f32 %v616, %v1341
    %v1343 = vadd.f32 %v1340, %v1342
    %v1344 = vstv %s379
    %v1345 = vmul.f32 %v645, %v1344
    %v1346 = vadd.f32 %v1343, %v1345
    %v1347 = vstv %s380
    %v1348 = vmul.f32 %v674, %v1347
    %v1349 = vadd.f32 %v1346, %v1348
    %v1350 = vstv %s381
    %v1351 = vmul.f32 %v703, %v1350
    %v1352 = vadd.f32 %v1349, %v1351
    %v1353 = vstv %s382
    %v1354 = vmul.f32 %v732, %v1353
    %v1355 = vadd.f32 %v1352, %v1354
    %v1356 = vstv %s383
    %v1357 = vmul.f32 %v761, %v1356
    %v1358 = vadd.f32 %v1355, %v1357
    %v1359 = vstv %s384
    %v1360 = vmul.f32 %v790, %v1359
    %v1361 = vadd.f32 %v1358, %v1360
    %v1362 = vstv %s385
    %v1363 = vmul.f32 %v819, %v1362
    %v1364 = vadd.f32 %v1361, %v1363
    %v1365 = vstv %s386
    %v1366 = vmul.f32 %v848, %v1365
    %v1367 = vadd.f32 %v1364, %v1366
    %v1368 = vstv %s387
    %v1369 = vmul.f32 %v877, %v1368
    %v1370 = vadd.f32 %v1367, %v1369
    %v1371 = vstv %s388
    %v1372 = vmul.f32 %v906, %v1371
    %v1373 = vadd.f32 %v1370, %v1372
    %v1374 = vstv %s389
    %v1375 = vmul.f32 %v935, %v1374
    %v1376 = vadd.f32 %v1373, %v1375
    %v1377 = vstv %s390
    %v1378 = vmul.f32 %v964, %v1377
    %v1379 = vadd.f32 %v1376, %v1378
    %v1380 = vstv %s391
    %v1381 = vmul.f32 %v993, %v1380
    %v1382 = vadd.f32 %v1379, %v1381
    %v1383 = vstv %s434
    %v1384 = vadd.f32 %v1382, %v1383
    %v1385 = vmax.f32 %v1384, 0.0
    %v1386 = vstv %s392
    %v1387 = vmul.f32 %v500, %v1386
    %v1388 = vstv %s393
    %v1389 = vmul.f32 %v529, %v1388
    %v1390 = vadd.f32 %v1387, %v1389
    %v1391 = vstv %s394
    %v1392 = vmul.f32 %v558, %v1391
    %v1393 = vadd.f32 %v1390, %v1392
    %v1394 = vstv %s395
    %v1395 = vmul.f32 %v587, %v1394
    %v1396 = vadd.f32 %v1393, %v1395
    %v1397 = vstv %s396
    %v1398 = vmul.f32 %v616, %v1397
    %v1399 = vadd.f32 %v1396, %v1398
    %v1400 = vstv %s397
    %v1401 = vmul.f32 %v645, %v1400
    %v1402 = vadd.f32 %v1399, %v1401
    %v1403 = vstv %s398
    %v1404 = vmul.f32 %v674, %v1403
    %v1405 = vadd.f32 %v1402, %v1404
    %v1406 = vstv %s399
    %v1407 = vmul.f32 %v703, %v1406
    %v1408 = vadd.f32 %v1405, %v1407
    %v1409 = vstv %s400
    %v1410 = vmul.f32 %v732, %v1409
    %v1411 = vadd.f32 %v1408, %v1410
    %v1412 = vstv %s401
    %v1413 = vmul.f32 %v761, %v1412
    %v1414 = vadd.f32 %v1411, %v1413
    %v1415 = vstv %s402
    %v1416 = vmul.f32 %v790, %v1415
    %v1417 = vadd.f32 %v1414, %v1416
    %v1418 = vstv %s403
    %v1419 = vmul.f32 %v819, %v1418
    %v1420 = vadd.f32 %v1417, %v1419
    %v1421 = vstv %s404
    %v1422 = vmul.f32 %v848, %v1421
    %v1423 = vadd.f32 %v1420, %v1422
    %v1424 = vstv %s405
    %v1425 = vmul.f32 %v877, %v1424
    %v1426 = vadd.f32 %v1423, %v1425
    %v1427 = vstv %s406
    %v1428 = vmul.f32 %v906, %v1427
    %v1429 = vadd.f32 %v1426, %v1428
    %v1430 = vstv %s407
    %v1431 = vmul.f32 %v935, %v1430
    %v1432 = vadd.f32 %v1429, %v1431
    %v1433 = vstv %s408
    %v1434 = vmul.f32 %v964, %v1433
    %v1435 = vadd.f32 %v1432, %v1434
    %v1436 = vstv %s409
    %v1437 = vmul.f32 %v993, %v1436
    %v1438 = vadd.f32 %v1435, %v1437
    %v1439 = vstv %s435
    %v1440 = vadd.f32 %v1438, %v1439
    %v1441 = vmax.f32 %v1440, 0.0
    %v1442 = vstv %s410
    %v1443 = vmul.f32 %v500, %v1442
    %v1444 = vstv %s411
    %v1445 = vmul.f32 %v529, %v1444
    %v1446 = vadd.f32 %v1443, %v1445
    %v1447 = vstv %s412
    %v1448 = vmul.f32 %v558, %v1447
    %v1449 = vadd.f32 %v1446, %v1448
    %v1450 = vstv %s413
    %v1451 = vmul.f32 %v587, %v1450
    %v1452 = vadd.f32 %v1449, %v1451
    %v1453 = vstv %s414
    %v1454 = vmul.f32 %v616, %v1453
    %v1455 = vadd.f32 %v1452, %v1454
    %v1456 = vstv %s415
    %v1457 = vmul.f32 %v645, %v1456
    %v1458 = vadd.f32 %v1455, %v1457
    %v1459 = vstv %s416
    %v1460 = vmul.f32 %v674, %v1459
    %v1461 = vadd.f32 %v1458, %v1460
    %v1462 = vstv %s417
    %v1463 = vmul.f32 %v703, %v1462
    %v1464 = vadd.f32 %v1461, %v1463
    %v1465 = vstv %s418
    %v1466 = vmul.f32 %v732, %v1465
    %v1467 = vadd.f32 %v1464, %v1466
    %v1468 = vstv %s419
    %v1469 = vmul.f32 %v761, %v1468
    %v1470 = vadd.f32 %v1467, %v1469
    %v1471 = vstv %s420
    %v1472 = vmul.f32 %v790, %v1471
    %v1473 = vadd.f32 %v1470, %v1472
    %v1474 = vstv %s421
    %v1475 = vmul.f32 %v819, %v1474
    %v1476 = vadd.f32 %v1473, %v1475
    %v1477 = vstv %s422
    %v1478 = vmul.f32 %v848, %v1477
    %v1479 = vadd.f32 %v1476, %v1478
    %v1480 = vstv %s423
    %v1481 = vmul.f32 %v877, %v1480
    %v1482 = vadd.f32 %v1479, %v1481
    %v1483 = vstv %s424
    %v1484 = vmul.f32 %v906, %v1483
    %v1485 = vadd.f32 %v1482, %v1484
    %v1486 = vstv %s425
    %v1487 = vmul.f32 %v935, %v1486
    %v1488 = vadd.f32 %v1485, %v1487
    %v1489 = vstv %s426
    %v1490 = vmul.f32 %v964, %v1489
    %v1491 = vadd.f32 %v1488, %v1490
    %v1492 = vstv %s427
    %v1493 = vmul.f32 %v993, %v1492
    %v1494 = vadd.f32 %v1491, %v1493
    %v1495 = vstv %s436
    %v1496 = vadd.f32 %v1494, %v1495
    %v1497 = vmax.f32 %v1496, 0.0
    %v1498 = vstv %s437
    %v1499 = vmul.f32 %v1049, %v1498
    %v1500 = vstv %s438
    %v1501 = vmul.f32 %v1105, %v1500
    %v1502 = vadd.f32 %v1499, %v1501
    %v1503 = vstv %s439
    %v1504 = vmul.f32 %v1161, %v1503
    %v1505 = vadd.f32 %v1502, %v1504
    %v1506 = vstv %s440
    %v1507 = vmul.f32 %v1217, %v1506
    %v1508 = vadd.f32 %v1505, %v1507
    %v1509 = vstv %s441
    %v1510 = vmul.f32 %v1273, %v1509
    %v1511 = vadd.f32 %v1508, %v1510
    %v1512 = vstv %s442
    %v1513 = vmul.f32 %v1329, %v1512
    %v1514 = vadd.f32 %v1511, %v1513
    %v1515 = vstv %s443
    %v1516 = vmul.f32 %v1385, %v1515
    %v1517 = vadd.f32 %v1514, %v1516
    %v1518 = vstv %s444
    %v1519 = vmul.f32 %v1441, %v1518
    %v1520 = vadd.f32 %v1517, %v1519
    %v1521 = vstv %s445
    %v1522 = vmul.f32 %v1497, %v1521
    %v1523 = vadd.f32 %v1520, %v1522
    %v1524 = vstv %s446
    %v1525 = vadd.f32 %v1523, %v1524
    %v1526 = vxor.u32 %v1525, 2147483648
    %v1527 = vmul.f32 %v1526, 1.442695
    %v1528 = vpow.pop %v1527
    %v1529 = vadd.f32 %v1528, 1.0
    %v1530 = vrcp.pop %v1529
    %v1531 = vmul.f32 1.0, %v1530
    %1532 = vst [vmem:[%s7] sm:$0xff] %v1531
    // Predicated region
    $region50: #{neural_net_forward.1} parent=1 // pred_check
      _
    $region51: #{neural_net_forward.1} parent=1 // pred_check_branch
      %1534 = sbr.rel (0) target = $region53
    $region52: #{neural_net_forward.1} parent=1 // pred_region
      _
    $region53: #{neural_net_forward.1} parent=1 // pred_fallthru
      _
    // Predicated region
    $region54: #{neural_net_forward.1} parent=1 // pred_check
      _
    $region55: #{neural_net_forward.1} parent=1 // pred_check_branch
      %1536 = sbr.rel (0) target = $region57
    $region56: #{neural_net_forward.1} parent=1 // pred_region
      _
    $region57: #{neural_net_forward.1} parent=1 // pred_fallthru
      _
    %1537 = vsyncpa [#allocation4], 1
    %1538 = vsyncpa [#allocation6], 1
    %1539 = vsyncpa [#allocation9], 1

</llo_original>
